<compile_context>
chip_gen: v7x
topology: tpu7x:2x2x1
jax: 0.10.0
libtpu: 0.0.40
codegen_flags: <defaults>
</compile_context>

<pallas_src>
import functools

import jax
import jax.numpy as jnp
from jax import lax
from jax.experimental import pallas as pl
from jax.experimental.pallas import tpu as pltpu


def lfads_kernel(
    # sequence inputs, time-major & batch-padded, flattened to (T*Bp, F)
    x_ref, ne_ref, ng_ref,
    # encoder LeakyRNN params
    wie_ref, bie_ref, we_ref, taue_ref,
    # generator LeakyRNN params (input weight pre-folded for the eval z=mu path)
    wgin_ref, bgin_ref, wg_ref, taug_ref,
    # fused mu/logvar head
    wmulv_ref, bmulv_ref,
    # factors / rates heads
    wfac_ref, bfac_ref, wrate_ref, brate_ref,
    # outputs
    rates_ref, factors_ref, kl_ref,
    # scratch (reused: pre-activations in, hidden states out)
    enc_buf, gen_buf,
    *, dt, tau_min, tau_max, noise_std, batch, batch_pad):

    Bp = batch_pad
    TBp = x_ref.shape[0]
    T = TBp // Bp
    G = we_ref.shape[0]
    C = wmulv_ref.shape[1] // 2
    tau_range = tau_max - tau_min

    # ---- loop-invariant quantities, hoisted & pre-broadcast once ----------
    alpha_e = dt / (jax.nn.sigmoid(taue_ref[...]) * tau_range + tau_min)   # (1, G)
    alpha_g = dt / (jax.nn.sigmoid(taug_ref[...]) * tau_range + tau_min)   # (1, G)
    alpha_e_b = jnp.broadcast_to(alpha_e, (Bp, G))
    alpha_g_b = jnp.broadcast_to(alpha_g, (Bp, G))
    keep_e_b = jnp.broadcast_to(1.0 - alpha_e, (Bp, G))
    keep_g_b = jnp.broadcast_to(1.0 - alpha_g, (Bp, G))

    # ---- encoder: hoisted input projection (one full-occupancy MXU dot) ----
    enc_buf[...] = (
        jnp.dot(x_ref[...].astype(jnp.bfloat16), wie_ref[...],
                preferred_element_type=jnp.float32)
        + bie_ref[...] + noise_std * ne_ref[...])

    def enc_step(t, h):
        row = pl.multiple_of(t * Bp, Bp)
        pre = enc_buf[pl.ds(row, Bp), :] + jnp.dot(
            h.astype(jnp.bfloat16), we_ref[...],
            preferred_element_type=jnp.float32)
        h_new = keep_e_b * h + alpha_e_b * jnp.tanh(pre)
        enc_buf[pl.ds(row, Bp), :] = h_new          # overwrite pre-act with h
        return h_new

    h_enc_last = lax.fori_loop(0, T, enc_step,
                               jnp.zeros((Bp, G), jnp.float32), unroll=True)

    # ---- fused mu / logvar head and KL (eval path: z = mu) -----------------
    henc_bf = enc_buf[...].astype(jnp.bfloat16)      # (T*Bp, G) encoder states
    stats = (jnp.dot(henc_bf, wmulv_ref[...],
                     preferred_element_type=jnp.float32) + bmulv_ref[...])
    mu = stats[:, :C]
    logvar = stats[:, C:2 * C]
    kl_terms = 1.0 + logvar - mu * mu - jnp.exp(logvar)
    # mask padded batch rows so the mean matches the unpadded module
    row_ids = lax.broadcasted_iota(jnp.int32, (TBp, 1), 0)
    valid = ((row_ids % Bp) < batch).astype(jnp.float32)
    kl = -0.5 * (jnp.sum(kl_terms * valid) / (T * batch))
    kl_ref[...] = jnp.zeros((1, 1), jnp.float32) + kl

    # ---- generator: hoisted input projection (weights pre-folded, z = mu) --
    gen_buf[...] = (
        jnp.dot(henc_bf, wgin_ref[...], preferred_element_type=jnp.float32)
        + bgin_ref[...] + noise_std * ng_ref[...])

    def gen_step(t, h):
        row = pl.multiple_of(t * Bp, Bp)
        pre = gen_buf[pl.ds(row, Bp), :] + jnp.dot(
            h.astype(jnp.bfloat16), wg_ref[...],
            preferred_element_type=jnp.float32)
        h_new = keep_g_b * h + alpha_g_b * jnp.tanh(pre)
        gen_buf[pl.ds(row, Bp), :] = h_new
        return h_new

    lax.fori_loop(0, T, gen_step, h_enc_last, unroll=True)

    # ---- factors / rates heads (full-occupancy MXU dots) -------------------
    factors = (jnp.dot(gen_buf[...].astype(jnp.bfloat16), wfac_ref[...],
                       preferred_element_type=jnp.float32) + bfac_ref[...])
    factors_ref[...] = factors
    rates_ref[...] = jnp.exp(
        jnp.dot(factors.astype(jnp.bfloat16), wrate_ref[...],
                preferred_element_type=jnp.float32) + brate_ref[...])


def lfads_forward(x, params, noise_enc, noise_gen, cfg):
    """x: (B, T, input_size). Returns (rates (B,T,I), factors (B,T,L), kl scalar)."""
    B, T, I = x.shape
    G = cfg["generator_size"]
    C = cfg["controller_size"]
    L = cfg["latent_size"]

    # pad batch to a sublane multiple so every per-step tile is (8, lanes)
    Bp = ((B + 7) // 8) * 8

    def prep(a):
        a = jnp.transpose(a, (1, 0, 2)).astype(jnp.float32)      # (T, B, F)
        a = jnp.pad(a, ((0, 0), (0, Bp - B), (0, 0)))            # (T, Bp, F)
        return a.reshape(T * Bp, a.shape[-1])                    # time-major flat

    x_f, ne_f, ng_f = prep(x), prep(noise_enc), prep(noise_gen)

    (wie, bie, we, taue,
     wigz, wigh, big, wg, taug,
     wmu, bmu, wlv, blv,
     wfac, bfac, wrate, brate) = params

    # eval-path weight folding (z = mu):
    #   in_fc_gen(concat([z, h_enc])) == h_enc @ (Wmu@Wigz + Wigh) + (bmu@Wigz + big)
    # TODO(synk): for training/sampling (z = mu + eps*sigma) keep the explicit z path.
    wgin = wmu @ wigz + wigh
    bgin = bmu @ wigz + big
    # fused mu/logvar head
    wmulv = jnp.concatenate([wmu, wlv], axis=1)   # (G, 2C)
    bmulv = jnp.concatenate([bmu, blv], axis=1)   # (1, 2C)

    bf16 = lambda w: w.astype(jnp.bfloat16)       # MXU-native operand dtype

    kernel = functools.partial(
        lfads_kernel,
        dt=cfg["dt"], tau_min=cfg["tau_min"], tau_max=cfg["tau_max"],
        noise_std=cfg["noise_std"], batch=B, batch_pad=Bp)

    vmem = pl.BlockSpec(memory_space=pltpu.MemorySpace.VMEM)

    rates_f, factors_f, kl = pl.pallas_call(
        kernel,
        out_shape=(
            jax.ShapeDtypeStruct((T * Bp, I), jnp.float32),
            jax.ShapeDtypeStruct((T * Bp, L), jnp.float32),
            jax.ShapeDtypeStruct((1, 1), jnp.float32),
        ),
        in_specs=[vmem] * 17,
        out_specs=(vmem, vmem, vmem),
        scratch_shapes=[
            pltpu.VMEM((T * Bp, G), jnp.float32),   # encoder: pre-acts -> h_enc
            pltpu.VMEM((T * Bp, G), jnp.float32),   # generator: pre-acts -> h_gen
        ],
        compiler_params=pltpu.CompilerParams(
            vmem_limit_bytes=32 * 1024 * 1024),
    )(x_f, ne_f, ng_f,
      bf16(wie), bie, bf16(we), taue,
      bf16(wgin), bgin, bf16(wg), taug,
      bf16(wmulv), bmulv,
      bf16(wfac), bfac, bf16(wrate), brate)

    rates = rates_f.reshape(T, Bp, I)[:, :B].transpose(1, 0, 2)
    factors = factors_f.reshape(T, Bp, L)[:, :B].transpose(1, 0, 2)
    return rates, factors, kl[0, 0]


def init_params(key, I, G, C, L, tau_min, tau_max):
    """Deterministic synthetic parameters, shapes matching the PyTorch module.

    Weight matrices are stored as (in_features, out_features) so the kernel
    computes x @ W + b. Biases / taus are stored as (1, N) rows for clean
    broadcasting on TPU.
    """
    ks = jax.random.split(key, 16)

    def xavier(k, shape):
        fan_in, fan_out = shape
        std = (2.0 / (fan_in + fan_out)) ** 0.5
        return (std * jax.random.normal(k, shape)).astype(jnp.float32)

    def tau_init(k, n):
        u = jax.random.uniform(k, (1, n))
        return (jax.nn.sigmoid(u) * (tau_max - tau_min) + tau_min).astype(jnp.float32)

    # encoder
    wie = xavier(ks[0], (I, G))
    bie = jnp.zeros((1, G), jnp.float32)
    we = xavier(ks[1], (G, G))
    taue = tau_init(ks[2], G)
    # generator (in_fc weight for concat([z, h_enc]) split into two blocks)
    wigz = xavier(ks[3], (C, G))
    wigh = xavier(ks[4], (G, G))
    big = jnp.zeros((1, G), jnp.float32)
    wg = xavier(ks[5], (G, G))
    taug = tau_init(ks[6], G)
    # mu / logvar heads
    wmu = xavier(ks[7], (G, C))
    bmu = jnp.zeros((1, C), jnp.float32)
    wlv = xavier(ks[8], (G, C))
    blv = jnp.zeros((1, C), jnp.float32)
    # factors / rates heads
    wfac = xavier(ks[9], (G, L))
    bfac = jnp.zeros((1, L), jnp.float32)
    wrate = xavier(ks[10], (L, I))
    brate = jnp.zeros((1, I), jnp.float32)

    return (wie, bie, we, taue,
            wigz, wigh, big, wg, taug,
            wmu, bmu, wlv, blv,
            wfac, bfac, wrate, brate)


if __name__ == "__main__":
    cfg = dict(
        input_size=32,
        generator_size=128,
        controller_size=16,
        latent_size=32,
        dropout=0.25,       # identity in eval mode
        noise_std=0.01,
        dt=0.02,
        tau_min=0.02,
        tau_max=0.2,
    )
    B, T = 2, 8
    I, G = cfg["input_size"], cfg["generator_size"]

    root = jax.random.PRNGKey(0)
    k_x, k_ne, k_ng, k_p = jax.random.split(root, 4)

    x = jax.random.normal(k_x, (B, T, I), jnp.float32)
    noise_enc = jax.random.normal(k_ne, (B, T, G), jnp.float32)
    noise_gen = jax.random.normal(k_ng, (B, T, G), jnp.float32)
    params = init_params(k_p, I, G, cfg["controller_size"], cfg["latent_size"],
                         cfg["tau_min"], cfg["tau_max"])

    rates, factors, kl = jax.jit(
        lambda x_, ne_, ng_: lfads_forward(x_, params, ne_, ng_, cfg)
    )(x, noise_enc, noise_gen)

    jax.block_until_ready((rates, factors, kl))

    assert rates.shape == (B, T, I)
    assert factors.shape == (B, T, cfg["latent_size"])
    assert kl.shape == ()
    assert bool(jnp.all(jnp.isfinite(rates)))
    assert bool(jnp.all(jnp.isfinite(factors)))
    assert bool(jnp.isfinite(kl))

    print("KERNEL_OK")
</pallas_src>

<mosaic_0001>
module attributes {stable_mosaic.version = 11 : i64} {
  func.func @lfads_kernel(%arg0: memref<64x32xf32, #tpu.memory_space<vmem>>, %arg1: memref<64x128xf32, #tpu.memory_space<vmem>>, %arg2: memref<64x128xf32, #tpu.memory_space<vmem>>, %arg3: memref<32x128xbf16, #tpu.memory_space<vmem>>, %arg4: memref<1x128xf32, #tpu.memory_space<vmem>>, %arg5: memref<128x128xbf16, #tpu.memory_space<vmem>>, %arg6: memref<1x128xf32, #tpu.memory_space<vmem>>, %arg7: memref<128x128xbf16, #tpu.memory_space<vmem>>, %arg8: memref<1x128xf32, #tpu.memory_space<vmem>>, %arg9: memref<128x128xbf16, #tpu.memory_space<vmem>>, %arg10: memref<1x128xf32, #tpu.memory_space<vmem>>, %arg11: memref<128x32xbf16, #tpu.memory_space<vmem>>, %arg12: memref<1x32xf32, #tpu.memory_space<vmem>>, %arg13: memref<128x32xbf16, #tpu.memory_space<vmem>>, %arg14: memref<1x32xf32, #tpu.memory_space<vmem>>, %arg15: memref<32x32xbf16, #tpu.memory_space<vmem>>, %arg16: memref<1x32xf32, #tpu.memory_space<vmem>>, %arg17: memref<64x32xf32, #tpu.memory_space<vmem>>, %arg18: memref<64x32xf32, #tpu.memory_space<vmem>>, %arg19: memref<1x1xf32, #tpu.memory_space<vmem>>, %arg20: memref<64x128xf32, #tpu.memory_space<vmem>>, %arg21: memref<64x128xf32, #tpu.memory_space<vmem>>) attributes {dimension_semantics = [], scalar_prefetch = 0 : i64, scratch_operands = 2 : i64, tpu.core_type = #tpu.core_type<tc>} {
    %c0 = arith.constant 0 : index
    %c0_0 = arith.constant 0 : index
    %0 = vector.load %arg6[%c0, %c0_0] : memref<1x128xf32, #tpu.memory_space<vmem>>, vector<1x128xf32>
    %1 = arith.negf %0 : vector<1x128xf32>
    %2 = math.exp %1 : vector<1x128xf32>
    %cst = arith.constant 1.000000e+00 : f32
    %3 = vector.broadcast %cst : f32 to vector<1x128xf32>
    %4 = arith.addf %3, %2 : vector<1x128xf32>
    %5 = arith.divf %3, %4 : vector<1x128xf32>
    %cst_1 = arith.constant 1.800000e-01 : f32
    %6 = vector.broadcast %cst_1 : f32 to vector<1x128xf32>
    %7 = arith.mulf %5, %6 : vector<1x128xf32>
    %cst_2 = arith.constant 2.000000e-02 : f32
    %8 = vector.broadcast %cst_2 : f32 to vector<1x128xf32>
    %9 = arith.addf %7, %8 : vector<1x128xf32>
    %cst_3 = arith.constant 2.000000e-02 : f32
    %10 = vector.broadcast %cst_3 : f32 to vector<1x128xf32>
    %11 = arith.divf %10, %9 : vector<1x128xf32>
    %c0_4 = arith.constant 0 : index
    %c0_5 = arith.constant 0 : index
    %12 = vector.load %arg10[%c0_4, %c0_5] : memref<1x128xf32, #tpu.memory_space<vmem>>, vector<1x128xf32>
    %13 = arith.negf %12 : vector<1x128xf32>
    %14 = math.exp %13 : vector<1x128xf32>
    %cst_6 = arith.constant 1.000000e+00 : f32
    %15 = vector.broadcast %cst_6 : f32 to vector<1x128xf32>
    %16 = arith.addf %15, %14 : vector<1x128xf32>
    %17 = arith.divf %15, %16 : vector<1x128xf32>
    %cst_7 = arith.constant 1.800000e-01 : f32
    %18 = vector.broadcast %cst_7 : f32 to vector<1x128xf32>
    %19 = arith.mulf %17, %18 : vector<1x128xf32>
    %cst_8 = arith.constant 2.000000e-02 : f32
    %20 = vector.broadcast %cst_8 : f32 to vector<1x128xf32>
    %21 = arith.addf %19, %20 : vector<1x128xf32>
    %cst_9 = arith.constant 2.000000e-02 : f32
    %22 = vector.broadcast %cst_9 : f32 to vector<1x128xf32>
    %23 = arith.divf %22, %21 : vector<1x128xf32>
    %24 = vector.shape_cast %11 : vector<1x128xf32> to vector<1x128xf32>
    %25 = vector.broadcast %24 : vector<1x128xf32> to vector<8x128xf32>
    %26 = vector.shape_cast %23 : vector<1x128xf32> to vector<1x128xf32>
    %27 = vector.broadcast %26 : vector<1x128xf32> to vector<8x128xf32>
    %cst_10 = arith.constant 1.000000e+00 : f32
    %28 = vector.broadcast %cst_10 : f32 to vector<1x128xf32>
    %29 = arith.subf %28, %11 : vector<1x128xf32>
    %30 = vector.shape_cast %29 : vector<1x128xf32> to vector<1x128xf32>
    %31 = vector.broadcast %30 : vector<1x128xf32> to vector<8x128xf32>
    %cst_11 = arith.constant 1.000000e+00 : f32
    %32 = vector.broadcast %cst_11 : f32 to vector<1x128xf32>
    %33 = arith.subf %32, %23 : vector<1x128xf32>
    %34 = vector.shape_cast %33 : vector<1x128xf32> to vector<1x128xf32>
    %35 = vector.broadcast %34 : vector<1x128xf32> to vector<8x128xf32>
    %c0_12 = arith.constant 0 : index
    %c0_13 = arith.constant 0 : index
    %36 = vector.load %arg0[%c0_12, %c0_13] : memref<64x32xf32, #tpu.memory_space<vmem>>, vector<64x32xf32>
    %37 = arith.truncf %36 : vector<64x32xf32> to vector<64x32xbf16>
    %c0_14 = arith.constant 0 : index
    %c0_15 = arith.constant 0 : index
    %38 = vector.load %arg3[%c0_14, %c0_15] : memref<32x128xbf16, #tpu.memory_space<vmem>>, vector<32x128xbf16>
    %cst_16 = arith.constant dense<0.000000e+00> : vector<64x128xf32>
    %39 = tpu.matmul %37, %38, %cst_16 {dimension_numbers = #tpu.dot_dimension_numbers<[1], [0], [0], [1], [0, 0, 1, 1], [], []>} : vector<64x32xbf16>, vector<32x128xbf16>, vector<64x128xf32> -> vector<64x128xf32>
    %c0_17 = arith.constant 0 : index
    %c0_18 = arith.constant 0 : index
    %40 = vector.load %arg4[%c0_17, %c0_18] : memref<1x128xf32, #tpu.memory_space<vmem>>, vector<1x128xf32>
    %41 = vector.broadcast %40 : vector<1x128xf32> to vector<64x128xf32>
    %42 = arith.addf %39, %41 : vector<64x128xf32>
    %c0_19 = arith.constant 0 : index
    %c0_20 = arith.constant 0 : index
    %43 = vector.load %arg1[%c0_19, %c0_20] : memref<64x128xf32, #tpu.memory_space<vmem>>, vector<64x128xf32>
    %cst_21 = arith.constant 0.00999999977 : f32
    %44 = vector.broadcast %cst_21 : f32 to vector<64x128xf32>
    %45 = arith.mulf %44, %43 : vector<64x128xf32>
    %46 = arith.addf %42, %45 : vector<64x128xf32>
    %c0_22 = arith.constant 0 : index
    %c0_23 = arith.constant 0 : index
    %47 = vector.load %arg20[%c0_22, %c0_23] : memref<64x128xf32, #tpu.memory_space<vmem>>, vector<64x128xf32>
    tpu.vector_store %arg20[%c0_22, %c0_23], %46 {strides = array<i32>} : memref<64x128xf32, #tpu.memory_space<vmem>>, vector<64x128xf32>,
    %cst_24 = arith.constant 0.000000e+00 : f32
    %48 = vector.broadcast %cst_24 : f32 to vector<8x128xf32>
    %c0_i32 = arith.constant 0 : i32
    %c8_i32 = arith.constant 8 : i32
    %49 = arith.muli %c0_i32, %c8_i32 : i32
    %50 = tpu.assume_multiple %49, 8 : i32
    %51 = arith.index_cast %50 : i32 to index
    %c0_25 = arith.constant 0 : index
    %52 = vector.load %arg20[%51, %c0_25] : memref<64x128xf32, #tpu.memory_space<vmem>>, vector<8x128xf32>
    %53 = arith.truncf %48 : vector<8x128xf32> to vector<8x128xbf16>
    %c0_26 = arith.constant 0 : index
    %c0_27 = arith.constant 0 : index
    %54 = vector.load %arg5[%c0_26, %c0_27] : memref<128x128xbf16, #tpu.memory_space<vmem>>, vector<128x128xbf16>
    %cst_28 = arith.constant dense<0.000000e+00> : vector<8x128xf32>
    %55 = tpu.matmul %53, %54, %cst_28 {dimension_numbers = #tpu.dot_dimension_numbers<[1], [0], [0], [1], [0, 0, 1, 1], [], []>} : vector<8x128xbf16>, vector<128x128xbf16>, vector<8x128xf32> -> vector<8x128xf32>
    %56 = arith.addf %52, %55 : vector<8x128xf32>
    %57 = arith.mulf %31, %48 : vector<8x128xf32>
    %58 = math.tanh %56 : vector<8x128xf32>
    %59 = arith.mulf %25, %58 : vector<8x128xf32>
    %60 = arith.addf %57, %59 : vector<8x128xf32>
    %61 = arith.index_cast %50 : i32 to index
    %c0_29 = arith.constant 0 : index
    %62 = vector.load %arg20[%61, %c0_29] : memref<64x128xf32, #tpu.memory_space<vmem>>, vector<8x128xf32>
    tpu.vector_store %arg20[%61, %c0_29], %60 {strides = array<i32>} : memref<64x128xf32, #tpu.memory_space<vmem>>, vector<8x128xf32>,
    %c1_i32 = arith.constant 1 : i32
    %c8_i32_30 = arith.constant 8 : i32
    %63 = arith.muli %c1_i32, %c8_i32_30 : i32
    %64 = tpu.assume_multiple %63, 8 : i32
    %65 = arith.index_cast %64 : i32 to index
    %c0_31 = arith.constant 0 : index
    %66 = vector.load %arg20[%65, %c0_31] : memref<64x128xf32, #tpu.memory_space<vmem>>, vector<8x128xf32>
    %67 = arith.truncf %60 : vector<8x128xf32> to vector<8x128xbf16>
    %c0_32 = arith.constant 0 : index
    %c0_33 = arith.constant 0 : index
    %68 = vector.load %arg5[%c0_32, %c0_33] : memref<128x128xbf16, #tpu.memory_space<vmem>>, vector<128x128xbf16>
    %cst_34 = arith.constant dense<0.000000e+00> : vector<8x128xf32>
    %69 = tpu.matmul %67, %68, %cst_34 {dimension_numbers = #tpu.dot_dimension_numbers<[1], [0], [0], [1], [0, 0, 1, 1], [], []>} : vector<8x128xbf16>, vector<128x128xbf16>, vector<8x128xf32> -> vector<8x128xf32>
    %70 = arith.addf %66, %69 : vector<8x128xf32>
    %71 = arith.mulf %31, %60 : vector<8x128xf32>
    %72 = math.tanh %70 : vector<8x128xf32>
    %73 = arith.mulf %25, %72 : vector<8x128xf32>
    %74 = arith.addf %71, %73 : vector<8x128xf32>
    %75 = arith.index_cast %64 : i32 to index
    %c0_35 = arith.constant 0 : index
    %76 = vector.load %arg20[%75, %c0_35] : memref<64x128xf32, #tpu.memory_space<vmem>>, vector<8x128xf32>
    tpu.vector_store %arg20[%75, %c0_35], %74 {strides = array<i32>} : memref<64x128xf32, #tpu.memory_space<vmem>>, vector<8x128xf32>,
    %c2_i32 = arith.constant 2 : i32
    %c8_i32_36 = arith.constant 8 : i32
    %77 = arith.muli %c2_i32, %c8_i32_36 : i32
    %78 = tpu.assume_multiple %77, 8 : i32
    %79 = arith.index_cast %78 : i32 to index
    %c0_37 = arith.constant 0 : index
    %80 = vector.load %arg20[%79, %c0_37] : memref<64x128xf32, #tpu.memory_space<vmem>>, vector<8x128xf32>
    %81 = arith.truncf %74 : vector<8x128xf32> to vector<8x128xbf16>
    %c0_38 = arith.constant 0 : index
    %c0_39 = arith.constant 0 : index
    %82 = vector.load %arg5[%c0_38, %c0_39] : memref<128x128xbf16, #tpu.memory_space<vmem>>, vector<128x128xbf16>
    %cst_40 = arith.constant dense<0.000000e+00> : vector<8x128xf32>
    %83 = tpu.matmul %81, %82, %cst_40 {dimension_numbers = #tpu.dot_dimension_numbers<[1], [0], [0], [1], [0, 0, 1, 1], [], []>} : vector<8x128xbf16>, vector<128x128xbf16>, vector<8x128xf32> -> vector<8x128xf32>
    %84 = arith.addf %80, %83 : vector<8x128xf32>
    %85 = arith.mulf %31, %74 : vector<8x128xf32>
    %86 = math.tanh %84 : vector<8x128xf32>
    %87 = arith.mulf %25, %86 : vector<8x128xf32>
    %88 = arith.addf %85, %87 : vector<8x128xf32>
    %89 = arith.index_cast %78 : i32 to index
    %c0_41 = arith.constant 0 : index
    %90 = vector.load %arg20[%89, %c0_41] : memref<64x128xf32, #tpu.memory_space<vmem>>, vector<8x128xf32>
    tpu.vector_store %arg20[%89, %c0_41], %88 {strides = array<i32>} : memref<64x128xf32, #tpu.memory_space<vmem>>, vector<8x128xf32>,
    %c3_i32 = arith.constant 3 : i32
    %c8_i32_42 = arith.constant 8 : i32
    %91 = arith.muli %c3_i32, %c8_i32_42 : i32
    %92 = tpu.assume_multiple %91, 8 : i32
    %93 = arith.index_cast %92 : i32 to index
    %c0_43 = arith.constant 0 : index
    %94 = vector.load %arg20[%93, %c0_43] : memref<64x128xf32, #tpu.memory_space<vmem>>, vector<8x128xf32>
    %95 = arith.truncf %88 : vector<8x128xf32> to vector<8x128xbf16>
    %c0_44 = arith.constant 0 : index
    %c0_45 = arith.constant 0 : index
    %96 = vector.load %arg5[%c0_44, %c0_45] : memref<128x128xbf16, #tpu.memory_space<vmem>>, vector<128x128xbf16>
    %cst_46 = arith.constant dense<0.000000e+00> : vector<8x128xf32>
    %97 = tpu.matmul %95, %96, %cst_46 {dimension_numbers = #tpu.dot_dimension_numbers<[1], [0], [0], [1], [0, 0, 1, 1], [], []>} : vector<8x128xbf16>, vector<128x128xbf16>, vector<8x128xf32> -> vector<8x128xf32>
    %98 = arith.addf %94, %97 : vector<8x128xf32>
    %99 = arith.mulf %31, %88 : vector<8x128xf32>
    %100 = math.tanh %98 : vector<8x128xf32>
    %101 = arith.mulf %25, %100 : vector<8x128xf32>
    %102 = arith.addf %99, %101 : vector<8x128xf32>
    %103 = arith.index_cast %92 : i32 to index
    %c0_47 = arith.constant 0 : index
    %104 = vector.load %arg20[%103, %c0_47] : memref<64x128xf32, #tpu.memory_space<vmem>>, vector<8x128xf32>
    tpu.vector_store %arg20[%103, %c0_47], %102 {strides = array<i32>} : memref<64x128xf32, #tpu.memory_space<vmem>>, vector<8x128xf32>,
    %c4_i32 = arith.constant 4 : i32
    %c8_i32_48 = arith.constant 8 : i32
    %105 = arith.muli %c4_i32, %c8_i32_48 : i32
    %106 = tpu.assume_multiple %105, 8 : i32
    %107 = arith.index_cast %106 : i32 to index
    %c0_49 = arith.constant 0 : index
    %108 = vector.load %arg20[%107, %c0_49] : memref<64x128xf32, #tpu.memory_space<vmem>>, vector<8x128xf32>
    %109 = arith.truncf %102 : vector<8x128xf32> to vector<8x128xbf16>
    %c0_50 = arith.constant 0 : index
    %c0_51 = arith.constant 0 : index
    %110 = vector.load %arg5[%c0_50, %c0_51] : memref<128x128xbf16, #tpu.memory_space<vmem>>, vector<128x128xbf16>
    %cst_52 = arith.constant dense<0.000000e+00> : vector<8x128xf32>
    %111 = tpu.matmul %109, %110, %cst_52 {dimension_numbers = #tpu.dot_dimension_numbers<[1], [0], [0], [1], [0, 0, 1, 1], [], []>} : vector<8x128xbf16>, vector<128x128xbf16>, vector<8x128xf32> -> vector<8x128xf32>
    %112 = arith.addf %108, %111 : vector<8x128xf32>
    %113 = arith.mulf %31, %102 : vector<8x128xf32>
    %114 = math.tanh %112 : vector<8x128xf32>
    %115 = arith.mulf %25, %114 : vector<8x128xf32>
    %116 = arith.addf %113, %115 : vector<8x128xf32>
    %117 = arith.index_cast %106 : i32 to index
    %c0_53 = arith.constant 0 : index
    %118 = vector.load %arg20[%117, %c0_53] : memref<64x128xf32, #tpu.memory_space<vmem>>, vector<8x128xf32>
    tpu.vector_store %arg20[%117, %c0_53], %116 {strides = array<i32>} : memref<64x128xf32, #tpu.memory_space<vmem>>, vector<8x128xf32>,
    %c5_i32 = arith.constant 5 : i32
    %c8_i32_54 = arith.constant 8 : i32
    %119 = arith.muli %c5_i32, %c8_i32_54 : i32
    %120 = tpu.assume_multiple %119, 8 : i32
    %121 = arith.index_cast %120 : i32 to index
    %c0_55 = arith.constant 0 : index
    %122 = vector.load %arg20[%121, %c0_55] : memref<64x128xf32, #tpu.memory_space<vmem>>, vector<8x128xf32>
    %123 = arith.truncf %116 : vector<8x128xf32> to vector<8x128xbf16>
    %c0_56 = arith.constant 0 : index
    %c0_57 = arith.constant 0 : index
    %124 = vector.load %arg5[%c0_56, %c0_57] : memref<128x128xbf16, #tpu.memory_space<vmem>>, vector<128x128xbf16>
    %cst_58 = arith.constant dense<0.000000e+00> : vector<8x128xf32>
    %125 = tpu.matmul %123, %124, %cst_58 {dimension_numbers = #tpu.dot_dimension_numbers<[1], [0], [0], [1], [0, 0, 1, 1], [], []>} : vector<8x128xbf16>, vector<128x128xbf16>, vector<8x128xf32> -> vector<8x128xf32>
    %126 = arith.addf %122, %125 : vector<8x128xf32>
    %127 = arith.mulf %31, %116 : vector<8x128xf32>
    %128 = math.tanh %126 : vector<8x128xf32>
    %129 = arith.mulf %25, %128 : vector<8x128xf32>
    %130 = arith.addf %127, %129 : vector<8x128xf32>
    %131 = arith.index_cast %120 : i32 to index
    %c0_59 = arith.constant 0 : index
    %132 = vector.load %arg20[%131, %c0_59] : memref<64x128xf32, #tpu.memory_space<vmem>>, vector<8x128xf32>
    tpu.vector_store %arg20[%131, %c0_59], %130 {strides = array<i32>} : memref<64x128xf32, #tpu.memory_space<vmem>>, vector<8x128xf32>,
    %c6_i32 = arith.constant 6 : i32
    %c8_i32_60 = arith.constant 8 : i32
    %133 = arith.muli %c6_i32, %c8_i32_60 : i32
    %134 = tpu.assume_multiple %133, 8 : i32
    %135 = arith.index_cast %134 : i32 to index
    %c0_61 = arith.constant 0 : index
    %136 = vector.load %arg20[%135, %c0_61] : memref<64x128xf32, #tpu.memory_space<vmem>>, vector<8x128xf32>
    %137 = arith.truncf %130 : vector<8x128xf32> to vector<8x128xbf16>
    %c0_62 = arith.constant 0 : index
    %c0_63 = arith.constant 0 : index
    %138 = vector.load %arg5[%c0_62, %c0_63] : memref<128x128xbf16, #tpu.memory_space<vmem>>, vector<128x128xbf16>
    %cst_64 = arith.constant dense<0.000000e+00> : vector<8x128xf32>
    %139 = tpu.matmul %137, %138, %cst_64 {dimension_numbers = #tpu.dot_dimension_numbers<[1], [0], [0], [1], [0, 0, 1, 1], [], []>} : vector<8x128xbf16>, vector<128x128xbf16>, vector<8x128xf32> -> vector<8x128xf32>
    %140 = arith.addf %136, %139 : vector<8x128xf32>
    %141 = arith.mulf %31, %130 : vector<8x128xf32>
    %142 = math.tanh %140 : vector<8x128xf32>
    %143 = arith.mulf %25, %142 : vector<8x128xf32>
    %144 = arith.addf %141, %143 : vector<8x128xf32>
    %145 = arith.index_cast %134 : i32 to index
    %c0_65 = arith.constant 0 : index
    %146 = vector.load %arg20[%145, %c0_65] : memref<64x128xf32, #tpu.memory_space<vmem>>, vector<8x128xf32>
    tpu.vector_store %arg20[%145, %c0_65], %144 {strides = array<i32>} : memref<64x128xf32, #tpu.memory_space<vmem>>, vector<8x128xf32>,
    %c7_i32 = arith.constant 7 : i32
    %c8_i32_66 = arith.constant 8 : i32
    %147 = arith.muli %c7_i32, %c8_i32_66 : i32
    %148 = tpu.assume_multiple %147, 8 : i32
    %149 = arith.index_cast %148 : i32 to index
    %c0_67 = arith.constant 0 : index
    %150 = vector.load %arg20[%149, %c0_67] : memref<64x128xf32, #tpu.memory_space<vmem>>, vector<8x128xf32>
    %151 = arith.truncf %144 : vector<8x128xf32> to vector<8x128xbf16>
    %c0_68 = arith.constant 0 : index
    %c0_69 = arith.constant 0 : index
    %152 = vector.load %arg5[%c0_68, %c0_69] : memref<128x128xbf16, #tpu.memory_space<vmem>>, vector<128x128xbf16>
    %cst_70 = arith.constant dense<0.000000e+00> : vector<8x128xf32>
    %153 = tpu.matmul %151, %152, %cst_70 {dimension_numbers = #tpu.dot_dimension_numbers<[1], [0], [0], [1], [0, 0, 1, 1], [], []>} : vector<8x128xbf16>, vector<128x128xbf16>, vector<8x128xf32> -> vector<8x128xf32>
    %154 = arith.addf %150, %153 : vector<8x128xf32>
    %155 = arith.mulf %31, %144 : vector<8x128xf32>
    %156 = math.tanh %154 : vector<8x128xf32>
    %157 = arith.mulf %25, %156 : vector<8x128xf32>
    %158 = arith.addf %155, %157 : vector<8x128xf32>
    %159 = arith.index_cast %148 : i32 to index
    %c0_71 = arith.constant 0 : index
    %160 = vector.load %arg20[%159, %c0_71] : memref<64x128xf32, #tpu.memory_space<vmem>>, vector<8x128xf32>
    tpu.vector_store %arg20[%159, %c0_71], %158 {strides = array<i32>} : memref<64x128xf32, #tpu.memory_space<vmem>>, vector<8x128xf32>,
    %c8_i32_72 = arith.constant 8 : i32
    %c0_73 = arith.constant 0 : index
    %c0_74 = arith.constant 0 : index
    %161 = vector.load %arg20[%c0_73, %c0_74] : memref<64x128xf32, #tpu.memory_space<vmem>>, vector<64x128xf32>
    %162 = arith.truncf %161 : vector<64x128xf32> to vector<64x128xbf16>
    %c0_75 = arith.constant 0 : index
    %c0_76 = arith.constant 0 : index
    %163 = vector.load %arg11[%c0_75, %c0_76] : memref<128x32xbf16, #tpu.memory_space<vmem>>, vector<128x32xbf16>
    %cst_77 = arith.constant dense<0.000000e+00> : vector<64x32xf32>
    %164 = tpu.matmul %162, %163, %cst_77 {dimension_numbers = #tpu.dot_dimension_numbers<[1], [0], [0], [1], [0, 0, 1, 1], [], []>} : vector<64x128xbf16>, vector<128x32xbf16>, vector<64x32xf32> -> vector<64x32xf32>
    %c0_78 = arith.constant 0 : index
    %c0_79 = arith.constant 0 : index
    %165 = vector.load %arg12[%c0_78, %c0_79] : memref<1x32xf32, #tpu.memory_space<vmem>>, vector<1x32xf32>
    %166 = vector.broadcast %165 : vector<1x32xf32> to vector<64x32xf32>
    %167 = arith.addf %164, %166 : vector<64x32xf32>
    %168 = vector.extract_strided_slice %167 {offsets = [0, 0], sizes = [64, 16], strides = [1, 1]} : vector<64x32xf32> to vector<64x16xf32>
    %169 = vector.extract_strided_slice %167 {offsets = [0, 16], sizes = [64, 16], strides = [1, 1]} : vector<64x32xf32> to vector<64x16xf32>
    %cst_80 = arith.constant 1.000000e+00 : f32
    %170 = vector.broadcast %cst_80 : f32 to vector<64x16xf32>
    %171 = arith.addf %170, %169 : vector<64x16xf32>
    %172 = arith.mulf %168, %168 : vector<64x16xf32>
    %173 = arith.subf %171, %172 : vector<64x16xf32>
    %174 = math.exp %169 : vector<64x16xf32>
    %175 = arith.subf %173, %174 : vector<64x16xf32>
    %176 = tpu.iota {dimensions = array<i32: 0>} : vector<64x1xi32>
    %c8_i32_81 = arith.constant 8 : i32
    %c0_i32_82 = arith.constant 0 : i32
    %177 = arith.cmpi eq, %c8_i32_81, %c0_i32_82 : i32
    %c1_i32_83 = arith.constant 1 : i32
    %178 = arith.select %177, %c1_i32_83, %c8_i32_81 : i32
    %179 = vector.broadcast %178 : i32 to vector<64x1xi32>
    %180 = arith.remsi %176, %179 : vector<64x1xi32>
    %c0_i32_84 = arith.constant 0 : i32
    %181 = vector.broadcast %c0_i32_84 : i32 to vector<64x1xi32>
    %182 = arith.cmpi ne, %180, %181 : vector<64x1xi32>
    %c0_i32_85 = arith.constant 0 : i32
    %183 = vector.broadcast %c0_i32_85 : i32 to vector<64x1xi32>
    %184 = arith.cmpi slt, %180, %183 : vector<64x1xi32>
    %c0_i32_86 = arith.constant 0 : i32
    %185 = arith.cmpi slt, %178, %c0_i32_86 : i32
    %186 = vector.broadcast %185 : i1 to vector<64x1xi1>
    %187 = vector.broadcast %186 : vector<64x1xi1> to vector<64x1xi1>
    %188 = arith.xori %184, %187 : vector<64x1xi1>
    %189 = arith.andi %188, %182 : vector<64x1xi1>
    %190 = vector.broadcast %178 : i32 to vector<64x1xi32>
    %191 = arith.addi %180, %190 : vector<64x1xi32>
    %192 = arith.select %189, %191, %180 : vector<64x1xi1>, vector<64x1xi32>
    %c2_i32_87 = arith.constant 2 : i32
    %193 = vector.broadcast %c2_i32_87 : i32 to vector<64x1xi32>
    %194 = arith.cmpi slt, %192, %193 : vector<64x1xi32>
    %195 = arith.extui %194 : vector<64x1xi1> to vector<64x1xi32>
    %196 = arith.sitofp %195 : vector<64x1xi32> to vector<64x1xf32>
    %197 = vector.broadcast %196 : vector<64x1xf32> to vector<64x16xf32>
    %198 = arith.mulf %175, %197 : vector<64x16xf32>
    %199 = vector.shape_cast %198 : vector<64x16xf32> to vector<1x64x16xf32>
    %cst_88 = arith.constant dense<0.000000e+00> : vector<1xf32>
    %200 = vector.multi_reduction <add>, %199, %cst_88 [1, 2] : vector<1x64x16xf32> to vector<1xf32>
    %201 = vector.shape_cast %200 : vector<1xf32> to vector<1x1x1xf32>
    %202 = vector.extract %201[0, 0, 0] : f32 from vector<1x1x1xf32>
    %cst_89 = arith.constant 1.600000e+01 : f32
    %203 = arith.divf %202, %cst_89 : f32
    %cst_90 = arith.constant -5.000000e-01 : f32
    %204 = arith.mulf %cst_90, %203 : f32
    %cst_91 = arith.constant 0.000000e+00 : f32
    %205 = vector.broadcast %cst_91 : f32 to vector<1x1xf32>
    %206 = vector.broadcast %204 : f32 to vector<1x1xf32>
    %207 = arith.addf %205, %206 : vector<1x1xf32>
    %c0_92 = arith.constant 0 : index
    %c0_93 = arith.constant 0 : index
    %208 = vector.load %arg19[%c0_92, %c0_93] : memref<1x1xf32, #tpu.memory_space<vmem>>, vector<1x1xf32>
    tpu.vector_store %arg19[%c0_92, %c0_93], %207 {strides = array<i32>} : memref<1x1xf32, #tpu.memory_space<vmem>>, vector<1x1xf32>,
    %c0_94 = arith.constant 0 : index
    %c0_95 = arith.constant 0 : index
    %209 = vector.load %arg7[%c0_94, %c0_95] : memref<128x128xbf16, #tpu.memory_space<vmem>>, vector<128x128xbf16>
    %cst_96 = arith.constant dense<0.000000e+00> : vector<64x128xf32>
    %210 = tpu.matmul %162, %209, %cst_96 {dimension_numbers = #tpu.dot_dimension_numbers<[1], [0], [0], [1], [0, 0, 1, 1], [], []>} : vector<64x128xbf16>, vector<128x128xbf16>, vector<64x128xf32> -> vector<64x128xf32>
    %c0_97 = arith.constant 0 : index
    %c0_98 = arith.constant 0 : index
    %211 = vector.load %arg8[%c0_97, %c0_98] : memref<1x128xf32, #tpu.memory_space<vmem>>, vector<1x128xf32>
    %212 = vector.broadcast %211 : vector<1x128xf32> to vector<64x128xf32>
    %213 = arith.addf %210, %212 : vector<64x128xf32>
    %c0_99 = arith.constant 0 : index
    %c0_100 = arith.constant 0 : index
    %214 = vector.load %arg2[%c0_99, %c0_100] : memref<64x128xf32, #tpu.memory_space<vmem>>, vector<64x128xf32>
    %cst_101 = arith.constant 0.00999999977 : f32
    %215 = vector.broadcast %cst_101 : f32 to vector<64x128xf32>
    %216 = arith.mulf %215, %214 : vector<64x128xf32>
    %217 = arith.addf %213, %216 : vector<64x128xf32>
    %c0_102 = arith.constant 0 : index
    %c0_103 = arith.constant 0 : index
    %218 = vector.load %arg21[%c0_102, %c0_103] : memref<64x128xf32, #tpu.memory_space<vmem>>, vector<64x128xf32>
    tpu.vector_store %arg21[%c0_102, %c0_103], %217 {strides = array<i32>} : memref<64x128xf32, #tpu.memory_space<vmem>>, vector<64x128xf32>,
    %c0_i32_104 = arith.constant 0 : i32
    %c8_i32_105 = arith.constant 8 : i32
    %219 = arith.muli %c0_i32_104, %c8_i32_105 : i32
    %220 = tpu.assume_multiple %219, 8 : i32
    %221 = arith.index_cast %220 : i32 to index
    %c0_106 = arith.constant 0 : index
    %222 = vector.load %arg21[%221, %c0_106] : memref<64x128xf32, #tpu.memory_space<vmem>>, vector<8x128xf32>
    %223 = arith.truncf %158 : vector<8x128xf32> to vector<8x128xbf16>
    %c0_107 = arith.constant 0 : index
    %c0_108 = arith.constant 0 : index
    %224 = vector.load %arg9[%c0_107, %c0_108] : memref<128x128xbf16, #tpu.memory_space<vmem>>, vector<128x128xbf16>
    %cst_109 = arith.constant dense<0.000000e+00> : vector<8x128xf32>
    %225 = tpu.matmul %223, %224, %cst_109 {dimension_numbers = #tpu.dot_dimension_numbers<[1], [0], [0], [1], [0, 0, 1, 1], [], []>} : vector<8x128xbf16>, vector<128x128xbf16>, vector<8x128xf32> -> vector<8x128xf32>
    %226 = arith.addf %222, %225 : vector<8x128xf32>
    %227 = arith.mulf %35, %158 : vector<8x128xf32>
    %228 = math.tanh %226 : vector<8x128xf32>
    %229 = arith.mulf %27, %228 : vector<8x128xf32>
    %230 = arith.addf %227, %229 : vector<8x128xf32>
    %231 = arith.index_cast %220 : i32 to index
    %c0_110 = arith.constant 0 : index
    %232 = vector.load %arg21[%231, %c0_110] : memref<64x128xf32, #tpu.memory_space<vmem>>, vector<8x128xf32>
    tpu.vector_store %arg21[%231, %c0_110], %230 {strides = array<i32>} : memref<64x128xf32, #tpu.memory_space<vmem>>, vector<8x128xf32>,
    %c1_i32_111 = arith.constant 1 : i32
    %c8_i32_112 = arith.constant 8 : i32
    %233 = arith.muli %c1_i32_111, %c8_i32_112 : i32
    %234 = tpu.assume_multiple %233, 8 : i32
    %235 = arith.index_cast %234 : i32 to index
    %c0_113 = arith.constant 0 : index
    %236 = vector.load %arg21[%235, %c0_113] : memref<64x128xf32, #tpu.memory_space<vmem>>, vector<8x128xf32>
    %237 = arith.truncf %230 : vector<8x128xf32> to vector<8x128xbf16>
    %c0_114 = arith.constant 0 : index
    %c0_115 = arith.constant 0 : index
    %238 = vector.load %arg9[%c0_114, %c0_115] : memref<128x128xbf16, #tpu.memory_space<vmem>>, vector<128x128xbf16>
    %cst_116 = arith.constant dense<0.000000e+00> : vector<8x128xf32>
    %239 = tpu.matmul %237, %238, %cst_116 {dimension_numbers = #tpu.dot_dimension_numbers<[1], [0], [0], [1], [0, 0, 1, 1], [], []>} : vector<8x128xbf16>, vector<128x128xbf16>, vector<8x128xf32> -> vector<8x128xf32>
    %240 = arith.addf %236, %239 : vector<8x128xf32>
    %241 = arith.mulf %35, %230 : vector<8x128xf32>
    %242 = math.tanh %240 : vector<8x128xf32>
    %243 = arith.mulf %27, %242 : vector<8x128xf32>
    %244 = arith.addf %241, %243 : vector<8x128xf32>
    %245 = arith.index_cast %234 : i32 to index
    %c0_117 = arith.constant 0 : index
    %246 = vector.load %arg21[%245, %c0_117] : memref<64x128xf32, #tpu.memory_space<vmem>>, vector<8x128xf32>
    tpu.vector_store %arg21[%245, %c0_117], %244 {strides = array<i32>} : memref<64x128xf32, #tpu.memory_space<vmem>>, vector<8x128xf32>,
    %c2_i32_118 = arith.constant 2 : i32
    %c8_i32_119 = arith.constant 8 : i32
    %247 = arith.muli %c2_i32_118, %c8_i32_119 : i32
    %248 = tpu.assume_multiple %247, 8 : i32
    %249 = arith.index_cast %248 : i32 to index
    %c0_120 = arith.constant 0 : index
    %250 = vector.load %arg21[%249, %c0_120] : memref<64x128xf32, #tpu.memory_space<vmem>>, vector<8x128xf32>
    %251 = arith.truncf %244 : vector<8x128xf32> to vector<8x128xbf16>
    %c0_121 = arith.constant 0 : index
    %c0_122 = arith.constant 0 : index
    %252 = vector.load %arg9[%c0_121, %c0_122] : memref<128x128xbf16, #tpu.memory_space<vmem>>, vector<128x128xbf16>
    %cst_123 = arith.constant dense<0.000000e+00> : vector<8x128xf32>
    %253 = tpu.matmul %251, %252, %cst_123 {dimension_numbers = #tpu.dot_dimension_numbers<[1], [0], [0], [1], [0, 0, 1, 1], [], []>} : vector<8x128xbf16>, vector<128x128xbf16>, vector<8x128xf32> -> vector<8x128xf32>
    %254 = arith.addf %250, %253 : vector<8x128xf32>
    %255 = arith.mulf %35, %244 : vector<8x128xf32>
    %256 = math.tanh %254 : vector<8x128xf32>
    %257 = arith.mulf %27, %256 : vector<8x128xf32>
    %258 = arith.addf %255, %257 : vector<8x128xf32>
    %259 = arith.index_cast %248 : i32 to index
    %c0_124 = arith.constant 0 : index
    %260 = vector.load %arg21[%259, %c0_124] : memref<64x128xf32, #tpu.memory_space<vmem>>, vector<8x128xf32>
    tpu.vector_store %arg21[%259, %c0_124], %258 {strides = array<i32>} : memref<64x128xf32, #tpu.memory_space<vmem>>, vector<8x128xf32>,
    %c3_i32_125 = arith.constant 3 : i32
    %c8_i32_126 = arith.constant 8 : i32
    %261 = arith.muli %c3_i32_125, %c8_i32_126 : i32
    %262 = tpu.assume_multiple %261, 8 : i32
    %263 = arith.index_cast %262 : i32 to index
    %c0_127 = arith.constant 0 : index
    %264 = vector.load %arg21[%263, %c0_127] : memref<64x128xf32, #tpu.memory_space<vmem>>, vector<8x128xf32>
    %265 = arith.truncf %258 : vector<8x128xf32> to vector<8x128xbf16>
    %c0_128 = arith.constant 0 : index
    %c0_129 = arith.constant 0 : index
    %266 = vector.load %arg9[%c0_128, %c0_129] : memref<128x128xbf16, #tpu.memory_space<vmem>>, vector<128x128xbf16>
    %cst_130 = arith.constant dense<0.000000e+00> : vector<8x128xf32>
    %267 = tpu.matmul %265, %266, %cst_130 {dimension_numbers = #tpu.dot_dimension_numbers<[1], [0], [0], [1], [0, 0, 1, 1], [], []>} : vector<8x128xbf16>, vector<128x128xbf16>, vector<8x128xf32> -> vector<8x128xf32>
    %268 = arith.addf %264, %267 : vector<8x128xf32>
    %269 = arith.mulf %35, %258 : vector<8x128xf32>
    %270 = math.tanh %268 : vector<8x128xf32>
    %271 = arith.mulf %27, %270 : vector<8x128xf32>
    %272 = arith.addf %269, %271 : vector<8x128xf32>
    %273 = arith.index_cast %262 : i32 to index
    %c0_131 = arith.constant 0 : index
    %274 = vector.load %arg21[%273, %c0_131] : memref<64x128xf32, #tpu.memory_space<vmem>>, vector<8x128xf32>
    tpu.vector_store %arg21[%273, %c0_131], %272 {strides = array<i32>} : memref<64x128xf32, #tpu.memory_space<vmem>>, vector<8x128xf32>,
    %c4_i32_132 = arith.constant 4 : i32
    %c8_i32_133 = arith.constant 8 : i32
    %275 = arith.muli %c4_i32_132, %c8_i32_133 : i32
    %276 = tpu.assume_multiple %275, 8 : i32
    %277 = arith.index_cast %276 : i32 to index
    %c0_134 = arith.constant 0 : index
    %278 = vector.load %arg21[%277, %c0_134] : memref<64x128xf32, #tpu.memory_space<vmem>>, vector<8x128xf32>
    %279 = arith.truncf %272 : vector<8x128xf32> to vector<8x128xbf16>
    %c0_135 = arith.constant 0 : index
    %c0_136 = arith.constant 0 : index
    %280 = vector.load %arg9[%c0_135, %c0_136] : memref<128x128xbf16, #tpu.memory_space<vmem>>, vector<128x128xbf16>
    %cst_137 = arith.constant dense<0.000000e+00> : vector<8x128xf32>
    %281 = tpu.matmul %279, %280, %cst_137 {dimension_numbers = #tpu.dot_dimension_numbers<[1], [0], [0], [1], [0, 0, 1, 1], [], []>} : vector<8x128xbf16>, vector<128x128xbf16>, vector<8x128xf32> -> vector<8x128xf32>
    %282 = arith.addf %278, %281 : vector<8x128xf32>
    %283 = arith.mulf %35, %272 : vector<8x128xf32>
    %284 = math.tanh %282 : vector<8x128xf32>
    %285 = arith.mulf %27, %284 : vector<8x128xf32>
    %286 = arith.addf %283, %285 : vector<8x128xf32>
    %287 = arith.index_cast %276 : i32 to index
    %c0_138 = arith.constant 0 : index
    %288 = vector.load %arg21[%287, %c0_138] : memref<64x128xf32, #tpu.memory_space<vmem>>, vector<8x128xf32>
    tpu.vector_store %arg21[%287, %c0_138], %286 {strides = array<i32>} : memref<64x128xf32, #tpu.memory_space<vmem>>, vector<8x128xf32>,
    %c5_i32_139 = arith.constant 5 : i32
    %c8_i32_140 = arith.constant 8 : i32
    %289 = arith.muli %c5_i32_139, %c8_i32_140 : i32
    %290 = tpu.assume_multiple %289, 8 : i32
    %291 = arith.index_cast %290 : i32 to index
    %c0_141 = arith.constant 0 : index
    %292 = vector.load %arg21[%291, %c0_141] : memref<64x128xf32, #tpu.memory_space<vmem>>, vector<8x128xf32>
    %293 = arith.truncf %286 : vector<8x128xf32> to vector<8x128xbf16>
    %c0_142 = arith.constant 0 : index
    %c0_143 = arith.constant 0 : index
    %294 = vector.load %arg9[%c0_142, %c0_143] : memref<128x128xbf16, #tpu.memory_space<vmem>>, vector<128x128xbf16>
    %cst_144 = arith.constant dense<0.000000e+00> : vector<8x128xf32>
    %295 = tpu.matmul %293, %294, %cst_144 {dimension_numbers = #tpu.dot_dimension_numbers<[1], [0], [0], [1], [0, 0, 1, 1], [], []>} : vector<8x128xbf16>, vector<128x128xbf16>, vector<8x128xf32> -> vector<8x128xf32>
    %296 = arith.addf %292, %295 : vector<8x128xf32>
    %297 = arith.mulf %35, %286 : vector<8x128xf32>
    %298 = math.tanh %296 : vector<8x128xf32>
    %299 = arith.mulf %27, %298 : vector<8x128xf32>
    %300 = arith.addf %297, %299 : vector<8x128xf32>
    %301 = arith.index_cast %290 : i32 to index
    %c0_145 = arith.constant 0 : index
    %302 = vector.load %arg21[%301, %c0_145] : memref<64x128xf32, #tpu.memory_space<vmem>>, vector<8x128xf32>
    tpu.vector_store %arg21[%301, %c0_145], %300 {strides = array<i32>} : memref<64x128xf32, #tpu.memory_space<vmem>>, vector<8x128xf32>,
    %c6_i32_146 = arith.constant 6 : i32
    %c8_i32_147 = arith.constant 8 : i32
    %303 = arith.muli %c6_i32_146, %c8_i32_147 : i32
    %304 = tpu.assume_multiple %303, 8 : i32
    %305 = arith.index_cast %304 : i32 to index
    %c0_148 = arith.constant 0 : index
    %306 = vector.load %arg21[%305, %c0_148] : memref<64x128xf32, #tpu.memory_space<vmem>>, vector<8x128xf32>
    %307 = arith.truncf %300 : vector<8x128xf32> to vector<8x128xbf16>
    %c0_149 = arith.constant 0 : index
    %c0_150 = arith.constant 0 : index
    %308 = vector.load %arg9[%c0_149, %c0_150] : memref<128x128xbf16, #tpu.memory_space<vmem>>, vector<128x128xbf16>
    %cst_151 = arith.constant dense<0.000000e+00> : vector<8x128xf32>
    %309 = tpu.matmul %307, %308, %cst_151 {dimension_numbers = #tpu.dot_dimension_numbers<[1], [0], [0], [1], [0, 0, 1, 1], [], []>} : vector<8x128xbf16>, vector<128x128xbf16>, vector<8x128xf32> -> vector<8x128xf32>
    %310 = arith.addf %306, %309 : vector<8x128xf32>
    %311 = arith.mulf %35, %300 : vector<8x128xf32>
    %312 = math.tanh %310 : vector<8x128xf32>
    %313 = arith.mulf %27, %312 : vector<8x128xf32>
    %314 = arith.addf %311, %313 : vector<8x128xf32>
    %315 = arith.index_cast %304 : i32 to index
    %c0_152 = arith.constant 0 : index
    %316 = vector.load %arg21[%315, %c0_152] : memref<64x128xf32, #tpu.memory_space<vmem>>, vector<8x128xf32>
    tpu.vector_store %arg21[%315, %c0_152], %314 {strides = array<i32>} : memref<64x128xf32, #tpu.memory_space<vmem>>, vector<8x128xf32>,
    %c7_i32_153 = arith.constant 7 : i32
    %c8_i32_154 = arith.constant 8 : i32
    %317 = arith.muli %c7_i32_153, %c8_i32_154 : i32
    %318 = tpu.assume_multiple %317, 8 : i32
    %319 = arith.index_cast %318 : i32 to index
    %c0_155 = arith.constant 0 : index
    %320 = vector.load %arg21[%319, %c0_155] : memref<64x128xf32, #tpu.memory_space<vmem>>, vector<8x128xf32>
    %321 = arith.truncf %314 : vector<8x128xf32> to vector<8x128xbf16>
    %c0_156 = arith.constant 0 : index
    %c0_157 = arith.constant 0 : index
    %322 = vector.load %arg9[%c0_156, %c0_157] : memref<128x128xbf16, #tpu.memory_space<vmem>>, vector<128x128xbf16>
    %cst_158 = arith.constant dense<0.000000e+00> : vector<8x128xf32>
    %323 = tpu.matmul %321, %322, %cst_158 {dimension_numbers = #tpu.dot_dimension_numbers<[1], [0], [0], [1], [0, 0, 1, 1], [], []>} : vector<8x128xbf16>, vector<128x128xbf16>, vector<8x128xf32> -> vector<8x128xf32>
    %324 = arith.addf %320, %323 : vector<8x128xf32>
    %325 = arith.mulf %35, %314 : vector<8x128xf32>
    %326 = math.tanh %324 : vector<8x128xf32>
    %327 = arith.mulf %27, %326 : vector<8x128xf32>
    %328 = arith.addf %325, %327 : vector<8x128xf32>
    %329 = arith.index_cast %318 : i32 to index
    %c0_159 = arith.constant 0 : index
    %330 = vector.load %arg21[%329, %c0_159] : memref<64x128xf32, #tpu.memory_space<vmem>>, vector<8x128xf32>
    tpu.vector_store %arg21[%329, %c0_159], %328 {strides = array<i32>} : memref<64x128xf32, #tpu.memory_space<vmem>>, vector<8x128xf32>,
    %c8_i32_160 = arith.constant 8 : i32
    %c0_161 = arith.constant 0 : index
    %c0_162 = arith.constant 0 : index
    %331 = vector.load %arg21[%c0_161, %c0_162] : memref<64x128xf32, #tpu.memory_space<vmem>>, vector<64x128xf32>
    %332 = arith.truncf %331 : vector<64x128xf32> to vector<64x128xbf16>
    %c0_163 = arith.constant 0 : index
    %c0_164 = arith.constant 0 : index
    %333 = vector.load %arg13[%c0_163, %c0_164] : memref<128x32xbf16, #tpu.memory_space<vmem>>, vector<128x32xbf16>
    %cst_165 = arith.constant dense<0.000000e+00> : vector<64x32xf32>
    %334 = tpu.matmul %332, %333, %cst_165 {dimension_numbers = #tpu.dot_dimension_numbers<[1], [0], [0], [1], [0, 0, 1, 1], [], []>} : vector<64x128xbf16>, vector<128x32xbf16>, vector<64x32xf32> -> vector<64x32xf32>
    %c0_166 = arith.constant 0 : index
    %c0_167 = arith.constant 0 : index
    %335 = vector.load %arg14[%c0_166, %c0_167] : memref<1x32xf32, #tpu.memory_space<vmem>>, vector<1x32xf32>
    %336 = vector.broadcast %335 : vector<1x32xf32> to vector<64x32xf32>
    %337 = arith.addf %334, %336 : vector<64x32xf32>
    %c0_168 = arith.constant 0 : index
    %c0_169 = arith.constant 0 : index
    %338 = vector.load %arg18[%c0_168, %c0_169] : memref<64x32xf32, #tpu.memory_space<vmem>>, vector<64x32xf32>
    tpu.vector_store %arg18[%c0_168, %c0_169], %337 {strides = array<i32>} : memref<64x32xf32, #tpu.memory_space<vmem>>, vector<64x32xf32>,
    %339 = arith.truncf %337 : vector<64x32xf32> to vector<64x32xbf16>
    %c0_170 = arith.constant 0 : index
    %c0_171 = arith.constant 0 : index
    %340 = vector.load %arg15[%c0_170, %c0_171] : memref<32x32xbf16, #tpu.memory_space<vmem>>, vector<32x32xbf16>
    %cst_172 = arith.constant dense<0.000000e+00> : vector<64x32xf32>
    %341 = tpu.matmul %339, %340, %cst_172 {dimension_numbers = #tpu.dot_dimension_numbers<[1], [0], [0], [1], [0, 0, 1, 1], [], []>} : vector<64x32xbf16>, vector<32x32xbf16>, vector<64x32xf32> -> vector<64x32xf32>
    %c0_173 = arith.constant 0 : index
    %c0_174 = arith.constant 0 : index
    %342 = vector.load %arg16[%c0_173, %c0_174] : memref<1x32xf32, #tpu.memory_space<vmem>>, vector<1x32xf32>
    %343 = vector.broadcast %342 : vector<1x32xf32> to vector<64x32xf32>
    %344 = arith.addf %341, %343 : vector<64x32xf32>
    %345 = math.exp %344 : vector<64x32xf32>
    %c0_175 = arith.constant 0 : index
    %c0_176 = arith.constant 0 : index
    %346 = vector.load %arg17[%c0_175, %c0_176] : memref<64x32xf32, #tpu.memory_space<vmem>>, vector<64x32xf32>
    tpu.vector_store %arg17[%c0_175, %c0_176], %345 {strides = array<i32>} : memref<64x32xf32, #tpu.memory_space<vmem>>, vector<64x32xf32>,
    return
  }
}

</mosaic_0001>

<llo_original>
// kernel: _lambda_.1
$region0: #{_lambda_.1}
  #allocation0 [shape = 'u32[]', space=smem, size = 0x4, offset = 0x4, fixed_abs, tag = 'smem constant byte address 0x4 - core index']
  #allocation1 [shape = 'u32[144,128]{1,0:T(1,128)}', space=vmem, size = 0x12000, scoped, tag = 'internal scratch']
  #allocation2 [shape = 'f32[64,128]{1,0:T(8,128)}', space=vmem, size = 0x8000, scoped, tag = 'scratch operand']
  #allocation3 [shape = 'f32[64,128]{1,0:T(8,128)}', space=vmem, size = 0x8000, scoped, tag = 'scratch operand']
  %s0 = inlined_call_operand.vmem [shape: f32[64,32], index: 0, kind: input, shape index: {}]
  %s1 = inlined_call_operand.vmem [shape: f32[64,128], index: 1, kind: input, shape index: {}]
  %s2 = inlined_call_operand.vmem [shape: f32[64,128], index: 2, kind: input, shape index: {}]
  %s3 = inlined_call_operand.vmem [shape: bf16[32,128], index: 3, kind: input, shape index: {}]
  %s4 = inlined_call_operand.vmem [shape: f32[1,128], index: 4, kind: input, shape index: {}, may-alias: {4,8}]
  %s5 = inlined_call_operand.vmem [shape: bf16[128,128], index: 5, kind: input, shape index: {}]
  %s6 = inlined_call_operand.vmem [shape: f32[1,128], index: 6, kind: input, shape index: {}]
  %s7 = inlined_call_operand.vmem [shape: bf16[128,128], index: 7, kind: input, shape index: {}]
  %s8 = inlined_call_operand.vmem [shape: f32[1,128], index: 8, kind: input, shape index: {}, may-alias: {4,8}]
  %s9 = inlined_call_operand.vmem [shape: bf16[128,128], index: 9, kind: input, shape index: {}]
  %s10 = inlined_call_operand.vmem [shape: f32[1,128], index: 10, kind: input, shape index: {}]
  %s11 = inlined_call_operand.vmem [shape: bf16[128,32], index: 11, kind: input, shape index: {}]
  %s12 = inlined_call_operand.vmem [shape: f32[1,32], index: 12, kind: input, shape index: {}, may-alias: {12,14,16}]
  %s13 = inlined_call_operand.vmem [shape: bf16[128,32], index: 13, kind: input, shape index: {}]
  %s14 = inlined_call_operand.vmem [shape: f32[1,32], index: 14, kind: input, shape index: {}, may-alias: {12,14,16}]
  %s15 = inlined_call_operand.vmem [shape: bf16[32,32], index: 15, kind: input, shape index: {}]
  %s16 = inlined_call_operand.vmem [shape: f32[1,32], index: 16, kind: input, shape index: {}, may-alias: {12,14,16}]
  %s17 = inlined_call_operand.vmem [shape: f32[64,32], index: 17, kind: output, shape index: {0}]
  %s18 = inlined_call_operand.vmem [shape: f32[64,32], index: 18, kind: output, shape index: {1}]
  %s19 = inlined_call_operand.hbm [shape: f32[1,1], index: 19, kind: output, shape index: {2}]
  %20 = xla_tuple %s17, %s18, %s19
  %s21 = sld [smem:[#allocation0]]
  $region94: #{_lambda_.1} parent=0
    _
  %s23 = ssub.s32 1, %s21
  %s24 = scalar_select 0, %s23, %s21
  $region1: #{_lambda_.1} parent=0
    #allocation4 [shape = 'u8[512]{0}', space=vmem, size = 0x400, scoped, tag = 'output window, operand 2, single buffered']
    #allocation5 [shape = 's32[1]{0}', space=sflag, size = 0x4, scoped, tag = 'scoped memory for _lambda_.1']
    %25 = vsyncpa [#allocation5], 0
    // Predicated region
    $region2: #{_lambda_.1} parent=1 // pred_check
      _
    $region3: #{_lambda_.1} parent=1 // pred_check_branch
      %27 = sbr.rel (0) target = $region5
    $region4: #{_lambda_.1} parent=1 // pred_region
      _
    $region5: #{_lambda_.1} parent=1 // pred_fallthru
      _
    // Predicated region
    $region6: #{_lambda_.1} parent=1 // pred_check
      _
    $region7: #{_lambda_.1} parent=1 // pred_check_branch
      %29 = sbr.rel (0) target = $region9
    $region8: #{_lambda_.1} parent=1 // pred_region
      _
    $region9: #{_lambda_.1} parent=1 // pred_fallthru
      _
    // Predicated region
    $region10: #{_lambda_.1} parent=1 // pred_check
      _
    $region11: #{_lambda_.1} parent=1 // pred_check_branch
      %31 = sbr.rel (0) target = $region13
    $region12: #{_lambda_.1} parent=1 // pred_region
      _
    $region13: #{_lambda_.1} parent=1 // pred_fallthru
      _
    // Predicated region
    $region14: #{_lambda_.1} parent=1 // pred_check
      _
    $region15: #{_lambda_.1} parent=1 // pred_check_branch
      %33 = sbr.rel (0) target = $region17
    $region16: #{_lambda_.1} parent=1 // pred_region
      _
    $region17: #{_lambda_.1} parent=1 // pred_fallthru
      _
    // Predicated region
    $region18: #{_lambda_.1} parent=1 // pred_check
      _
    $region19: #{_lambda_.1} parent=1 // pred_check_branch
      %35 = sbr.rel (0) target = $region21
    $region20: #{_lambda_.1} parent=1 // pred_region
      _
    $region21: #{_lambda_.1} parent=1 // pred_fallthru
      _
    // Predicated region
    $region22: #{_lambda_.1} parent=1 // pred_check
      _
    $region23: #{_lambda_.1} parent=1 // pred_check_branch
      %37 = sbr.rel (0) target = $region25
    $region24: #{_lambda_.1} parent=1 // pred_region
      _
    $region25: #{_lambda_.1} parent=1 // pred_fallthru
      _
    // Predicated region
    $region26: #{_lambda_.1} parent=1 // pred_check
      _
    $region27: #{_lambda_.1} parent=1 // pred_check_branch
      %39 = sbr.rel (0) target = $region29
    $region28: #{_lambda_.1} parent=1 // pred_region
      _
    $region29: #{_lambda_.1} parent=1 // pred_fallthru
      _
    // Predicated region
    $region30: #{_lambda_.1} parent=1 // pred_check
      _
    $region31: #{_lambda_.1} parent=1 // pred_check_branch
      %41 = sbr.rel (0) target = $region33
    $region32: #{_lambda_.1} parent=1 // pred_region
      _
    $region33: #{_lambda_.1} parent=1 // pred_fallthru
      _
    // Predicated region
    $region34: #{_lambda_.1} parent=1 // pred_check
      _
    $region35: #{_lambda_.1} parent=1 // pred_check_branch
      %43 = sbr.rel (0) target = $region37
    $region36: #{_lambda_.1} parent=1 // pred_region
      _
    $region37: #{_lambda_.1} parent=1 // pred_fallthru
      _
    // Predicated region
    $region38: #{_lambda_.1} parent=1 // pred_check
      _
    $region39: #{_lambda_.1} parent=1 // pred_check_branch
      %45 = sbr.rel (0) target = $region41
    $region40: #{_lambda_.1} parent=1 // pred_region
      _
    $region41: #{_lambda_.1} parent=1 // pred_fallthru
      _
    // Predicated region
    $region42: #{_lambda_.1} parent=1 // pred_check
      _
    $region43: #{_lambda_.1} parent=1 // pred_check_branch
      %47 = sbr.rel (0) target = $region45
    $region44: #{_lambda_.1} parent=1 // pred_region
      _
    $region45: #{_lambda_.1} parent=1 // pred_fallthru
      _
    // Predicated region
    $region46: #{_lambda_.1} parent=1 // pred_check
      _
    $region47: #{_lambda_.1} parent=1 // pred_check_branch
      %49 = sbr.rel (0) target = $region49
    $region48: #{_lambda_.1} parent=1 // pred_region
      _
    $region49: #{_lambda_.1} parent=1 // pred_fallthru
      _
    // Predicated region
    $region50: #{_lambda_.1} parent=1 // pred_check
      _
    $region51: #{_lambda_.1} parent=1 // pred_check_branch
      %51 = sbr.rel (0) target = $region53
    $region52: #{_lambda_.1} parent=1 // pred_region
      _
    $region53: #{_lambda_.1} parent=1 // pred_fallthru
      _
    // Predicated region
    $region54: #{_lambda_.1} parent=1 // pred_check
      _
    $region55: #{_lambda_.1} parent=1 // pred_check_branch
      %53 = sbr.rel (0) target = $region57
    $region56: #{_lambda_.1} parent=1 // pred_region
      _
    $region57: #{_lambda_.1} parent=1 // pred_fallthru
      _
    // Predicated region
    $region58: #{_lambda_.1} parent=1 // pred_check
      _
    $region59: #{_lambda_.1} parent=1 // pred_check_branch
      %55 = sbr.rel (0) target = $region61
    $region60: #{_lambda_.1} parent=1 // pred_region
      _
    $region61: #{_lambda_.1} parent=1 // pred_fallthru
      _
    // Predicated region
    $region62: #{_lambda_.1} parent=1 // pred_check
      _
    $region63: #{_lambda_.1} parent=1 // pred_check_branch
      %57 = sbr.rel (0) target = $region65
    $region64: #{_lambda_.1} parent=1 // pred_region
      _
    $region65: #{_lambda_.1} parent=1 // pred_fallthru
      _
    // Predicated region
    $region66: #{_lambda_.1} parent=1 // pred_check
      _
    $region67: #{_lambda_.1} parent=1 // pred_check_branch
      %59 = sbr.rel (0) target = $region69
    $region68: #{_lambda_.1} parent=1 // pred_region
      _
    $region69: #{_lambda_.1} parent=1 // pred_fallthru
      _
    %v61 = vld [vmem:[%s6] sm:$0x1]
    %v62 = vxor.u32 %v61, 2147483648
    %v63 = vmul.f32 %v62, 1.442695
    %v64 = vpow.pop %v63
    %v65 = vadd.f32 %v64, 1.0
    %v66 = vrcp.pop %v65
    %v67 = vmul.f32 1.0, %v66
    %v68 = vmul.f32 %v67, 0.18
    %v69 = vadd.f32 %v68, 0.02
    %v70 = vrcp.pop %v69
    %v71 = vmul.f32 0.02, %v70
    %v72 = vld [vmem:[%s10] sm:$0x1]
    %v73 = vxor.u32 %v72, 2147483648
    %v74 = vmul.f32 %v73, 1.442695
    %v75 = vpow.pop %v74
    %v76 = vadd.f32 %v75, 1.0
    %v77 = vrcp.pop %v76
    %v78 = vmul.f32 1.0, %v77
    %v79 = vmul.f32 %v78, 0.18
    %v80 = vadd.f32 %v79, 0.02
    %v81 = vrcp.pop %v80
    %v82 = vmul.f32 0.02, %v81
    %v84 = vlaneseq
    %v85 = vshrl.u32 %v84, 7
    %v86 = vsub.s32 0, %v85
    %v87 = vrot.slane %v71, %v86
    %v90 = vlaneseq
    %v91 = vshrl.u32 %v90, 7
    %v92 = vsub.s32 0, %v91
    %v93 = vrot.slane %v82, %v92
    %v95 = vsub.f32 1.0, %v71
    %v97 = vlaneseq
    %v98 = vshrl.u32 %v97, 7
    %v99 = vsub.s32 0, %v98
    %v100 = vrot.slane %v95, %v99
    %v102 = vsub.f32 1.0, %v82
    %v104 = vlaneseq
    %v105 = vshrl.u32 %v104, 7
    %v106 = vsub.s32 0, %v105
    %v107 = vrot.slane %v102, %v106
    %v109 = vld [vmem:[%s0] sm:$0xff]
    %v110 = vld [vmem:[%s0 + $0x8] sm:$0xff]
    %v111 = vld [vmem:[%s0 + $0x10] sm:$0xff]
    %v112 = vld [vmem:[%s0 + $0x18] sm:$0xff]
    %v113 = vld [vmem:[%s0 + $0x20] sm:$0xff]
    %v114 = vld [vmem:[%s0 + $0x28] sm:$0xff]
    %v115 = vld [vmem:[%s0 + $0x30] sm:$0xff]
    %v116 = vld [vmem:[%s0 + $0x38] sm:$0xff]
    %v117 = vpack.c.bf16 %v110, %v109
    %v118 = vpack.c.bf16 %v112, %v111
    %v119 = vpack.c.bf16 %v114, %v113
    %v120 = vpack.c.bf16 %v116, %v115
    %v121 = vld [vmem:[%s3] sm:$0xf]
    %v122 = vld [vmem:[%s3 + $0x4] sm:$0xf]
    %v123 = vld [vmem:[%s3 + $0x8] sm:$0xf]
    %v124 = vld [vmem:[%s3 + $0xc] sm:$0xf]
    %v125 = vld [vmem:[%s4] sm:$0x1]
    %v127 = vlaneseq
    %v128 = vshrl.u32 %v127, 7
    %v129 = vsub.s32 0, %v128
    %v130 = vrot.slane %v125, %v129
    %v136 = vunpack.c.l.b16 %v121
    %v137 = vunpack.c.l.b16 %v122
    %v138 = vunpack.c.l.b16 %v123
    %v139 = vunpack.c.l.b16 %v124
    %v140 = vpack.c.b16 %v137, %v136
    %v141 = vpack.c.b16 %v139, %v138
    %vm144 = vcmask 261120
    %v146 = vsel %vm144, %v117, 0
    %v149 = vsel %vm144, %v118, 0
    %v152 = vsel %vm144, %v119, 0
    %v155 = vsel %vm144, %v120, 0
    %157 = vmatprep.subr.bf16.mxu0 0
    %158 = vmatpush1.bf16.msra.mxu0 %v140
    %159 = vmatprep.subr.bf16.mxu0 0
    %160 = vmatpush1.bf16.msra.mxu0 %v141
    %161 = vmatprep.subr.bf16.mxu0 0
    %162 = vmatpush1.bf16.msra.mxu0 0
    %163 = vmatprep.subr.bf16.mxu0 0
    %164 = vmatpush1.bf16.msra.mxu0 0
    %165 = vmatprep.subr.bf16.mxu0 0
    %166 = vmatpush1.bf16.msra.mxu0 0
    %167 = vmatprep.subr.bf16.mxu0 0
    %168 = vmatpush1.bf16.msra.mxu0 0
    %169 = vmatprep.subr.bf16.mxu0 0
    %170 = vmatpush1.bf16.msra.mxu0 0
    %171 = vmatprep.subr.bf16.mxu0 0
    %172 = vmatpush1.bf16.msra.mxu0 0
    %173 = vmatprep.subr.bf16.mxu0 0
    %174 = vmatpush1.bf16.msra.mxu0 0
    %175 = vmatprep.subr.bf16.mxu0 0
    %176 = vmatpush1.bf16.msra.mxu0 0
    %177 = vmatprep.subr.bf16.mxu0 0
    %178 = vmatpush1.bf16.msra.mxu0 0
    %179 = vmatprep.subr.bf16.mxu0 0
    %180 = vmatpush1.bf16.msra.mxu0 0
    %181 = vmatprep.subr.bf16.mxu0 0
    %182 = vmatpush1.bf16.msra.mxu0 0
    %183 = vmatprep.subr.bf16.mxu0 0
    %184 = vmatpush1.bf16.msra.mxu0 0
    %185 = vmatprep.subr.bf16.mxu0 0
    %186 = vmatpush1.bf16.msra.mxu0 0
    %187 = vmatprep.subr.bf16.mxu0 0
    %188 = vmatpush1.bf16.msra.mxu0 0
    %189 = vmatprep.mubr.bf16.mxu0 0
    %190 = vmatmul.mubr.bf16.gmra.mrb[0].mxu0 %v146
    %v191 = vpop.f32.mrb[0].mxu0
    %v192 = vadd.f32 %v130, %v191
    %v193 = vpop.f32.mrb[0].mxu0
    %v194 = vpop.f32.mrb[0].mxu0
    %v195 = vadd.f32 %v130, %v194
    %v196 = vpop.f32.mrb[0].mxu0
    %197 = vmatprep.mubr.bf16.mxu0 0
    %198 = vmatmul.mubr.bf16.gmra.mrb[0].mxu0 %v149
    %v199 = vpop.f32.mrb[0].mxu0
    %v200 = vadd.f32 %v130, %v199
    %v201 = vpop.f32.mrb[0].mxu0
    %v202 = vpop.f32.mrb[0].mxu0
    %v203 = vadd.f32 %v130, %v202
    %v204 = vpop.f32.mrb[0].mxu0
    %205 = vmatprep.mubr.bf16.mxu0 0
    %206 = vmatmul.mubr.bf16.gmra.mrb[0].mxu0 %v152
    %v207 = vpop.f32.mrb[0].mxu0
    %v208 = vadd.f32 %v130, %v207
    %v209 = vpop.f32.mrb[0].mxu0
    %v210 = vpop.f32.mrb[0].mxu0
    %v211 = vadd.f32 %v130, %v210
    %v212 = vpop.f32.mrb[0].mxu0
    %213 = vmatprep.mubr.bf16.mxu0 0
    %214 = vmatmul.mubr.bf16.gmra.mrb[0].mxu0 %v155
    %v215 = vpop.f32.mrb[0].mxu0
    %v216 = vadd.f32 %v130, %v215
    %v217 = vpop.f32.mrb[0].mxu0
    %v218 = vpop.f32.mrb[0].mxu0
    %v219 = vadd.f32 %v130, %v218
    %v220 = vpop.f32.mrb[0].mxu0
    %221 = vdwg.mxu0
    %v222 = vld [vmem:[%s1] sm:$0xff]
    %v223 = vld [vmem:[%s1 + $0x8] sm:$0xff]
    %v224 = vld [vmem:[%s1 + $0x10] sm:$0xff]
    %v225 = vld [vmem:[%s1 + $0x18] sm:$0xff]
    %v226 = vld [vmem:[%s1 + $0x20] sm:$0xff]
    %v227 = vld [vmem:[%s1 + $0x28] sm:$0xff]
    %v228 = vld [vmem:[%s1 + $0x30] sm:$0xff]
    %v229 = vld [vmem:[%s1 + $0x38] sm:$0xff]
    %v230 = vmul.f32 %v222, 0.01
    %v231 = vmul.f32 %v223, 0.01
    %v232 = vmul.f32 %v224, 0.01
    %v233 = vmul.f32 %v225, 0.01
    %v234 = vmul.f32 %v226, 0.01
    %v235 = vmul.f32 %v227, 0.01
    %v236 = vmul.f32 %v228, 0.01
    %v237 = vmul.f32 %v229, 0.01
    %v238 = vadd.f32 %v192, %v230
    %v239 = vadd.f32 %v195, %v231
    %v240 = vadd.f32 %v200, %v232
    %v241 = vadd.f32 %v203, %v233
    %v242 = vadd.f32 %v208, %v234
    %v243 = vadd.f32 %v211, %v235
    %v244 = vadd.f32 %v216, %v236
    %v245 = vadd.f32 %v219, %v237
    %246 = vst [vmem:[#allocation2] sm:$0xff] %v238
    %247 = vst [vmem:[#allocation2 + $0x8] sm:$0xff] %v239
    %248 = vst [vmem:[#allocation2 + $0x10] sm:$0xff] %v240
    %249 = vst [vmem:[#allocation2 + $0x18] sm:$0xff] %v241
    %250 = vst [vmem:[#allocation2 + $0x20] sm:$0xff] %v242
    %251 = vst [vmem:[#allocation2 + $0x28] sm:$0xff] %v243
    %252 = vst [vmem:[#allocation2 + $0x30] sm:$0xff] %v244
    %253 = vst [vmem:[#allocation2 + $0x38] sm:$0xff] %v245
    %v254 = vld [vmem:[#allocation2] sm:$0xff]
    %v255 = vld [vmem:[%s5] sm:$0xf]
    %v256 = vld [vmem:[%s5 + $0x4] sm:$0xf]
    %v257 = vld [vmem:[%s5 + $0x8] sm:$0xf]
    %v258 = vld [vmem:[%s5 + $0xc] sm:$0xf]
    %v259 = vld [vmem:[%s5 + $0x10] sm:$0xf]
    %v260 = vld [vmem:[%s5 + $0x14] sm:$0xf]
    %v261 = vld [vmem:[%s5 + $0x18] sm:$0xf]
    %v262 = vld [vmem:[%s5 + $0x1c] sm:$0xf]
    %v263 = vld [vmem:[%s5 + $0x20] sm:$0xf]
    %v264 = vld [vmem:[%s5 + $0x24] sm:$0xf]
    %v265 = vld [vmem:[%s5 + $0x28] sm:$0xf]
    %v266 = vld [vmem:[%s5 + $0x2c] sm:$0xf]
    %v267 = vld [vmem:[%s5 + $0x30] sm:$0xf]
    %v268 = vld [vmem:[%s5 + $0x34] sm:$0xf]
    %v269 = vld [vmem:[%s5 + $0x38] sm:$0xf]
    %v270 = vld [vmem:[%s5 + $0x3c] sm:$0xf]
    %v287 = vunpack.c.l.b16 %v255
    %v288 = vunpack.c.l.b16 %v256
    %v289 = vunpack.c.l.b16 %v257
    %v290 = vunpack.c.l.b16 %v258
    %v291 = vunpack.c.l.b16 %v259
    %v292 = vunpack.c.l.b16 %v260
    %v293 = vunpack.c.l.b16 %v261
    %v294 = vunpack.c.l.b16 %v262
    %v295 = vunpack.c.l.b16 %v263
    %v296 = vunpack.c.l.b16 %v264
    %v297 = vunpack.c.l.b16 %v265
    %v298 = vunpack.c.l.b16 %v266
    %v299 = vunpack.c.l.b16 %v267
    %v300 = vunpack.c.l.b16 %v268
    %v301 = vunpack.c.l.b16 %v269
    %v302 = vunpack.c.l.b16 %v270
    %v303 = vpack.c.b16 %v288, %v287
    %v304 = vpack.c.b16 %v290, %v289
    %v305 = vpack.c.b16 %v292, %v291
    %v306 = vpack.c.b16 %v294, %v293
    %v307 = vpack.c.b16 %v296, %v295
    %v308 = vpack.c.b16 %v298, %v297
    %v309 = vpack.c.b16 %v300, %v299
    %v310 = vpack.c.b16 %v302, %v301
    %319 = vmatprep.subr.bf16.mxu0 0
    %320 = vmatpush1.bf16.msra.mxu0 %v303
    %321 = vmatprep.subr.bf16.mxu0 0
    %322 = vmatpush1.bf16.msra.mxu0 %v304
    %323 = vmatprep.subr.bf16.mxu0 0
    %324 = vmatpush1.bf16.msra.mxu0 %v305
    %325 = vmatprep.subr.bf16.mxu0 0
    %326 = vmatpush1.bf16.msra.mxu0 %v306
    %327 = vmatprep.subr.bf16.mxu0 0
    %328 = vmatpush1.bf16.msra.mxu0 %v307
    %329 = vmatprep.subr.bf16.mxu0 0
    %330 = vmatpush1.bf16.msra.mxu0 %v308
    %331 = vmatprep.subr.bf16.mxu0 0
    %332 = vmatpush1.bf16.msra.mxu0 %v309
    %333 = vmatprep.subr.bf16.mxu0 0
    %334 = vmatpush1.bf16.msra.mxu0 %v310
    %335 = vmatprep.subr.bf16.mxu0 0
    %336 = vmatpush1.bf16.msra.mxu0 0
    %337 = vmatprep.subr.bf16.mxu0 0
    %338 = vmatpush1.bf16.msra.mxu0 0
    %339 = vmatprep.subr.bf16.mxu0 0
    %340 = vmatpush1.bf16.msra.mxu0 0
    %341 = vmatprep.subr.bf16.mxu0 0
    %342 = vmatpush1.bf16.msra.mxu0 0
    %343 = vmatprep.subr.bf16.mxu0 0
    %344 = vmatpush1.bf16.msra.mxu0 0
    %345 = vmatprep.subr.bf16.mxu0 0
    %346 = vmatpush1.bf16.msra.mxu0 0
    %347 = vmatprep.subr.bf16.mxu0 0
    %348 = vmatpush1.bf16.msra.mxu0 0
    %349 = vmatprep.subr.bf16.mxu0 0
    %350 = vmatpush1.bf16.msra.mxu0 0
    %351 = vmatprep.mubr.bf16.mxu0 0
    %352 = vmatmul.mubr.bf16.gmra.mrb[0].mxu0 0
    %v353 = vpop.f32.mrb[0].mxu0
    %v354 = vadd.f32 0.0, %v353
    %v355 = vpop.f32.mrb[0].mxu0
    %v356 = vpop.f32.mrb[0].mxu0
    %v357 = vpop.f32.mrb[0].mxu0
    %358 = vdwg.mxu0
    %v359 = vadd.f32 %v254, %v354
    %v360 = vmul.f32 %v100, 0.0
    %v361 = vtanh.pop %v359
    %v362 = vmul.f32 %v87, %v361
    %v363 = vadd.f32 %v360, %v362
    %364 = vst [vmem:[#allocation2] sm:$0xff] %v363
    %s365 = scalar_lea.vmem [#allocation2], 8
    %v366 = vld [vmem:[%s365] sm:$0xff]
    %v367 = vpack.c.bf16 %v363, %v363
    %v368 = vld [vmem:[%s5] sm:$0xf]
    %v369 = vld [vmem:[%s5 + $0x4] sm:$0xf]
    %v370 = vld [vmem:[%s5 + $0x8] sm:$0xf]
    %v371 = vld [vmem:[%s5 + $0xc] sm:$0xf]
    %v372 = vld [vmem:[%s5 + $0x10] sm:$0xf]
    %v373 = vld [vmem:[%s5 + $0x14] sm:$0xf]
    %v374 = vld [vmem:[%s5 + $0x18] sm:$0xf]
    %v375 = vld [vmem:[%s5 + $0x1c] sm:$0xf]
    %v376 = vld [vmem:[%s5 + $0x20] sm:$0xf]
    %v377 = vld [vmem:[%s5 + $0x24] sm:$0xf]
    %v378 = vld [vmem:[%s5 + $0x28] sm:$0xf]
    %v379 = vld [vmem:[%s5 + $0x2c] sm:$0xf]
    %v380 = vld [vmem:[%s5 + $0x30] sm:$0xf]
    %v381 = vld [vmem:[%s5 + $0x34] sm:$0xf]
    %v382 = vld [vmem:[%s5 + $0x38] sm:$0xf]
    %v383 = vld [vmem:[%s5 + $0x3c] sm:$0xf]
    %v400 = vunpack.c.l.b16 %v368
    %v401 = vunpack.c.l.b16 %v369
    %v402 = vunpack.c.l.b16 %v370
    %v403 = vunpack.c.l.b16 %v371
    %v404 = vunpack.c.l.b16 %v372
    %v405 = vunpack.c.l.b16 %v373
    %v406 = vunpack.c.l.b16 %v374
    %v407 = vunpack.c.l.b16 %v375
    %v408 = vunpack.c.l.b16 %v376
    %v409 = vunpack.c.l.b16 %v377
    %v410 = vunpack.c.l.b16 %v378
    %v411 = vunpack.c.l.b16 %v379
    %v412 = vunpack.c.l.b16 %v380
    %v413 = vunpack.c.l.b16 %v381
    %v414 = vunpack.c.l.b16 %v382
    %v415 = vunpack.c.l.b16 %v383
    %v416 = vpack.c.b16 %v401, %v400
    %v417 = vpack.c.b16 %v403, %v402
    %v418 = vpack.c.b16 %v405, %v404
    %v419 = vpack.c.b16 %v407, %v406
    %v420 = vpack.c.b16 %v409, %v408
    %v421 = vpack.c.b16 %v411, %v410
    %v422 = vpack.c.b16 %v413, %v412
    %v423 = vpack.c.b16 %v415, %v414
    %432 = vmatprep.subr.bf16.mxu0 0
    %433 = vmatpush1.bf16.msra.mxu0 %v416
    %434 = vmatprep.subr.bf16.mxu0 0
    %435 = vmatpush1.bf16.msra.mxu0 %v417
    %436 = vmatprep.subr.bf16.mxu0 0
    %437 = vmatpush1.bf16.msra.mxu0 %v418
    %438 = vmatprep.subr.bf16.mxu0 0
    %439 = vmatpush1.bf16.msra.mxu0 %v419
    %440 = vmatprep.subr.bf16.mxu0 0
    %441 = vmatpush1.bf16.msra.mxu0 %v420
    %442 = vmatprep.subr.bf16.mxu0 0
    %443 = vmatpush1.bf16.msra.mxu0 %v421
    %444 = vmatprep.subr.bf16.mxu0 0
    %445 = vmatpush1.bf16.msra.mxu0 %v422
    %446 = vmatprep.subr.bf16.mxu0 0
    %447 = vmatpush1.bf16.msra.mxu0 %v423
    %448 = vmatprep.subr.bf16.mxu0 0
    %449 = vmatpush1.bf16.msra.mxu0 0
    %450 = vmatprep.subr.bf16.mxu0 0
    %451 = vmatpush1.bf16.msra.mxu0 0
    %452 = vmatprep.subr.bf16.mxu0 0
    %453 = vmatpush1.bf16.msra.mxu0 0
    %454 = vmatprep.subr.bf16.mxu0 0
    %455 = vmatpush1.bf16.msra.mxu0 0
    %456 = vmatprep.subr.bf16.mxu0 0
    %457 = vmatpush1.bf16.msra.mxu0 0
    %458 = vmatprep.subr.bf16.mxu0 0
    %459 = vmatpush1.bf16.msra.mxu0 0
    %460 = vmatprep.subr.bf16.mxu0 0
    %461 = vmatpush1.bf16.msra.mxu0 0
    %462 = vmatprep.subr.bf16.mxu0 0
    %463 = vmatpush1.bf16.msra.mxu0 0
    %464 = vmatprep.mubr.bf16.mxu0 0
    %465 = vmatmul.mubr.bf16.gmra.mrb[0].mxu0 %v367
    %v466 = vpop.f32.mrb[0].mxu0
    %v467 = vadd.f32 0.0, %v466
    %v468 = vpop.f32.mrb[0].mxu0
    %v469 = vpop.f32.mrb[0].mxu0
    %v470 = vpop.f32.mrb[0].mxu0
    %471 = vdwg.mxu0
    %v472 = vadd.f32 %v366, %v467
    %v473 = vmul.f32 %v100, %v363
    %v474 = vtanh.pop %v472
    %v475 = vmul.f32 %v87, %v474
    %v476 = vadd.f32 %v473, %v475
    %477 = vst [vmem:[%s365] sm:$0xff] %v476
    %s478 = scalar_lea.vmem [#allocation2], 16
    %v479 = vld [vmem:[%s478] sm:$0xff]
    %v480 = vpack.c.bf16 %v476, %v476
    %v481 = vld [vmem:[%s5] sm:$0xf]
    %v482 = vld [vmem:[%s5 + $0x4] sm:$0xf]
    %v483 = vld [vmem:[%s5 + $0x8] sm:$0xf]
    %v484 = vld [vmem:[%s5 + $0xc] sm:$0xf]
    %v485 = vld [vmem:[%s5 + $0x10] sm:$0xf]
    %v486 = vld [vmem:[%s5 + $0x14] sm:$0xf]
    %v487 = vld [vmem:[%s5 + $0x18] sm:$0xf]
    %v488 = vld [vmem:[%s5 + $0x1c] sm:$0xf]
    %v489 = vld [vmem:[%s5 + $0x20] sm:$0xf]
    %v490 = vld [vmem:[%s5 + $0x24] sm:$0xf]
    %v491 = vld [vmem:[%s5 + $0x28] sm:$0xf]
    %v492 = vld [vmem:[%s5 + $0x2c] sm:$0xf]
    %v493 = vld [vmem:[%s5 + $0x30] sm:$0xf]
    %v494 = vld [vmem:[%s5 + $0x34] sm:$0xf]
    %v495 = vld [vmem:[%s5 + $0x38] sm:$0xf]
    %v496 = vld [vmem:[%s5 + $0x3c] sm:$0xf]
    %v513 = vunpack.c.l.b16 %v481
    %v514 = vunpack.c.l.b16 %v482
    %v515 = vunpack.c.l.b16 %v483
    %v516 = vunpack.c.l.b16 %v484
    %v517 = vunpack.c.l.b16 %v485
    %v518 = vunpack.c.l.b16 %v486
    %v519 = vunpack.c.l.b16 %v487
    %v520 = vunpack.c.l.b16 %v488
    %v521 = vunpack.c.l.b16 %v489
    %v522 = vunpack.c.l.b16 %v490
    %v523 = vunpack.c.l.b16 %v491
    %v524 = vunpack.c.l.b16 %v492
    %v525 = vunpack.c.l.b16 %v493
    %v526 = vunpack.c.l.b16 %v494
    %v527 = vunpack.c.l.b16 %v495
    %v528 = vunpack.c.l.b16 %v496
    %v529 = vpack.c.b16 %v514, %v513
    %v530 = vpack.c.b16 %v516, %v515
    %v531 = vpack.c.b16 %v518, %v517
    %v532 = vpack.c.b16 %v520, %v519
    %v533 = vpack.c.b16 %v522, %v521
    %v534 = vpack.c.b16 %v524, %v523
    %v535 = vpack.c.b16 %v526, %v525
    %v536 = vpack.c.b16 %v528, %v527
    %545 = vmatprep.subr.bf16.mxu0 0
    %546 = vmatpush1.bf16.msra.mxu0 %v529
    %547 = vmatprep.subr.bf16.mxu0 0
    %548 = vmatpush1.bf16.msra.mxu0 %v530
    %549 = vmatprep.subr.bf16.mxu0 0
    %550 = vmatpush1.bf16.msra.mxu0 %v531
    %551 = vmatprep.subr.bf16.mxu0 0
    %552 = vmatpush1.bf16.msra.mxu0 %v532
    %553 = vmatprep.subr.bf16.mxu0 0
    %554 = vmatpush1.bf16.msra.mxu0 %v533
    %555 = vmatprep.subr.bf16.mxu0 0
    %556 = vmatpush1.bf16.msra.mxu0 %v534
    %557 = vmatprep.subr.bf16.mxu0 0
    %558 = vmatpush1.bf16.msra.mxu0 %v535
    %559 = vmatprep.subr.bf16.mxu0 0
    %560 = vmatpush1.bf16.msra.mxu0 %v536
    %561 = vmatprep.subr.bf16.mxu0 0
    %562 = vmatpush1.bf16.msra.mxu0 0
    %563 = vmatprep.subr.bf16.mxu0 0
    %564 = vmatpush1.bf16.msra.mxu0 0
    %565 = vmatprep.subr.bf16.mxu0 0
    %566 = vmatpush1.bf16.msra.mxu0 0
    %567 = vmatprep.subr.bf16.mxu0 0
    %568 = vmatpush1.bf16.msra.mxu0 0
    %569 = vmatprep.subr.bf16.mxu0 0
    %570 = vmatpush1.bf16.msra.mxu0 0
    %571 = vmatprep.subr.bf16.mxu0 0
    %572 = vmatpush1.bf16.msra.mxu0 0
    %573 = vmatprep.subr.bf16.mxu0 0
    %574 = vmatpush1.bf16.msra.mxu0 0
    %575 = vmatprep.subr.bf16.mxu0 0
    %576 = vmatpush1.bf16.msra.mxu0 0
    %577 = vmatprep.mubr.bf16.mxu0 0
    %578 = vmatmul.mubr.bf16.gmra.mrb[0].mxu0 %v480
    %v579 = vpop.f32.mrb[0].mxu0
    %v580 = vadd.f32 0.0, %v579
    %v581 = vpop.f32.mrb[0].mxu0
    %v582 = vpop.f32.mrb[0].mxu0
    %v583 = vpop.f32.mrb[0].mxu0
    %584 = vdwg.mxu0
    %v585 = vadd.f32 %v479, %v580
    %v586 = vmul.f32 %v100, %v476
    %v587 = vtanh.pop %v585
    %v588 = vmul.f32 %v87, %v587
    %v589 = vadd.f32 %v586, %v588
    %590 = vst [vmem:[%s478] sm:$0xff] %v589
    %s591 = scalar_lea.vmem [#allocation2], 24
    %v592 = vld [vmem:[%s591] sm:$0xff]
    %v593 = vpack.c.bf16 %v589, %v589
    %v594 = vld [vmem:[%s5] sm:$0xf]
    %v595 = vld [vmem:[%s5 + $0x4] sm:$0xf]
    %v596 = vld [vmem:[%s5 + $0x8] sm:$0xf]
    %v597 = vld [vmem:[%s5 + $0xc] sm:$0xf]
    %v598 = vld [vmem:[%s5 + $0x10] sm:$0xf]
    %v599 = vld [vmem:[%s5 + $0x14] sm:$0xf]
    %v600 = vld [vmem:[%s5 + $0x18] sm:$0xf]
    %v601 = vld [vmem:[%s5 + $0x1c] sm:$0xf]
    %v602 = vld [vmem:[%s5 + $0x20] sm:$0xf]
    %v603 = vld [vmem:[%s5 + $0x24] sm:$0xf]
    %v604 = vld [vmem:[%s5 + $0x28] sm:$0xf]
    %v605 = vld [vmem:[%s5 + $0x2c] sm:$0xf]
    %v606 = vld [vmem:[%s5 + $0x30] sm:$0xf]
    %v607 = vld [vmem:[%s5 + $0x34] sm:$0xf]
    %v608 = vld [vmem:[%s5 + $0x38] sm:$0xf]
    %v609 = vld [vmem:[%s5 + $0x3c] sm:$0xf]
    %v626 = vunpack.c.l.b16 %v594
    %v627 = vunpack.c.l.b16 %v595
    %v628 = vunpack.c.l.b16 %v596
    %v629 = vunpack.c.l.b16 %v597
    %v630 = vunpack.c.l.b16 %v598
    %v631 = vunpack.c.l.b16 %v599
    %v632 = vunpack.c.l.b16 %v600
    %v633 = vunpack.c.l.b16 %v601
    %v634 = vunpack.c.l.b16 %v602
    %v635 = vunpack.c.l.b16 %v603
    %v636 = vunpack.c.l.b16 %v604
    %v637 = vunpack.c.l.b16 %v605
    %v638 = vunpack.c.l.b16 %v606
    %v639 = vunpack.c.l.b16 %v607
    %v640 = vunpack.c.l.b16 %v608
    %v641 = vunpack.c.l.b16 %v609
    %v642 = vpack.c.b16 %v627, %v626
    %v643 = vpack.c.b16 %v629, %v628
    %v644 = vpack.c.b16 %v631, %v630
    %v645 = vpack.c.b16 %v633, %v632
    %v646 = vpack.c.b16 %v635, %v634
    %v647 = vpack.c.b16 %v637, %v636
    %v648 = vpack.c.b16 %v639, %v638
    %v649 = vpack.c.b16 %v641, %v640
    %658 = vmatprep.subr.bf16.mxu0 0
    %659 = vmatpush1.bf16.msra.mxu0 %v642
    %660 = vmatprep.subr.bf16.mxu0 0
    %661 = vmatpush1.bf16.msra.mxu0 %v643
    %662 = vmatprep.subr.bf16.mxu0 0
    %663 = vmatpush1.bf16.msra.mxu0 %v644
    %664 = vmatprep.subr.bf16.mxu0 0
    %665 = vmatpush1.bf16.msra.mxu0 %v645
    %666 = vmatprep.subr.bf16.mxu0 0
    %667 = vmatpush1.bf16.msra.mxu0 %v646
    %668 = vmatprep.subr.bf16.mxu0 0
    %669 = vmatpush1.bf16.msra.mxu0 %v647
    %670 = vmatprep.subr.bf16.mxu0 0
    %671 = vmatpush1.bf16.msra.mxu0 %v648
    %672 = vmatprep.subr.bf16.mxu0 0
    %673 = vmatpush1.bf16.msra.mxu0 %v649
    %674 = vmatprep.subr.bf16.mxu0 0
    %675 = vmatpush1.bf16.msra.mxu0 0
    %676 = vmatprep.subr.bf16.mxu0 0
    %677 = vmatpush1.bf16.msra.mxu0 0
    %678 = vmatprep.subr.bf16.mxu0 0
    %679 = vmatpush1.bf16.msra.mxu0 0
    %680 = vmatprep.subr.bf16.mxu0 0
    %681 = vmatpush1.bf16.msra.mxu0 0
    %682 = vmatprep.subr.bf16.mxu0 0
    %683 = vmatpush1.bf16.msra.mxu0 0
    %684 = vmatprep.subr.bf16.mxu0 0
    %685 = vmatpush1.bf16.msra.mxu0 0
    %686 = vmatprep.subr.bf16.mxu0 0
    %687 = vmatpush1.bf16.msra.mxu0 0
    %688 = vmatprep.subr.bf16.mxu0 0
    %689 = vmatpush1.bf16.msra.mxu0 0
    %690 = vmatprep.mubr.bf16.mxu0 0
    %691 = vmatmul.mubr.bf16.gmra.mrb[0].mxu0 %v593
    %v692 = vpop.f32.mrb[0].mxu0
    %v693 = vadd.f32 0.0, %v692
    %v694 = vpop.f32.mrb[0].mxu0
    %v695 = vpop.f32.mrb[0].mxu0
    %v696 = vpop.f32.mrb[0].mxu0
    %697 = vdwg.mxu0
    %v698 = vadd.f32 %v592, %v693
    %v699 = vmul.f32 %v100, %v589
    %v700 = vtanh.pop %v698
    %v701 = vmul.f32 %v87, %v700
    %v702 = vadd.f32 %v699, %v701
    %703 = vst [vmem:[%s591] sm:$0xff] %v702
    %s704 = scalar_lea.vmem [#allocation2], 32
    %v705 = vld [vmem:[%s704] sm:$0xff]
    %v706 = vpack.c.bf16 %v702, %v702
    %v707 = vld [vmem:[%s5] sm:$0xf]
    %v708 = vld [vmem:[%s5 + $0x4] sm:$0xf]
    %v709 = vld [vmem:[%s5 + $0x8] sm:$0xf]
    %v710 = vld [vmem:[%s5 + $0xc] sm:$0xf]
    %v711 = vld [vmem:[%s5 + $0x10] sm:$0xf]
    %v712 = vld [vmem:[%s5 + $0x14] sm:$0xf]
    %v713 = vld [vmem:[%s5 + $0x18] sm:$0xf]
    %v714 = vld [vmem:[%s5 + $0x1c] sm:$0xf]
    %v715 = vld [vmem:[%s5 + $0x20] sm:$0xf]
    %v716 = vld [vmem:[%s5 + $0x24] sm:$0xf]
    %v717 = vld [vmem:[%s5 + $0x28] sm:$0xf]
    %v718 = vld [vmem:[%s5 + $0x2c] sm:$0xf]
    %v719 = vld [vmem:[%s5 + $0x30] sm:$0xf]
    %v720 = vld [vmem:[%s5 + $0x34] sm:$0xf]
    %v721 = vld [vmem:[%s5 + $0x38] sm:$0xf]
    %v722 = vld [vmem:[%s5 + $0x3c] sm:$0xf]
    %v739 = vunpack.c.l.b16 %v707
    %v740 = vunpack.c.l.b16 %v708
    %v741 = vunpack.c.l.b16 %v709
    %v742 = vunpack.c.l.b16 %v710
    %v743 = vunpack.c.l.b16 %v711
    %v744 = vunpack.c.l.b16 %v712
    %v745 = vunpack.c.l.b16 %v713
    %v746 = vunpack.c.l.b16 %v714
    %v747 = vunpack.c.l.b16 %v715
    %v748 = vunpack.c.l.b16 %v716
    %v749 = vunpack.c.l.b16 %v717
    %v750 = vunpack.c.l.b16 %v718
    %v751 = vunpack.c.l.b16 %v719
    %v752 = vunpack.c.l.b16 %v720
    %v753 = vunpack.c.l.b16 %v721
    %v754 = vunpack.c.l.b16 %v722
    %v755 = vpack.c.b16 %v740, %v739
    %v756 = vpack.c.b16 %v742, %v741
    %v757 = vpack.c.b16 %v744, %v743
    %v758 = vpack.c.b16 %v746, %v745
    %v759 = vpack.c.b16 %v748, %v747
    %v760 = vpack.c.b16 %v750, %v749
    %v761 = vpack.c.b16 %v752, %v751
    %v762 = vpack.c.b16 %v754, %v753
    %771 = vmatprep.subr.bf16.mxu0 0
    %772 = vmatpush1.bf16.msra.mxu0 %v755
    %773 = vmatprep.subr.bf16.mxu0 0
    %774 = vmatpush1.bf16.msra.mxu0 %v756
    %775 = vmatprep.subr.bf16.mxu0 0
    %776 = vmatpush1.bf16.msra.mxu0 %v757
    %777 = vmatprep.subr.bf16.mxu0 0
    %778 = vmatpush1.bf16.msra.mxu0 %v758
    %779 = vmatprep.subr.bf16.mxu0 0
    %780 = vmatpush1.bf16.msra.mxu0 %v759
    %781 = vmatprep.subr.bf16.mxu0 0
    %782 = vmatpush1.bf16.msra.mxu0 %v760
    %783 = vmatprep.subr.bf16.mxu0 0
    %784 = vmatpush1.bf16.msra.mxu0 %v761
    %785 = vmatprep.subr.bf16.mxu0 0
    %786 = vmatpush1.bf16.msra.mxu0 %v762
    %787 = vmatprep.subr.bf16.mxu0 0
    %788 = vmatpush1.bf16.msra.mxu0 0
    %789 = vmatprep.subr.bf16.mxu0 0
    %790 = vmatpush1.bf16.msra.mxu0 0
    %791 = vmatprep.subr.bf16.mxu0 0
    %792 = vmatpush1.bf16.msra.mxu0 0
    %793 = vmatprep.subr.bf16.mxu0 0
    %794 = vmatpush1.bf16.msra.mxu0 0
    %795 = vmatprep.subr.bf16.mxu0 0
    %796 = vmatpush1.bf16.msra.mxu0 0
    %797 = vmatprep.subr.bf16.mxu0 0
    %798 = vmatpush1.bf16.msra.mxu0 0
    %799 = vmatprep.subr.bf16.mxu0 0
    %800 = vmatpush1.bf16.msra.mxu0 0
    %801 = vmatprep.subr.bf16.mxu0 0
    %802 = vmatpush1.bf16.msra.mxu0 0
    %803 = vmatprep.mubr.bf16.mxu0 0
    %804 = vmatmul.mubr.bf16.gmra.mrb[0].mxu0 %v706
    %v805 = vpop.f32.mrb[0].mxu0
    %v806 = vadd.f32 0.0, %v805
    %v807 = vpop.f32.mrb[0].mxu0
    %v808 = vpop.f32.mrb[0].mxu0
    %v809 = vpop.f32.mrb[0].mxu0
    %810 = vdwg.mxu0
    %v811 = vadd.f32 %v705, %v806
    %v812 = vmul.f32 %v100, %v702
    %v813 = vtanh.pop %v811
    %v814 = vmul.f32 %v87, %v813
    %v815 = vadd.f32 %v812, %v814
    %816 = vst [vmem:[%s704] sm:$0xff] %v815
    %s817 = scalar_lea.vmem [#allocation2], 40
    %v818 = vld [vmem:[%s817] sm:$0xff]
    %v819 = vpack.c.bf16 %v815, %v815
    %v820 = vld [vmem:[%s5] sm:$0xf]
    %v821 = vld [vmem:[%s5 + $0x4] sm:$0xf]
    %v822 = vld [vmem:[%s5 + $0x8] sm:$0xf]
    %v823 = vld [vmem:[%s5 + $0xc] sm:$0xf]
    %v824 = vld [vmem:[%s5 + $0x10] sm:$0xf]
    %v825 = vld [vmem:[%s5 + $0x14] sm:$0xf]
    %v826 = vld [vmem:[%s5 + $0x18] sm:$0xf]
    %v827 = vld [vmem:[%s5 + $0x1c] sm:$0xf]
    %v828 = vld [vmem:[%s5 + $0x20] sm:$0xf]
    %v829 = vld [vmem:[%s5 + $0x24] sm:$0xf]
    %v830 = vld [vmem:[%s5 + $0x28] sm:$0xf]
    %v831 = vld [vmem:[%s5 + $0x2c] sm:$0xf]
    %v832 = vld [vmem:[%s5 + $0x30] sm:$0xf]
    %v833 = vld [vmem:[%s5 + $0x34] sm:$0xf]
    %v834 = vld [vmem:[%s5 + $0x38] sm:$0xf]
    %v835 = vld [vmem:[%s5 + $0x3c] sm:$0xf]
    %v852 = vunpack.c.l.b16 %v820
    %v853 = vunpack.c.l.b16 %v821
    %v854 = vunpack.c.l.b16 %v822
    %v855 = vunpack.c.l.b16 %v823
    %v856 = vunpack.c.l.b16 %v824
    %v857 = vunpack.c.l.b16 %v825
    %v858 = vunpack.c.l.b16 %v826
    %v859 = vunpack.c.l.b16 %v827
    %v860 = vunpack.c.l.b16 %v828
    %v861 = vunpack.c.l.b16 %v829
    %v862 = vunpack.c.l.b16 %v830
    %v863 = vunpack.c.l.b16 %v831
    %v864 = vunpack.c.l.b16 %v832
    %v865 = vunpack.c.l.b16 %v833
    %v866 = vunpack.c.l.b16 %v834
    %v867 = vunpack.c.l.b16 %v835
    %v868 = vpack.c.b16 %v853, %v852
    %v869 = vpack.c.b16 %v855, %v854
    %v870 = vpack.c.b16 %v857, %v856
    %v871 = vpack.c.b16 %v859, %v858
    %v872 = vpack.c.b16 %v861, %v860
    %v873 = vpack.c.b16 %v863, %v862
    %v874 = vpack.c.b16 %v865, %v864
    %v875 = vpack.c.b16 %v867, %v866
    %884 = vmatprep.subr.bf16.mxu0 0
    %885 = vmatpush1.bf16.msra.mxu0 %v868
    %886 = vmatprep.subr.bf16.mxu0 0
    %887 = vmatpush1.bf16.msra.mxu0 %v869
    %888 = vmatprep.subr.bf16.mxu0 0
    %889 = vmatpush1.bf16.msra.mxu0 %v870
    %890 = vmatprep.subr.bf16.mxu0 0
    %891 = vmatpush1.bf16.msra.mxu0 %v871
    %892 = vmatprep.subr.bf16.mxu0 0
    %893 = vmatpush1.bf16.msra.mxu0 %v872
    %894 = vmatprep.subr.bf16.mxu0 0
    %895 = vmatpush1.bf16.msra.mxu0 %v873
    %896 = vmatprep.subr.bf16.mxu0 0
    %897 = vmatpush1.bf16.msra.mxu0 %v874
    %898 = vmatprep.subr.bf16.mxu0 0
    %899 = vmatpush1.bf16.msra.mxu0 %v875
    %900 = vmatprep.subr.bf16.mxu0 0
    %901 = vmatpush1.bf16.msra.mxu0 0
    %902 = vmatprep.subr.bf16.mxu0 0
    %903 = vmatpush1.bf16.msra.mxu0 0
    %904 = vmatprep.subr.bf16.mxu0 0
    %905 = vmatpush1.bf16.msra.mxu0 0
    %906 = vmatprep.subr.bf16.mxu0 0
    %907 = vmatpush1.bf16.msra.mxu0 0
    %908 = vmatprep.subr.bf16.mxu0 0
    %909 = vmatpush1.bf16.msra.mxu0 0
    %910 = vmatprep.subr.bf16.mxu0 0
    %911 = vmatpush1.bf16.msra.mxu0 0
    %912 = vmatprep.subr.bf16.mxu0 0
    %913 = vmatpush1.bf16.msra.mxu0 0
    %914 = vmatprep.subr.bf16.mxu0 0
    %915 = vmatpush1.bf16.msra.mxu0 0
    %916 = vmatprep.mubr.bf16.mxu0 0
    %917 = vmatmul.mubr.bf16.gmra.mrb[0].mxu0 %v819
    %v918 = vpop.f32.mrb[0].mxu0
    %v919 = vadd.f32 0.0, %v918
    %v920 = vpop.f32.mrb[0].mxu0
    %v921 = vpop.f32.mrb[0].mxu0
    %v922 = vpop.f32.mrb[0].mxu0
    %923 = vdwg.mxu0
    %v924 = vadd.f32 %v818, %v919
    %v925 = vmul.f32 %v100, %v815
    %v926 = vtanh.pop %v924
    %v927 = vmul.f32 %v87, %v926
    %v928 = vadd.f32 %v925, %v927
    %929 = vst [vmem:[%s817] sm:$0xff] %v928
    %s930 = scalar_lea.vmem [#allocation2], 48
    %v931 = vld [vmem:[%s930] sm:$0xff]
    %v932 = vpack.c.bf16 %v928, %v928
    %v933 = vld [vmem:[%s5] sm:$0xf]
    %v934 = vld [vmem:[%s5 + $0x4] sm:$0xf]
    %v935 = vld [vmem:[%s5 + $0x8] sm:$0xf]
    %v936 = vld [vmem:[%s5 + $0xc] sm:$0xf]
    %v937 = vld [vmem:[%s5 + $0x10] sm:$0xf]
    %v938 = vld [vmem:[%s5 + $0x14] sm:$0xf]
    %v939 = vld [vmem:[%s5 + $0x18] sm:$0xf]
    %v940 = vld [vmem:[%s5 + $0x1c] sm:$0xf]
    %v941 = vld [vmem:[%s5 + $0x20] sm:$0xf]
    %v942 = vld [vmem:[%s5 + $0x24] sm:$0xf]
    %v943 = vld [vmem:[%s5 + $0x28] sm:$0xf]
    %v944 = vld [vmem:[%s5 + $0x2c] sm:$0xf]
    %v945 = vld [vmem:[%s5 + $0x30] sm:$0xf]
    %v946 = vld [vmem:[%s5 + $0x34] sm:$0xf]
    %v947 = vld [vmem:[%s5 + $0x38] sm:$0xf]
    %v948 = vld [vmem:[%s5 + $0x3c] sm:$0xf]
    %v965 = vunpack.c.l.b16 %v933
    %v966 = vunpack.c.l.b16 %v934
    %v967 = vunpack.c.l.b16 %v935
    %v968 = vunpack.c.l.b16 %v936
    %v969 = vunpack.c.l.b16 %v937
    %v970 = vunpack.c.l.b16 %v938
    %v971 = vunpack.c.l.b16 %v939
    %v972 = vunpack.c.l.b16 %v940
    %v973 = vunpack.c.l.b16 %v941
    %v974 = vunpack.c.l.b16 %v942
    %v975 = vunpack.c.l.b16 %v943
    %v976 = vunpack.c.l.b16 %v944
    %v977 = vunpack.c.l.b16 %v945
    %v978 = vunpack.c.l.b16 %v946
    %v979 = vunpack.c.l.b16 %v947
    %v980 = vunpack.c.l.b16 %v948
    %v981 = vpack.c.b16 %v966, %v965
    %v982 = vpack.c.b16 %v968, %v967
    %v983 = vpack.c.b16 %v970, %v969
    %v984 = vpack.c.b16 %v972, %v971
    %v985 = vpack.c.b16 %v974, %v973
    %v986 = vpack.c.b16 %v976, %v975
    %v987 = vpack.c.b16 %v978, %v977
    %v988 = vpack.c.b16 %v980, %v979
    %997 = vmatprep.subr.bf16.mxu0 0
    %998 = vmatpush1.bf16.msra.mxu0 %v981
    %999 = vmatprep.subr.bf16.mxu0 0
    %1000 = vmatpush1.bf16.msra.mxu0 %v982
    %1001 = vmatprep.subr.bf16.mxu0 0
    %1002 = vmatpush1.bf16.msra.mxu0 %v983
    %1003 = vmatprep.subr.bf16.mxu0 0
    %1004 = vmatpush1.bf16.msra.mxu0 %v984
    %1005 = vmatprep.subr.bf16.mxu0 0
    %1006 = vmatpush1.bf16.msra.mxu0 %v985
    %1007 = vmatprep.subr.bf16.mxu0 0
    %1008 = vmatpush1.bf16.msra.mxu0 %v986
    %1009 = vmatprep.subr.bf16.mxu0 0
    %1010 = vmatpush1.bf16.msra.mxu0 %v987
    %1011 = vmatprep.subr.bf16.mxu0 0
    %1012 = vmatpush1.bf16.msra.mxu0 %v988
    %1013 = vmatprep.subr.bf16.mxu0 0
    %1014 = vmatpush1.bf16.msra.mxu0 0
    %1015 = vmatprep.subr.bf16.mxu0 0
    %1016 = vmatpush1.bf16.msra.mxu0 0
    %1017 = vmatprep.subr.bf16.mxu0 0
    %1018 = vmatpush1.bf16.msra.mxu0 0
    %1019 = vmatprep.subr.bf16.mxu0 0
    %1020 = vmatpush1.bf16.msra.mxu0 0
    %1021 = vmatprep.subr.bf16.mxu0 0
    %1022 = vmatpush1.bf16.msra.mxu0 0
    %1023 = vmatprep.subr.bf16.mxu0 0
    %1024 = vmatpush1.bf16.msra.mxu0 0
    %1025 = vmatprep.subr.bf16.mxu0 0
    %1026 = vmatpush1.bf16.msra.mxu0 0
    %1027 = vmatprep.subr.bf16.mxu0 0
    %1028 = vmatpush1.bf16.msra.mxu0 0
    %1029 = vmatprep.mubr.bf16.mxu0 0
    %1030 = vmatmul.mubr.bf16.gmra.mrb[0].mxu0 %v932
    %v1031 = vpop.f32.mrb[0].mxu0
    %v1032 = vadd.f32 0.0, %v1031
    %v1033 = vpop.f32.mrb[0].mxu0
    %v1034 = vpop.f32.mrb[0].mxu0
    %v1035 = vpop.f32.mrb[0].mxu0
    %1036 = vdwg.mxu0
    %v1037 = vadd.f32 %v931, %v1032
    %v1038 = vmul.f32 %v100, %v928
    %v1039 = vtanh.pop %v1037
    %v1040 = vmul.f32 %v87, %v1039
    %v1041 = vadd.f32 %v1038, %v1040
    %1042 = vst [vmem:[%s930] sm:$0xff] %v1041
    %s1043 = scalar_lea.vmem [#allocation2], 56
    %v1044 = vld [vmem:[%s1043] sm:$0xff]
    %v1045 = vpack.c.bf16 %v1041, %v1041
    %v1046 = vld [vmem:[%s5] sm:$0xf]
    %v1047 = vld [vmem:[%s5 + $0x4] sm:$0xf]
    %v1048 = vld [vmem:[%s5 + $0x8] sm:$0xf]
    %v1049 = vld [vmem:[%s5 + $0xc] sm:$0xf]
    %v1050 = vld [vmem:[%s5 + $0x10] sm:$0xf]
    %v1051 = vld [vmem:[%s5 + $0x14] sm:$0xf]
    %v1052 = vld [vmem:[%s5 + $0x18] sm:$0xf]
    %v1053 = vld [vmem:[%s5 + $0x1c] sm:$0xf]
    %v1054 = vld [vmem:[%s5 + $0x20] sm:$0xf]
    %v1055 = vld [vmem:[%s5 + $0x24] sm:$0xf]
    %v1056 = vld [vmem:[%s5 + $0x28] sm:$0xf]
    %v1057 = vld [vmem:[%s5 + $0x2c] sm:$0xf]
    %v1058 = vld [vmem:[%s5 + $0x30] sm:$0xf]
    %v1059 = vld [vmem:[%s5 + $0x34] sm:$0xf]
    %v1060 = vld [vmem:[%s5 + $0x38] sm:$0xf]
    %v1061 = vld [vmem:[%s5 + $0x3c] sm:$0xf]
    %v1078 = vunpack.c.l.b16 %v1046
    %v1079 = vunpack.c.l.b16 %v1047
    %v1080 = vunpack.c.l.b16 %v1048
    %v1081 = vunpack.c.l.b16 %v1049
    %v1082 = vunpack.c.l.b16 %v1050
    %v1083 = vunpack.c.l.b16 %v1051
    %v1084 = vunpack.c.l.b16 %v1052
    %v1085 = vunpack.c.l.b16 %v1053
    %v1086 = vunpack.c.l.b16 %v1054
    %v1087 = vunpack.c.l.b16 %v1055
    %v1088 = vunpack.c.l.b16 %v1056
    %v1089 = vunpack.c.l.b16 %v1057
    %v1090 = vunpack.c.l.b16 %v1058
    %v1091 = vunpack.c.l.b16 %v1059
    %v1092 = vunpack.c.l.b16 %v1060
    %v1093 = vunpack.c.l.b16 %v1061
    %v1094 = vpack.c.b16 %v1079, %v1078
    %v1095 = vpack.c.b16 %v1081, %v1080
    %v1096 = vpack.c.b16 %v1083, %v1082
    %v1097 = vpack.c.b16 %v1085, %v1084
    %v1098 = vpack.c.b16 %v1087, %v1086
    %v1099 = vpack.c.b16 %v1089, %v1088
    %v1100 = vpack.c.b16 %v1091, %v1090
    %v1101 = vpack.c.b16 %v1093, %v1092
    %1110 = vmatprep.subr.bf16.mxu0 0
    %1111 = vmatpush1.bf16.msra.mxu0 %v1094
    %1112 = vmatprep.subr.bf16.mxu0 0
    %1113 = vmatpush1.bf16.msra.mxu0 %v1095
    %1114 = vmatprep.subr.bf16.mxu0 0
    %1115 = vmatpush1.bf16.msra.mxu0 %v1096
    %1116 = vmatprep.subr.bf16.mxu0 0
    %1117 = vmatpush1.bf16.msra.mxu0 %v1097
    %1118 = vmatprep.subr.bf16.mxu0 0
    %1119 = vmatpush1.bf16.msra.mxu0 %v1098
    %1120 = vmatprep.subr.bf16.mxu0 0
    %1121 = vmatpush1.bf16.msra.mxu0 %v1099
    %1122 = vmatprep.subr.bf16.mxu0 0
    %1123 = vmatpush1.bf16.msra.mxu0 %v1100
    %1124 = vmatprep.subr.bf16.mxu0 0
    %1125 = vmatpush1.bf16.msra.mxu0 %v1101
    %1126 = vmatprep.subr.bf16.mxu0 0
    %1127 = vmatpush1.bf16.msra.mxu0 0
    %1128 = vmatprep.subr.bf16.mxu0 0
    %1129 = vmatpush1.bf16.msra.mxu0 0
    %1130 = vmatprep.subr.bf16.mxu0 0
    %1131 = vmatpush1.bf16.msra.mxu0 0
    %1132 = vmatprep.subr.bf16.mxu0 0
    %1133 = vmatpush1.bf16.msra.mxu0 0
    %1134 = vmatprep.subr.bf16.mxu0 0
    %1135 = vmatpush1.bf16.msra.mxu0 0
    %1136 = vmatprep.subr.bf16.mxu0 0
    %1137 = vmatpush1.bf16.msra.mxu0 0
    %1138 = vmatprep.subr.bf16.mxu0 0
    %1139 = vmatpush1.bf16.msra.mxu0 0
    %1140 = vmatprep.subr.bf16.mxu0 0
    %1141 = vmatpush1.bf16.msra.mxu0 0
    %1142 = vmatprep.mubr.bf16.mxu0 0
    %1143 = vmatmul.mubr.bf16.gmra.mrb[0].mxu0 %v1045
    %v1144 = vpop.f32.mrb[0].mxu0
    %v1145 = vadd.f32 0.0, %v1144
    %v1146 = vpop.f32.mrb[0].mxu0
    %v1147 = vpop.f32.mrb[0].mxu0
    %v1148 = vpop.f32.mrb[0].mxu0
    %1149 = vdwg.mxu0
    %v1150 = vadd.f32 %v1044, %v1145
    %v1151 = vmul.f32 %v100, %v1041
    %v1152 = vtanh.pop %v1150
    %v1153 = vmul.f32 %v87, %v1152
    %v1154 = vadd.f32 %v1151, %v1153
    %1155 = vst [vmem:[%s1043] sm:$0xff] %v1154
    %v1156 = vld [vmem:[#allocation2] sm:$0xff]
    %v1157 = vld [vmem:[#allocation2 + $0x8] sm:$0xff]
    %v1158 = vld [vmem:[#allocation2 + $0x10] sm:$0xff]
    %v1159 = vld [vmem:[#allocation2 + $0x18] sm:$0xff]
    %v1160 = vld [vmem:[#allocation2 + $0x20] sm:$0xff]
    %v1161 = vld [vmem:[#allocation2 + $0x28] sm:$0xff]
    %v1162 = vld [vmem:[#allocation2 + $0x30] sm:$0xff]
    %v1163 = vld [vmem:[#allocation2 + $0x38] sm:$0xff]
    %v1164 = vpack.c.bf16 %v1157, %v1156
    %v1165 = vpack.c.bf16 %v1159, %v1158
    %v1166 = vpack.c.bf16 %v1161, %v1160
    %v1167 = vpack.c.bf16 %v1163, %v1162
    %v1168 = vld [vmem:[%s11] sm:$0xf]
    %v1169 = vld [vmem:[%s11 + $0x4] sm:$0xf]
    %v1170 = vld [vmem:[%s11 + $0x8] sm:$0xf]
    %v1171 = vld [vmem:[%s11 + $0xc] sm:$0xf]
    %v1172 = vld [vmem:[%s11 + $0x10] sm:$0xf]
    %v1173 = vld [vmem:[%s11 + $0x14] sm:$0xf]
    %v1174 = vld [vmem:[%s11 + $0x18] sm:$0xf]
    %v1175 = vld [vmem:[%s11 + $0x1c] sm:$0xf]
    %v1176 = vld [vmem:[%s11 + $0x20] sm:$0xf]
    %v1177 = vld [vmem:[%s11 + $0x24] sm:$0xf]
    %v1178 = vld [vmem:[%s11 + $0x28] sm:$0xf]
    %v1179 = vld [vmem:[%s11 + $0x2c] sm:$0xf]
    %v1180 = vld [vmem:[%s11 + $0x30] sm:$0xf]
    %v1181 = vld [vmem:[%s11 + $0x34] sm:$0xf]
    %v1182 = vld [vmem:[%s11 + $0x38] sm:$0xf]
    %v1183 = vld [vmem:[%s11 + $0x3c] sm:$0xf]
    %v1184 = vld [vmem:[%s12] sm:$0x1]
    %v1186 = vlaneseq
    %v1187 = vshrl.u32 %v1186, 7
    %v1188 = vsub.s32 0, %v1187
    %v1189 = vrot.slane %v1184, %v1188
    %v1207 = vunpack.c.l.b16 %v1168
    %v1208 = vunpack.c.l.b16 %v1169
    %v1209 = vunpack.c.l.b16 %v1170
    %v1210 = vunpack.c.l.b16 %v1171
    %v1211 = vunpack.c.l.b16 %v1172
    %v1212 = vunpack.c.l.b16 %v1173
    %v1213 = vunpack.c.l.b16 %v1174
    %v1214 = vunpack.c.l.b16 %v1175
    %v1215 = vunpack.c.l.b16 %v1176
    %v1216 = vunpack.c.l.b16 %v1177
    %v1217 = vunpack.c.l.b16 %v1178
    %v1218 = vunpack.c.l.b16 %v1179
    %v1219 = vunpack.c.l.b16 %v1180
    %v1220 = vunpack.c.l.b16 %v1181
    %v1221 = vunpack.c.l.b16 %v1182
    %v1222 = vunpack.c.l.b16 %v1183
    %v1223 = vpack.c.b16 %v1208, %v1207
    %v1224 = vpack.c.b16 %v1210, %v1209
    %v1225 = vpack.c.b16 %v1212, %v1211
    %v1226 = vpack.c.b16 %v1214, %v1213
    %v1227 = vpack.c.b16 %v1216, %v1215
    %v1228 = vpack.c.b16 %v1218, %v1217
    %v1229 = vpack.c.b16 %v1220, %v1219
    %v1230 = vpack.c.b16 %v1222, %v1221
    %1239 = vmatprep.subr.bf16.mxu0 0
    %1240 = vmatpush1.bf16.msra.mxu0 %v1223
    %1241 = vmatprep.subr.bf16.mxu0 0
    %1242 = vmatpush1.bf16.msra.mxu0 %v1224
    %1243 = vmatprep.subr.bf16.mxu0 0
    %1244 = vmatpush1.bf16.msra.mxu0 %v1225
    %1245 = vmatprep.subr.bf16.mxu0 0
    %1246 = vmatpush1.bf16.msra.mxu0 %v1226
    %1247 = vmatprep.subr.bf16.mxu0 0
    %1248 = vmatpush1.bf16.msra.mxu0 %v1227
    %1249 = vmatprep.subr.bf16.mxu0 0
    %1250 = vmatpush1.bf16.msra.mxu0 %v1228
    %1251 = vmatprep.subr.bf16.mxu0 0
    %1252 = vmatpush1.bf16.msra.mxu0 %v1229
    %1253 = vmatprep.subr.bf16.mxu0 0
    %1254 = vmatpush1.bf16.msra.mxu0 %v1230
    %1255 = vmatprep.subr.bf16.mxu0 0
    %1256 = vmatpush1.bf16.msra.mxu0 0
    %1257 = vmatprep.subr.bf16.mxu0 0
    %1258 = vmatpush1.bf16.msra.mxu0 0
    %1259 = vmatprep.subr.bf16.mxu0 0
    %1260 = vmatpush1.bf16.msra.mxu0 0
    %1261 = vmatprep.subr.bf16.mxu0 0
    %1262 = vmatpush1.bf16.msra.mxu0 0
    %1263 = vmatprep.subr.bf16.mxu0 0
    %1264 = vmatpush1.bf16.msra.mxu0 0
    %1265 = vmatprep.subr.bf16.mxu0 0
    %1266 = vmatpush1.bf16.msra.mxu0 0
    %1267 = vmatprep.subr.bf16.mxu0 0
    %1268 = vmatpush1.bf16.msra.mxu0 0
    %1269 = vmatprep.subr.bf16.mxu0 0
    %1270 = vmatpush1.bf16.msra.mxu0 0
    %1271 = vmatprep.mubr.bf16.mxu0 0
    %1272 = vmatmul.mubr.bf16.gmra.mrb[0].mxu0 %v1164
    %v1273 = vpop.f32.mrb[0].mxu0
    %v1274 = vadd.f32 %v1189, %v1273
    %v1275 = vpop.f32.mrb[0].mxu0
    %v1276 = vpop.f32.mrb[0].mxu0
    %v1277 = vadd.f32 %v1189, %v1276
    %v1278 = vpop.f32.mrb[0].mxu0
    %1279 = vmatprep.mubr.bf16.mxu0 0
    %1280 = vmatmul.mubr.bf16.gmra.mrb[0].mxu0 %v1165
    %v1281 = vpop.f32.mrb[0].mxu0
    %v1282 = vadd.f32 %v1189, %v1281
    %v1283 = vpop.f32.mrb[0].mxu0
    %v1284 = vpop.f32.mrb[0].mxu0
    %v1285 = vadd.f32 %v1189, %v1284
    %v1286 = vpop.f32.mrb[0].mxu0
    %1287 = vmatprep.mubr.bf16.mxu0 0
    %1288 = vmatmul.mubr.bf16.gmra.mrb[0].mxu0 %v1166
    %v1289 = vpop.f32.mrb[0].mxu0
    %v1290 = vadd.f32 %v1189, %v1289
    %v1291 = vpop.f32.mrb[0].mxu0
    %v1292 = vpop.f32.mrb[0].mxu0
    %v1293 = vadd.f32 %v1189, %v1292
    %v1294 = vpop.f32.mrb[0].mxu0
    %1295 = vmatprep.mubr.bf16.mxu0 0
    %1296 = vmatmul.mubr.bf16.gmra.mrb[0].mxu0 %v1167
    %v1297 = vpop.f32.mrb[0].mxu0
    %v1298 = vadd.f32 %v1189, %v1297
    %v1299 = vpop.f32.mrb[0].mxu0
    %v1300 = vpop.f32.mrb[0].mxu0
    %v1301 = vadd.f32 %v1189, %v1300
    %v1302 = vpop.f32.mrb[0].mxu0
    %1303 = vdwg.mxu0
    %v1304 = vadd.f32 %v1274, 1.0
    %v1305 = vadd.f32 %v1277, 1.0
    %v1306 = vadd.f32 %v1282, 1.0
    %v1307 = vadd.f32 %v1285, 1.0
    %v1308 = vadd.f32 %v1290, 1.0
    %v1309 = vadd.f32 %v1293, 1.0
    %v1310 = vadd.f32 %v1298, 1.0
    %v1311 = vadd.f32 %v1301, 1.0
    %v1312 = vmul.f32 %v1274, %v1274
    %v1313 = vmul.f32 %v1277, %v1277
    %v1314 = vmul.f32 %v1282, %v1282
    %v1315 = vmul.f32 %v1285, %v1285
    %v1316 = vmul.f32 %v1290, %v1290
    %v1317 = vmul.f32 %v1293, %v1293
    %v1318 = vmul.f32 %v1298, %v1298
    %v1319 = vmul.f32 %v1301, %v1301
    %1328 = vrot.lane.b32.xlu0 %v1312, 16
    %v1329 = vpop.permute.xlu0 %1328
    %1330 = vrot.lane.b32.xlu0 %v1313, 16
    %v1331 = vpop.permute.xlu0 %1330
    %1332 = vrot.lane.b32.xlu0 %v1314, 16
    %v1333 = vpop.permute.xlu0 %1332
    %1334 = vrot.lane.b32.xlu0 %v1315, 16
    %v1335 = vpop.permute.xlu0 %1334
    %1336 = vrot.lane.b32.xlu0 %v1316, 16
    %v1337 = vpop.permute.xlu0 %1336
    %1338 = vrot.lane.b32.xlu0 %v1317, 16
    %v1339 = vpop.permute.xlu0 %1338
    %1340 = vrot.lane.b32.xlu0 %v1318, 16
    %v1341 = vpop.permute.xlu0 %1340
    %1342 = vrot.lane.b32.xlu0 %v1319, 16
    %v1343 = vpop.permute.xlu0 %1342
    %v1352 = vsub.f32 %v1304, %v1329
    %v1353 = vsub.f32 %v1305, %v1331
    %v1354 = vsub.f32 %v1306, %v1333
    %v1355 = vsub.f32 %v1307, %v1335
    %v1356 = vsub.f32 %v1308, %v1337
    %v1357 = vsub.f32 %v1309, %v1339
    %v1358 = vsub.f32 %v1310, %v1341
    %v1359 = vsub.f32 %v1311, %v1343
    %v1360 = vmul.f32 %v1274, 1.442695
    %v1361 = vpow.pop %v1360
    %v1362 = vmul.f32 %v1277, 1.442695
    %v1363 = vpow.pop %v1362
    %v1364 = vmul.f32 %v1282, 1.442695
    %v1365 = vpow.pop %v1364
    %v1366 = vmul.f32 %v1285, 1.442695
    %v1367 = vpow.pop %v1366
    %v1368 = vmul.f32 %v1290, 1.442695
    %v1369 = vpow.pop %v1368
    %v1370 = vmul.f32 %v1293, 1.442695
    %v1371 = vpow.pop %v1370
    %v1372 = vmul.f32 %v1298, 1.442695
    %v1373 = vpow.pop %v1372
    %v1374 = vmul.f32 %v1301, 1.442695
    %v1375 = vpow.pop %v1374
    %v1376 = vsub.f32 %v1352, %v1361
    %v1377 = vsub.f32 %v1353, %v1363
    %v1378 = vsub.f32 %v1354, %v1365
    %v1379 = vsub.f32 %v1355, %v1367
    %v1380 = vsub.f32 %v1356, %v1369
    %v1381 = vsub.f32 %v1357, %v1371
    %v1382 = vsub.f32 %v1358, %v1373
    %v1383 = vsub.f32 %v1359, %v1375
    %v1384 = vlaneseq
    %v1385 = vshrl.u32 %v1384, 7
    %v1386 = vadd.s32 %v1385, 8
    %v1387 = vadd.s32 %v1385, 16
    %v1388 = vadd.s32 %v1385, 24
    %v1389 = vadd.s32 %v1385, 32
    %v1390 = vadd.s32 %v1385, 40
    %v1391 = vadd.s32 %v1385, 48
    %v1392 = vadd.s32 %v1385, 56
    %vm1393 = vcmp.lt.s32.totalorder %v1385, 0
    %v1394 = vsub.s32 0, %v1385
    %v1395 = vsel %vm1393, %v1394, %v1385
    %v1396 = vshrl.u32 %v1395, 3
    %v1397 = vand.u32 %v1395, 7
    %v1398 = vsub.s32 0, %v1397
    %v1399 = vsel %vm1393, %v1398, %v1397
    %vm1400 = vcmp.lt.s32.totalorder %v1386, 0
    %v1401 = vsub.s32 0, %v1386
    %v1402 = vsel %vm1400, %v1401, %v1386
    %v1403 = vshrl.u32 %v1402, 3
    %v1404 = vand.u32 %v1402, 7
    %v1405 = vsub.s32 0, %v1404
    %v1406 = vsel %vm1400, %v1405, %v1404
    %vm1407 = vcmp.lt.s32.totalorder %v1387, 0
    %v1408 = vsub.s32 0, %v1387
    %v1409 = vsel %vm1407, %v1408, %v1387
    %v1410 = vshrl.u32 %v1409, 3
    %v1411 = vand.u32 %v1409, 7
    %v1412 = vsub.s32 0, %v1411
    %v1413 = vsel %vm1407, %v1412, %v1411
    %vm1414 = vcmp.lt.s32.totalorder %v1388, 0
    %v1415 = vsub.s32 0, %v1388
    %v1416 = vsel %vm1414, %v1415, %v1388
    %v1417 = vshrl.u32 %v1416, 3
    %v1418 = vand.u32 %v1416, 7
    %v1419 = vsub.s32 0, %v1418
    %v1420 = vsel %vm1414, %v1419, %v1418
    %vm1421 = vcmp.lt.s32.totalorder %v1389, 0
    %v1422 = vsub.s32 0, %v1389
    %v1423 = vsel %vm1421, %v1422, %v1389
    %v1424 = vshrl.u32 %v1423, 3
    %v1425 = vand.u32 %v1423, 7
    %v1426 = vsub.s32 0, %v1425
    %v1427 = vsel %vm1421, %v1426, %v1425
    %vm1428 = vcmp.lt.s32.totalorder %v1390, 0
    %v1429 = vsub.s32 0, %v1390
    %v1430 = vsel %vm1428, %v1429, %v1390
    %v1431 = vshrl.u32 %v1430, 3
    %v1432 = vand.u32 %v1430, 7
    %v1433 = vsub.s32 0, %v1432
    %v1434 = vsel %vm1428, %v1433, %v1432
    %vm1435 = vcmp.lt.s32.totalorder %v1391, 0
    %v1436 = vsub.s32 0, %v1391
    %v1437 = vsel %vm1435, %v1436, %v1391
    %v1438 = vshrl.u32 %v1437, 3
    %v1439 = vand.u32 %v1437, 7
    %v1440 = vsub.s32 0, %v1439
    %v1441 = vsel %vm1435, %v1440, %v1439
    %vm1442 = vcmp.lt.s32.totalorder %v1392, 0
    %v1443 = vsub.s32 0, %v1392
    %v1444 = vsel %vm1442, %v1443, %v1392
    %v1445 = vshrl.u32 %v1444, 3
    %v1446 = vand.u32 %v1444, 7
    %v1447 = vsub.s32 0, %v1446
    %v1448 = vsel %vm1442, %v1447, %v1446
    %vm1449 = vcmp.ne.s32.totalorder %v1399, 0
    %vm1450 = vcmp.ne.s32.totalorder %v1406, 0
    %vm1451 = vcmp.ne.s32.totalorder %v1413, 0
    %vm1452 = vcmp.ne.s32.totalorder %v1420, 0
    %vm1453 = vcmp.ne.s32.totalorder %v1427, 0
    %vm1454 = vcmp.ne.s32.totalorder %v1434, 0
    %vm1455 = vcmp.ne.s32.totalorder %v1441, 0
    %vm1456 = vcmp.ne.s32.totalorder %v1448, 0
    %vm1457 = vcmp.lt.s32.totalorder %v1399, 0
    %vm1458 = vcmp.lt.s32.totalorder %v1406, 0
    %vm1459 = vcmp.lt.s32.totalorder %v1413, 0
    %vm1460 = vcmp.lt.s32.totalorder %v1420, 0
    %vm1461 = vcmp.lt.s32.totalorder %v1427, 0
    %vm1462 = vcmp.lt.s32.totalorder %v1434, 0
    %vm1463 = vcmp.lt.s32.totalorder %v1441, 0
    %vm1464 = vcmp.lt.s32.totalorder %v1448, 0
    %vm1465 = vmand %vm1457, %vm1449
    %vm1466 = vmand %vm1458, %vm1450
    %vm1467 = vmand %vm1459, %vm1451
    %vm1468 = vmand %vm1460, %vm1452
    %vm1469 = vmand %vm1461, %vm1453
    %vm1470 = vmand %vm1462, %vm1454
    %vm1471 = vmand %vm1463, %vm1455
    %vm1472 = vmand %vm1464, %vm1456
    %v1473 = vadd.s32 %v1399, 8
    %v1474 = vadd.s32 %v1406, 8
    %v1475 = vadd.s32 %v1413, 8
    %v1476 = vadd.s32 %v1420, 8
    %v1477 = vadd.s32 %v1427, 8
    %v1478 = vadd.s32 %v1434, 8
    %v1479 = vadd.s32 %v1441, 8
    %v1480 = vadd.s32 %v1448, 8
    %v1481 = vsel %vm1465, %v1473, %v1399
    %v1482 = vsel %vm1466, %v1474, %v1406
    %v1483 = vsel %vm1467, %v1475, %v1413
    %v1484 = vsel %vm1468, %v1476, %v1420
    %v1485 = vsel %vm1469, %v1477, %v1427
    %v1486 = vsel %vm1470, %v1478, %v1434
    %v1487 = vsel %vm1471, %v1479, %v1441
    %v1488 = vsel %vm1472, %v1480, %v1448
    %vm1489 = vcmp.lt.s32.totalorder %v1481, 2
    %vm1490 = vcmp.lt.s32.totalorder %v1482, 2
    %vm1491 = vcmp.lt.s32.totalorder %v1483, 2
    %vm1492 = vcmp.lt.s32.totalorder %v1484, 2
    %vm1493 = vcmp.lt.s32.totalorder %v1485, 2
    %vm1494 = vcmp.lt.s32.totalorder %v1486, 2
    %vm1495 = vcmp.lt.s32.totalorder %v1487, 2
    %vm1496 = vcmp.lt.s32.totalorder %v1488, 2
    %v1497 = vsel %vm1489, 1, 0
    %v1498 = vsel %vm1490, 1, 0
    %v1499 = vsel %vm1491, 1, 0
    %v1500 = vsel %vm1492, 1, 0
    %v1501 = vsel %vm1493, 1, 0
    %v1502 = vsel %vm1494, 1, 0
    %v1503 = vsel %vm1495, 1, 0
    %v1504 = vsel %vm1496, 1, 0
    %v1505 = vcvt.s32.f32 %v1497
    %v1506 = vcvt.s32.f32 %v1498
    %v1507 = vcvt.s32.f32 %v1499
    %v1508 = vcvt.s32.f32 %v1500
    %v1509 = vcvt.s32.f32 %v1501
    %v1510 = vcvt.s32.f32 %v1502
    %v1511 = vcvt.s32.f32 %v1503
    %v1512 = vcvt.s32.f32 %v1504
    %v1513 = vmul.f32 %v1376, %v1505
    %v1514 = vmul.f32 %v1377, %v1506
    %v1515 = vmul.f32 %v1378, %v1507
    %v1516 = vmul.f32 %v1379, %v1508
    %v1517 = vmul.f32 %v1380, %v1509
    %v1518 = vmul.f32 %v1381, %v1510
    %v1519 = vmul.f32 %v1382, %v1511
    %v1520 = vmul.f32 %v1383, %v1512
    %1529 = vrot.lane.b32.xlu0 %v1513, 112
    %v1530 = vpop.permute.xlu0 %1529
    %1531 = vrot.lane.b32.xlu0 %v1514, 112
    %v1532 = vpop.permute.xlu0 %1531
    %1533 = vrot.lane.b32.xlu0 %v1515, 112
    %v1534 = vpop.permute.xlu0 %1533
    %1535 = vrot.lane.b32.xlu0 %v1516, 112
    %v1536 = vpop.permute.xlu0 %1535
    %1537 = vrot.lane.b32.xlu0 %v1517, 112
    %v1538 = vpop.permute.xlu0 %1537
    %1539 = vrot.lane.b32.xlu0 %v1518, 112
    %v1540 = vpop.permute.xlu0 %1539
    %1541 = vrot.lane.b32.xlu0 %v1519, 112
    %v1542 = vpop.permute.xlu0 %1541
    %1543 = vrot.lane.b32.xlu0 %v1520, 112
    %v1544 = vpop.permute.xlu0 %1543
    %vm1553 = vcmask 130048
    %v1554 = vsel %vm1553, %v1530, 0.0
    %v1555 = vsel %vm1553, %v1532, 0.0
    %v1556 = vadd.f32 %v1554, %v1555
    %v1557 = vsel %vm1553, %v1534, 0.0
    %v1558 = vadd.f32 %v1556, %v1557
    %v1559 = vsel %vm1553, %v1536, 0.0
    %v1560 = vadd.f32 %v1558, %v1559
    %v1561 = vsel %vm1553, %v1538, 0.0
    %v1562 = vadd.f32 %v1560, %v1561
    %v1563 = vsel %vm1553, %v1540, 0.0
    %v1564 = vadd.f32 %v1562, %v1563
    %v1565 = vsel %vm1553, %v1542, 0.0
    %v1566 = vadd.f32 %v1564, %v1565
    %v1567 = vsel %vm1553, %v1544, 0.0
    %v1568 = vadd.f32 %v1566, %v1567
    %1569 = vadd.xlane.f32.xlu0 %v1568
    %v1570 = vpop.xlane.xlu0 %1569
    %v1571 = vrot.slane %v1570, 4
    %v1572 = vadd.f32 %v1570, %v1571
    %v1573 = vrot.slane %v1572, 2
    %v1574 = vadd.f32 %v1572, %v1573
    %v1575 = vrot.slane %v1574, 1
    %v1576 = vadd.f32 %v1574, %v1575
    %s1577 = vtos %v1576
    %v1578 = vrcp.pop 16.0
    %s1579 = vtos %v1578
    %s1580 = smul.f32 %s1577, %s1579
    %s1581 = smul.f32 %s1580, -0.5
    %v1582 = vstv %s1581
    %v1583 = vadd.f32 %v1582, 0.0
    %vm1584 = vcmask 0
    %1585 = vst.msk [vmem:[#allocation4] sm:$0x1] %vm1584, %v1583
    %v1586 = vld [vmem:[%s7] sm:$0xf]
    %v1587 = vld [vmem:[%s7 + $0x4] sm:$0xf]
    %v1588 = vld [vmem:[%s7 + $0x8] sm:$0xf]
    %v1589 = vld [vmem:[%s7 + $0xc] sm:$0xf]
    %v1590 = vld [vmem:[%s7 + $0x10] sm:$0xf]
    %v1591 = vld [vmem:[%s7 + $0x14] sm:$0xf]
    %v1592 = vld [vmem:[%s7 + $0x18] sm:$0xf]
    %v1593 = vld [vmem:[%s7 + $0x1c] sm:$0xf]
    %v1594 = vld [vmem:[%s7 + $0x20] sm:$0xf]
    %v1595 = vld [vmem:[%s7 + $0x24] sm:$0xf]
    %v1596 = vld [vmem:[%s7 + $0x28] sm:$0xf]
    %v1597 = vld [vmem:[%s7 + $0x2c] sm:$0xf]
    %v1598 = vld [vmem:[%s7 + $0x30] sm:$0xf]
    %v1599 = vld [vmem:[%s7 + $0x34] sm:$0xf]
    %v1600 = vld [vmem:[%s7 + $0x38] sm:$0xf]
    %v1601 = vld [vmem:[%s7 + $0x3c] sm:$0xf]
    %v1602 = vld [vmem:[%s8] sm:$0x1]
    %v1604 = vlaneseq
    %v1605 = vshrl.u32 %v1604, 7
    %v1606 = vsub.s32 0, %v1605
    %v1607 = vrot.slane %v1602, %v1606
    %v1625 = vunpack.c.l.b16 %v1586
    %v1626 = vunpack.c.l.b16 %v1587
    %v1627 = vunpack.c.l.b16 %v1588
    %v1628 = vunpack.c.l.b16 %v1589
    %v1629 = vunpack.c.l.b16 %v1590
    %v1630 = vunpack.c.l.b16 %v1591
    %v1631 = vunpack.c.l.b16 %v1592
    %v1632 = vunpack.c.l.b16 %v1593
    %v1633 = vunpack.c.l.b16 %v1594
    %v1634 = vunpack.c.l.b16 %v1595
    %v1635 = vunpack.c.l.b16 %v1596
    %v1636 = vunpack.c.l.b16 %v1597
    %v1637 = vunpack.c.l.b16 %v1598
    %v1638 = vunpack.c.l.b16 %v1599
    %v1639 = vunpack.c.l.b16 %v1600
    %v1640 = vunpack.c.l.b16 %v1601
    %v1641 = vpack.c.b16 %v1626, %v1625
    %v1642 = vpack.c.b16 %v1628, %v1627
    %v1643 = vpack.c.b16 %v1630, %v1629
    %v1644 = vpack.c.b16 %v1632, %v1631
    %v1645 = vpack.c.b16 %v1634, %v1633
    %v1646 = vpack.c.b16 %v1636, %v1635
    %v1647 = vpack.c.b16 %v1638, %v1637
    %v1648 = vpack.c.b16 %v1640, %v1639
    %1657 = vmatprep.subr.bf16.mxu0 0
    %1658 = vmatpush1.bf16.msra.mxu0 %v1641
    %1659 = vmatprep.subr.bf16.mxu0 0
    %1660 = vmatpush1.bf16.msra.mxu0 %v1642
    %1661 = vmatprep.subr.bf16.mxu0 0
    %1662 = vmatpush1.bf16.msra.mxu0 %v1643
    %1663 = vmatprep.subr.bf16.mxu0 0
    %1664 = vmatpush1.bf16.msra.mxu0 %v1644
    %1665 = vmatprep.subr.bf16.mxu0 0
    %1666 = vmatpush1.bf16.msra.mxu0 %v1645
    %1667 = vmatprep.subr.bf16.mxu0 0
    %1668 = vmatpush1.bf16.msra.mxu0 %v1646
    %1669 = vmatprep.subr.bf16.mxu0 0
    %1670 = vmatpush1.bf16.msra.mxu0 %v1647
    %1671 = vmatprep.subr.bf16.mxu0 0
    %1672 = vmatpush1.bf16.msra.mxu0 %v1648
    %1673 = vmatprep.subr.bf16.mxu0 0
    %1674 = vmatpush1.bf16.msra.mxu0 0
    %1675 = vmatprep.subr.bf16.mxu0 0
    %1676 = vmatpush1.bf16.msra.mxu0 0
    %1677 = vmatprep.subr.bf16.mxu0 0
    %1678 = vmatpush1.bf16.msra.mxu0 0
    %1679 = vmatprep.subr.bf16.mxu0 0
    %1680 = vmatpush1.bf16.msra.mxu0 0
    %1681 = vmatprep.subr.bf16.mxu0 0
    %1682 = vmatpush1.bf16.msra.mxu0 0
    %1683 = vmatprep.subr.bf16.mxu0 0
    %1684 = vmatpush1.bf16.msra.mxu0 0
    %1685 = vmatprep.subr.bf16.mxu0 0
    %1686 = vmatpush1.bf16.msra.mxu0 0
    %1687 = vmatprep.subr.bf16.mxu0 0
    %1688 = vmatpush1.bf16.msra.mxu0 0
    %1689 = vmatprep.mubr.bf16.mxu0 0
    %1690 = vmatmul.mubr.bf16.gmra.mrb[0].mxu0 %v1164
    %v1691 = vpop.f32.mrb[0].mxu0
    %v1692 = vadd.f32 %v1607, %v1691
    %v1693 = vpop.f32.mrb[0].mxu0
    %v1694 = vpop.f32.mrb[0].mxu0
    %v1695 = vadd.f32 %v1607, %v1694
    %v1696 = vpop.f32.mrb[0].mxu0
    %1697 = vmatprep.mubr.bf16.mxu0 0
    %1698 = vmatmul.mubr.bf16.gmra.mrb[0].mxu0 %v1165
    %v1699 = vpop.f32.mrb[0].mxu0
    %v1700 = vadd.f32 %v1607, %v1699
    %v1701 = vpop.f32.mrb[0].mxu0
    %v1702 = vpop.f32.mrb[0].mxu0
    %v1703 = vadd.f32 %v1607, %v1702
    %v1704 = vpop.f32.mrb[0].mxu0
    %1705 = vmatprep.mubr.bf16.mxu0 0
    %1706 = vmatmul.mubr.bf16.gmra.mrb[0].mxu0 %v1166
    %v1707 = vpop.f32.mrb[0].mxu0
    %v1708 = vadd.f32 %v1607, %v1707
    %v1709 = vpop.f32.mrb[0].mxu0
    %v1710 = vpop.f32.mrb[0].mxu0
    %v1711 = vadd.f32 %v1607, %v1710
    %v1712 = vpop.f32.mrb[0].mxu0
    %1713 = vmatprep.mubr.bf16.mxu0 0
    %1714 = vmatmul.mubr.bf16.gmra.mrb[0].mxu0 %v1167
    %v1715 = vpop.f32.mrb[0].mxu0
    %v1716 = vadd.f32 %v1607, %v1715
    %v1717 = vpop.f32.mrb[0].mxu0
    %v1718 = vpop.f32.mrb[0].mxu0
    %v1719 = vadd.f32 %v1607, %v1718
    %v1720 = vpop.f32.mrb[0].mxu0
    %1721 = vdwg.mxu0
    %v1722 = vld [vmem:[%s2] sm:$0xff]
    %v1723 = vld [vmem:[%s2 + $0x8] sm:$0xff]
    %v1724 = vld [vmem:[%s2 + $0x10] sm:$0xff]
    %v1725 = vld [vmem:[%s2 + $0x18] sm:$0xff]
    %v1726 = vld [vmem:[%s2 + $0x20] sm:$0xff]
    %v1727 = vld [vmem:[%s2 + $0x28] sm:$0xff]
    %v1728 = vld [vmem:[%s2 + $0x30] sm:$0xff]
    %v1729 = vld [vmem:[%s2 + $0x38] sm:$0xff]
    %v1730 = vmul.f32 %v1722, 0.01
    %v1731 = vmul.f32 %v1723, 0.01
    %v1732 = vmul.f32 %v1724, 0.01
    %v1733 = vmul.f32 %v1725, 0.01
    %v1734 = vmul.f32 %v1726, 0.01
    %v1735 = vmul.f32 %v1727, 0.01
    %v1736 = vmul.f32 %v1728, 0.01
    %v1737 = vmul.f32 %v1729, 0.01
    %v1738 = vadd.f32 %v1692, %v1730
    %v1739 = vadd.f32 %v1695, %v1731
    %v1740 = vadd.f32 %v1700, %v1732
    %v1741 = vadd.f32 %v1703, %v1733
    %v1742 = vadd.f32 %v1708, %v1734
    %v1743 = vadd.f32 %v1711, %v1735
    %v1744 = vadd.f32 %v1716, %v1736
    %v1745 = vadd.f32 %v1719, %v1737
    %1746 = vst [vmem:[#allocation3] sm:$0xff] %v1738
    %1747 = vst [vmem:[#allocation3 + $0x8] sm:$0xff] %v1739
    %1748 = vst [vmem:[#allocation3 + $0x10] sm:$0xff] %v1740
    %1749 = vst [vmem:[#allocation3 + $0x18] sm:$0xff] %v1741
    %1750 = vst [vmem:[#allocation3 + $0x20] sm:$0xff] %v1742
    %1751 = vst [vmem:[#allocation3 + $0x28] sm:$0xff] %v1743
    %1752 = vst [vmem:[#allocation3 + $0x30] sm:$0xff] %v1744
    %1753 = vst [vmem:[#allocation3 + $0x38] sm:$0xff] %v1745
    %v1754 = vld [vmem:[#allocation3] sm:$0xff]
    %v1755 = vpack.c.bf16 %v1154, %v1154
    %v1756 = vld [vmem:[%s9] sm:$0xf]
    %v1757 = vld [vmem:[%s9 + $0x4] sm:$0xf]
    %v1758 = vld [vmem:[%s9 + $0x8] sm:$0xf]
    %v1759 = vld [vmem:[%s9 + $0xc] sm:$0xf]
    %v1760 = vld [vmem:[%s9 + $0x10] sm:$0xf]
    %v1761 = vld [vmem:[%s9 + $0x14] sm:$0xf]
    %v1762 = vld [vmem:[%s9 + $0x18] sm:$0xf]
    %v1763 = vld [vmem:[%s9 + $0x1c] sm:$0xf]
    %v1764 = vld [vmem:[%s9 + $0x20] sm:$0xf]
    %v1765 = vld [vmem:[%s9 + $0x24] sm:$0xf]
    %v1766 = vld [vmem:[%s9 + $0x28] sm:$0xf]
    %v1767 = vld [vmem:[%s9 + $0x2c] sm:$0xf]
    %v1768 = vld [vmem:[%s9 + $0x30] sm:$0xf]
    %v1769 = vld [vmem:[%s9 + $0x34] sm:$0xf]
    %v1770 = vld [vmem:[%s9 + $0x38] sm:$0xf]
    %v1771 = vld [vmem:[%s9 + $0x3c] sm:$0xf]
    %v1788 = vunpack.c.l.b16 %v1756
    %v1789 = vunpack.c.l.b16 %v1757
    %v1790 = vunpack.c.l.b16 %v1758
    %v1791 = vunpack.c.l.b16 %v1759
    %v1792 = vunpack.c.l.b16 %v1760
    %v1793 = vunpack.c.l.b16 %v1761
    %v1794 = vunpack.c.l.b16 %v1762
    %v1795 = vunpack.c.l.b16 %v1763
    %v1796 = vunpack.c.l.b16 %v1764
    %v1797 = vunpack.c.l.b16 %v1765
    %v1798 = vunpack.c.l.b16 %v1766
    %v1799 = vunpack.c.l.b16 %v1767
    %v1800 = vunpack.c.l.b16 %v1768
    %v1801 = vunpack.c.l.b16 %v1769
    %v1802 = vunpack.c.l.b16 %v1770
    %v1803 = vunpack.c.l.b16 %v1771
    %v1804 = vpack.c.b16 %v1789, %v1788
    %v1805 = vpack.c.b16 %v1791, %v1790
    %v1806 = vpack.c.b16 %v1793, %v1792
    %v1807 = vpack.c.b16 %v1795, %v1794
    %v1808 = vpack.c.b16 %v1797, %v1796
    %v1809 = vpack.c.b16 %v1799, %v1798
    %v1810 = vpack.c.b16 %v1801, %v1800
    %v1811 = vpack.c.b16 %v1803, %v1802
    %1820 = vmatprep.subr.bf16.mxu0 0
    %1821 = vmatpush1.bf16.msra.mxu0 %v1804
    %1822 = vmatprep.subr.bf16.mxu0 0
    %1823 = vmatpush1.bf16.msra.mxu0 %v1805
    %1824 = vmatprep.subr.bf16.mxu0 0
    %1825 = vmatpush1.bf16.msra.mxu0 %v1806
    %1826 = vmatprep.subr.bf16.mxu0 0
    %1827 = vmatpush1.bf16.msra.mxu0 %v1807
    %1828 = vmatprep.subr.bf16.mxu0 0
    %1829 = vmatpush1.bf16.msra.mxu0 %v1808
    %1830 = vmatprep.subr.bf16.mxu0 0
    %1831 = vmatpush1.bf16.msra.mxu0 %v1809
    %1832 = vmatprep.subr.bf16.mxu0 0
    %1833 = vmatpush1.bf16.msra.mxu0 %v1810
    %1834 = vmatprep.subr.bf16.mxu0 0
    %1835 = vmatpush1.bf16.msra.mxu0 %v1811
    %1836 = vmatprep.subr.bf16.mxu0 0
    %1837 = vmatpush1.bf16.msra.mxu0 0
    %1838 = vmatprep.subr.bf16.mxu0 0
    %1839 = vmatpush1.bf16.msra.mxu0 0
    %1840 = vmatprep.subr.bf16.mxu0 0
    %1841 = vmatpush1.bf16.msra.mxu0 0
    %1842 = vmatprep.subr.bf16.mxu0 0
    %1843 = vmatpush1.bf16.msra.mxu0 0
    %1844 = vmatprep.subr.bf16.mxu0 0
    %1845 = vmatpush1.bf16.msra.mxu0 0
    %1846 = vmatprep.subr.bf16.mxu0 0
    %1847 = vmatpush1.bf16.msra.mxu0 0
    %1848 = vmatprep.subr.bf16.mxu0 0
    %1849 = vmatpush1.bf16.msra.mxu0 0
    %1850 = vmatprep.subr.bf16.mxu0 0
    %1851 = vmatpush1.bf16.msra.mxu0 0
    %1852 = vmatprep.mubr.bf16.mxu0 0
    %1853 = vmatmul.mubr.bf16.gmra.mrb[0].mxu0 %v1755
    %v1854 = vpop.f32.mrb[0].mxu0
    %v1855 = vadd.f32 0.0, %v1854
    %v1856 = vpop.f32.mrb[0].mxu0
    %v1857 = vpop.f32.mrb[0].mxu0
    %v1858 = vpop.f32.mrb[0].mxu0
    %1859 = vdwg.mxu0
    %v1860 = vadd.f32 %v1754, %v1855
    %v1861 = vmul.f32 %v107, %v1154
    %v1862 = vtanh.pop %v1860
    %v1863 = vmul.f32 %v93, %v1862
    %v1864 = vadd.f32 %v1861, %v1863
    %1865 = vst [vmem:[#allocation3] sm:$0xff] %v1864
    %s1866 = scalar_lea.vmem [#allocation3], 8
    %v1867 = vld [vmem:[%s1866] sm:$0xff]
    %v1868 = vpack.c.bf16 %v1864, %v1864
    %v1869 = vld [vmem:[%s9] sm:$0xf]
    %v1870 = vld [vmem:[%s9 + $0x4] sm:$0xf]
    %v1871 = vld [vmem:[%s9 + $0x8] sm:$0xf]
    %v1872 = vld [vmem:[%s9 + $0xc] sm:$0xf]
    %v1873 = vld [vmem:[%s9 + $0x10] sm:$0xf]
    %v1874 = vld [vmem:[%s9 + $0x14] sm:$0xf]
    %v1875 = vld [vmem:[%s9 + $0x18] sm:$0xf]
    %v1876 = vld [vmem:[%s9 + $0x1c] sm:$0xf]
    %v1877 = vld [vmem:[%s9 + $0x20] sm:$0xf]
    %v1878 = vld [vmem:[%s9 + $0x24] sm:$0xf]
    %v1879 = vld [vmem:[%s9 + $0x28] sm:$0xf]
    %v1880 = vld [vmem:[%s9 + $0x2c] sm:$0xf]
    %v1881 = vld [vmem:[%s9 + $0x30] sm:$0xf]
    %v1882 = vld [vmem:[%s9 + $0x34] sm:$0xf]
    %v1883 = vld [vmem:[%s9 + $0x38] sm:$0xf]
    %v1884 = vld [vmem:[%s9 + $0x3c] sm:$0xf]
    %v1901 = vunpack.c.l.b16 %v1869
    %v1902 = vunpack.c.l.b16 %v1870
    %v1903 = vunpack.c.l.b16 %v1871
    %v1904 = vunpack.c.l.b16 %v1872
    %v1905 = vunpack.c.l.b16 %v1873
    %v1906 = vunpack.c.l.b16 %v1874
    %v1907 = vunpack.c.l.b16 %v1875
    %v1908 = vunpack.c.l.b16 %v1876
    %v1909 = vunpack.c.l.b16 %v1877
    %v1910 = vunpack.c.l.b16 %v1878
    %v1911 = vunpack.c.l.b16 %v1879
    %v1912 = vunpack.c.l.b16 %v1880
    %v1913 = vunpack.c.l.b16 %v1881
    %v1914 = vunpack.c.l.b16 %v1882
    %v1915 = vunpack.c.l.b16 %v1883
    %v1916 = vunpack.c.l.b16 %v1884
    %v1917 = vpack.c.b16 %v1902, %v1901
    %v1918 = vpack.c.b16 %v1904, %v1903
    %v1919 = vpack.c.b16 %v1906, %v1905
    %v1920 = vpack.c.b16 %v1908, %v1907
    %v1921 = vpack.c.b16 %v1910, %v1909
    %v1922 = vpack.c.b16 %v1912, %v1911
    %v1923 = vpack.c.b16 %v1914, %v1913
    %v1924 = vpack.c.b16 %v1916, %v1915
    %1933 = vmatprep.subr.bf16.mxu0 0
    %1934 = vmatpush1.bf16.msra.mxu0 %v1917
    %1935 = vmatprep.subr.bf16.mxu0 0
    %1936 = vmatpush1.bf16.msra.mxu0 %v1918
    %1937 = vmatprep.subr.bf16.mxu0 0
    %1938 = vmatpush1.bf16.msra.mxu0 %v1919
    %1939 = vmatprep.subr.bf16.mxu0 0
    %1940 = vmatpush1.bf16.msra.mxu0 %v1920
    %1941 = vmatprep.subr.bf16.mxu0 0
    %1942 = vmatpush1.bf16.msra.mxu0 %v1921
    %1943 = vmatprep.subr.bf16.mxu0 0
    %1944 = vmatpush1.bf16.msra.mxu0 %v1922
    %1945 = vmatprep.subr.bf16.mxu0 0
    %1946 = vmatpush1.bf16.msra.mxu0 %v1923
    %1947 = vmatprep.subr.bf16.mxu0 0
    %1948 = vmatpush1.bf16.msra.mxu0 %v1924
    %1949 = vmatprep.subr.bf16.mxu0 0
    %1950 = vmatpush1.bf16.msra.mxu0 0
    %1951 = vmatprep.subr.bf16.mxu0 0
    %1952 = vmatpush1.bf16.msra.mxu0 0
    %1953 = vmatprep.subr.bf16.mxu0 0
    %1954 = vmatpush1.bf16.msra.mxu0 0
    %1955 = vmatprep.subr.bf16.mxu0 0
    %1956 = vmatpush1.bf16.msra.mxu0 0
    %1957 = vmatprep.subr.bf16.mxu0 0
    %1958 = vmatpush1.bf16.msra.mxu0 0
    %1959 = vmatprep.subr.bf16.mxu0 0
    %1960 = vmatpush1.bf16.msra.mxu0 0
    %1961 = vmatprep.subr.bf16.mxu0 0
    %1962 = vmatpush1.bf16.msra.mxu0 0
    %1963 = vmatprep.subr.bf16.mxu0 0
    %1964 = vmatpush1.bf16.msra.mxu0 0
    %1965 = vmatprep.mubr.bf16.mxu0 0
    %1966 = vmatmul.mubr.bf16.gmra.mrb[0].mxu0 %v1868
    %v1967 = vpop.f32.mrb[0].mxu0
    %v1968 = vadd.f32 0.0, %v1967
    %v1969 = vpop.f32.mrb[0].mxu0
    %v1970 = vpop.f32.mrb[0].mxu0
    %v1971 = vpop.f32.mrb[0].mxu0
    %1972 = vdwg.mxu0
    %v1973 = vadd.f32 %v1867, %v1968
    %v1974 = vmul.f32 %v107, %v1864
    %v1975 = vtanh.pop %v1973
    %v1976 = vmul.f32 %v93, %v1975
    %v1977 = vadd.f32 %v1974, %v1976
    %1978 = vst [vmem:[%s1866] sm:$0xff] %v1977
    %s1979 = scalar_lea.vmem [#allocation3], 16
    %v1980 = vld [vmem:[%s1979] sm:$0xff]
    %v1981 = vpack.c.bf16 %v1977, %v1977
    %v1982 = vld [vmem:[%s9] sm:$0xf]
    %v1983 = vld [vmem:[%s9 + $0x4] sm:$0xf]
    %v1984 = vld [vmem:[%s9 + $0x8] sm:$0xf]
    %v1985 = vld [vmem:[%s9 + $0xc] sm:$0xf]
    %v1986 = vld [vmem:[%s9 + $0x10] sm:$0xf]
    %v1987 = vld [vmem:[%s9 + $0x14] sm:$0xf]
    %v1988 = vld [vmem:[%s9 + $0x18] sm:$0xf]
    %v1989 = vld [vmem:[%s9 + $0x1c] sm:$0xf]
    %v1990 = vld [vmem:[%s9 + $0x20] sm:$0xf]
    %v1991 = vld [vmem:[%s9 + $0x24] sm:$0xf]
    %v1992 = vld [vmem:[%s9 + $0x28] sm:$0xf]
    %v1993 = vld [vmem:[%s9 + $0x2c] sm:$0xf]
    %v1994 = vld [vmem:[%s9 + $0x30] sm:$0xf]
    %v1995 = vld [vmem:[%s9 + $0x34] sm:$0xf]
    %v1996 = vld [vmem:[%s9 + $0x38] sm:$0xf]
    %v1997 = vld [vmem:[%s9 + $0x3c] sm:$0xf]
    %v2014 = vunpack.c.l.b16 %v1982
    %v2015 = vunpack.c.l.b16 %v1983
    %v2016 = vunpack.c.l.b16 %v1984
    %v2017 = vunpack.c.l.b16 %v1985
    %v2018 = vunpack.c.l.b16 %v1986
    %v2019 = vunpack.c.l.b16 %v1987
    %v2020 = vunpack.c.l.b16 %v1988
    %v2021 = vunpack.c.l.b16 %v1989
    %v2022 = vunpack.c.l.b16 %v1990
    %v2023 = vunpack.c.l.b16 %v1991
    %v2024 = vunpack.c.l.b16 %v1992
    %v2025 = vunpack.c.l.b16 %v1993
    %v2026 = vunpack.c.l.b16 %v1994
    %v2027 = vunpack.c.l.b16 %v1995
    %v2028 = vunpack.c.l.b16 %v1996
    %v2029 = vunpack.c.l.b16 %v1997
    %v2030 = vpack.c.b16 %v2015, %v2014
    %v2031 = vpack.c.b16 %v2017, %v2016
    %v2032 = vpack.c.b16 %v2019, %v2018
    %v2033 = vpack.c.b16 %v2021, %v2020
    %v2034 = vpack.c.b16 %v2023, %v2022
    %v2035 = vpack.c.b16 %v2025, %v2024
    %v2036 = vpack.c.b16 %v2027, %v2026
    %v2037 = vpack.c.b16 %v2029, %v2028
    %2046 = vmatprep.subr.bf16.mxu0 0
    %2047 = vmatpush1.bf16.msra.mxu0 %v2030
    %2048 = vmatprep.subr.bf16.mxu0 0
    %2049 = vmatpush1.bf16.msra.mxu0 %v2031
    %2050 = vmatprep.subr.bf16.mxu0 0
    %2051 = vmatpush1.bf16.msra.mxu0 %v2032
    %2052 = vmatprep.subr.bf16.mxu0 0
    %2053 = vmatpush1.bf16.msra.mxu0 %v2033
    %2054 = vmatprep.subr.bf16.mxu0 0
    %2055 = vmatpush1.bf16.msra.mxu0 %v2034
    %2056 = vmatprep.subr.bf16.mxu0 0
    %2057 = vmatpush1.bf16.msra.mxu0 %v2035
    %2058 = vmatprep.subr.bf16.mxu0 0
    %2059 = vmatpush1.bf16.msra.mxu0 %v2036
    %2060 = vmatprep.subr.bf16.mxu0 0
    %2061 = vmatpush1.bf16.msra.mxu0 %v2037
    %2062 = vmatprep.subr.bf16.mxu0 0
    %2063 = vmatpush1.bf16.msra.mxu0 0
    %2064 = vmatprep.subr.bf16.mxu0 0
    %2065 = vmatpush1.bf16.msra.mxu0 0
    %2066 = vmatprep.subr.bf16.mxu0 0
    %2067 = vmatpush1.bf16.msra.mxu0 0
    %2068 = vmatprep.subr.bf16.mxu0 0
    %2069 = vmatpush1.bf16.msra.mxu0 0
    %2070 = vmatprep.subr.bf16.mxu0 0
    %2071 = vmatpush1.bf16.msra.mxu0 0
    %2072 = vmatprep.subr.bf16.mxu0 0
    %2073 = vmatpush1.bf16.msra.mxu0 0
    %2074 = vmatprep.subr.bf16.mxu0 0
    %2075 = vmatpush1.bf16.msra.mxu0 0
    %2076 = vmatprep.subr.bf16.mxu0 0
    %2077 = vmatpush1.bf16.msra.mxu0 0
    %2078 = vmatprep.mubr.bf16.mxu0 0
    %2079 = vmatmul.mubr.bf16.gmra.mrb[0].mxu0 %v1981
    %v2080 = vpop.f32.mrb[0].mxu0
    %v2081 = vadd.f32 0.0, %v2080
    %v2082 = vpop.f32.mrb[0].mxu0
    %v2083 = vpop.f32.mrb[0].mxu0
    %v2084 = vpop.f32.mrb[0].mxu0
    %2085 = vdwg.mxu0
    %v2086 = vadd.f32 %v1980, %v2081
    %v2087 = vmul.f32 %v107, %v1977
    %v2088 = vtanh.pop %v2086
    %v2089 = vmul.f32 %v93, %v2088
    %v2090 = vadd.f32 %v2087, %v2089
    %2091 = vst [vmem:[%s1979] sm:$0xff] %v2090
    %s2092 = scalar_lea.vmem [#allocation3], 24
    %v2093 = vld [vmem:[%s2092] sm:$0xff]
    %v2094 = vpack.c.bf16 %v2090, %v2090
    %v2095 = vld [vmem:[%s9] sm:$0xf]
    %v2096 = vld [vmem:[%s9 + $0x4] sm:$0xf]
    %v2097 = vld [vmem:[%s9 + $0x8] sm:$0xf]
    %v2098 = vld [vmem:[%s9 + $0xc] sm:$0xf]
    %v2099 = vld [vmem:[%s9 + $0x10] sm:$0xf]
    %v2100 = vld [vmem:[%s9 + $0x14] sm:$0xf]
    %v2101 = vld [vmem:[%s9 + $0x18] sm:$0xf]
    %v2102 = vld [vmem:[%s9 + $0x1c] sm:$0xf]
    %v2103 = vld [vmem:[%s9 + $0x20] sm:$0xf]
    %v2104 = vld [vmem:[%s9 + $0x24] sm:$0xf]
    %v2105 = vld [vmem:[%s9 + $0x28] sm:$0xf]
    %v2106 = vld [vmem:[%s9 + $0x2c] sm:$0xf]
    %v2107 = vld [vmem:[%s9 + $0x30] sm:$0xf]
    %v2108 = vld [vmem:[%s9 + $0x34] sm:$0xf]
    %v2109 = vld [vmem:[%s9 + $0x38] sm:$0xf]
    %v2110 = vld [vmem:[%s9 + $0x3c] sm:$0xf]
    %v2127 = vunpack.c.l.b16 %v2095
    %v2128 = vunpack.c.l.b16 %v2096
    %v2129 = vunpack.c.l.b16 %v2097
    %v2130 = vunpack.c.l.b16 %v2098
    %v2131 = vunpack.c.l.b16 %v2099
    %v2132 = vunpack.c.l.b16 %v2100
    %v2133 = vunpack.c.l.b16 %v2101
    %v2134 = vunpack.c.l.b16 %v2102
    %v2135 = vunpack.c.l.b16 %v2103
    %v2136 = vunpack.c.l.b16 %v2104
    %v2137 = vunpack.c.l.b16 %v2105
    %v2138 = vunpack.c.l.b16 %v2106
    %v2139 = vunpack.c.l.b16 %v2107
    %v2140 = vunpack.c.l.b16 %v2108
    %v2141 = vunpack.c.l.b16 %v2109
    %v2142 = vunpack.c.l.b16 %v2110
    %v2143 = vpack.c.b16 %v2128, %v2127
    %v2144 = vpack.c.b16 %v2130, %v2129
    %v2145 = vpack.c.b16 %v2132, %v2131
    %v2146 = vpack.c.b16 %v2134, %v2133
    %v2147 = vpack.c.b16 %v2136, %v2135
    %v2148 = vpack.c.b16 %v2138, %v2137
    %v2149 = vpack.c.b16 %v2140, %v2139
    %v2150 = vpack.c.b16 %v2142, %v2141
    %2159 = vmatprep.subr.bf16.mxu0 0
    %2160 = vmatpush1.bf16.msra.mxu0 %v2143
    %2161 = vmatprep.subr.bf16.mxu0 0
    %2162 = vmatpush1.bf16.msra.mxu0 %v2144
    %2163 = vmatprep.subr.bf16.mxu0 0
    %2164 = vmatpush1.bf16.msra.mxu0 %v2145
    %2165 = vmatprep.subr.bf16.mxu0 0
    %2166 = vmatpush1.bf16.msra.mxu0 %v2146
    %2167 = vmatprep.subr.bf16.mxu0 0
    %2168 = vmatpush1.bf16.msra.mxu0 %v2147
    %2169 = vmatprep.subr.bf16.mxu0 0
    %2170 = vmatpush1.bf16.msra.mxu0 %v2148
    %2171 = vmatprep.subr.bf16.mxu0 0
    %2172 = vmatpush1.bf16.msra.mxu0 %v2149
    %2173 = vmatprep.subr.bf16.mxu0 0
    %2174 = vmatpush1.bf16.msra.mxu0 %v2150
    %2175 = vmatprep.subr.bf16.mxu0 0
    %2176 = vmatpush1.bf16.msra.mxu0 0
    %2177 = vmatprep.subr.bf16.mxu0 0
    %2178 = vmatpush1.bf16.msra.mxu0 0
    %2179 = vmatprep.subr.bf16.mxu0 0
    %2180 = vmatpush1.bf16.msra.mxu0 0
    %2181 = vmatprep.subr.bf16.mxu0 0
    %2182 = vmatpush1.bf16.msra.mxu0 0
    %2183 = vmatprep.subr.bf16.mxu0 0
    %2184 = vmatpush1.bf16.msra.mxu0 0
    %2185 = vmatprep.subr.bf16.mxu0 0
    %2186 = vmatpush1.bf16.msra.mxu0 0
    %2187 = vmatprep.subr.bf16.mxu0 0
    %2188 = vmatpush1.bf16.msra.mxu0 0
    %2189 = vmatprep.subr.bf16.mxu0 0
    %2190 = vmatpush1.bf16.msra.mxu0 0
    %2191 = vmatprep.mubr.bf16.mxu0 0
    %2192 = vmatmul.mubr.bf16.gmra.mrb[0].mxu0 %v2094
    %v2193 = vpop.f32.mrb[0].mxu0
    %v2194 = vadd.f32 0.0, %v2193
    %v2195 = vpop.f32.mrb[0].mxu0
    %v2196 = vpop.f32.mrb[0].mxu0
    %v2197 = vpop.f32.mrb[0].mxu0
    %2198 = vdwg.mxu0
    %v2199 = vadd.f32 %v2093, %v2194
    %v2200 = vmul.f32 %v107, %v2090
    %v2201 = vtanh.pop %v2199
    %v2202 = vmul.f32 %v93, %v2201
    %v2203 = vadd.f32 %v2200, %v2202
    %2204 = vst [vmem:[%s2092] sm:$0xff] %v2203
    %s2205 = scalar_lea.vmem [#allocation3], 32
    %v2206 = vld [vmem:[%s2205] sm:$0xff]
    %v2207 = vpack.c.bf16 %v2203, %v2203
    %v2208 = vld [vmem:[%s9] sm:$0xf]
    %v2209 = vld [vmem:[%s9 + $0x4] sm:$0xf]
    %v2210 = vld [vmem:[%s9 + $0x8] sm:$0xf]
    %v2211 = vld [vmem:[%s9 + $0xc] sm:$0xf]
    %v2212 = vld [vmem:[%s9 + $0x10] sm:$0xf]
    %v2213 = vld [vmem:[%s9 + $0x14] sm:$0xf]
    %v2214 = vld [vmem:[%s9 + $0x18] sm:$0xf]
    %v2215 = vld [vmem:[%s9 + $0x1c] sm:$0xf]
    %v2216 = vld [vmem:[%s9 + $0x20] sm:$0xf]
    %v2217 = vld [vmem:[%s9 + $0x24] sm:$0xf]
    %v2218 = vld [vmem:[%s9 + $0x28] sm:$0xf]
    %v2219 = vld [vmem:[%s9 + $0x2c] sm:$0xf]
    %v2220 = vld [vmem:[%s9 + $0x30] sm:$0xf]
    %v2221 = vld [vmem:[%s9 + $0x34] sm:$0xf]
    %v2222 = vld [vmem:[%s9 + $0x38] sm:$0xf]
    %v2223 = vld [vmem:[%s9 + $0x3c] sm:$0xf]
    %v2240 = vunpack.c.l.b16 %v2208
    %v2241 = vunpack.c.l.b16 %v2209
    %v2242 = vunpack.c.l.b16 %v2210
    %v2243 = vunpack.c.l.b16 %v2211
    %v2244 = vunpack.c.l.b16 %v2212
    %v2245 = vunpack.c.l.b16 %v2213
    %v2246 = vunpack.c.l.b16 %v2214
    %v2247 = vunpack.c.l.b16 %v2215
    %v2248 = vunpack.c.l.b16 %v2216
    %v2249 = vunpack.c.l.b16 %v2217
    %v2250 = vunpack.c.l.b16 %v2218
    %v2251 = vunpack.c.l.b16 %v2219
    %v2252 = vunpack.c.l.b16 %v2220
    %v2253 = vunpack.c.l.b16 %v2221
    %v2254 = vunpack.c.l.b16 %v2222
    %v2255 = vunpack.c.l.b16 %v2223
    %v2256 = vpack.c.b16 %v2241, %v2240
    %v2257 = vpack.c.b16 %v2243, %v2242
    %v2258 = vpack.c.b16 %v2245, %v2244
    %v2259 = vpack.c.b16 %v2247, %v2246
    %v2260 = vpack.c.b16 %v2249, %v2248
    %v2261 = vpack.c.b16 %v2251, %v2250
    %v2262 = vpack.c.b16 %v2253, %v2252
    %v2263 = vpack.c.b16 %v2255, %v2254
    %2272 = vmatprep.subr.bf16.mxu0 0
    %2273 = vmatpush1.bf16.msra.mxu0 %v2256
    %2274 = vmatprep.subr.bf16.mxu0 0
    %2275 = vmatpush1.bf16.msra.mxu0 %v2257
    %2276 = vmatprep.subr.bf16.mxu0 0
    %2277 = vmatpush1.bf16.msra.mxu0 %v2258
    %2278 = vmatprep.subr.bf16.mxu0 0
    %2279 = vmatpush1.bf16.msra.mxu0 %v2259
    %2280 = vmatprep.subr.bf16.mxu0 0
    %2281 = vmatpush1.bf16.msra.mxu0 %v2260
    %2282 = vmatprep.subr.bf16.mxu0 0
    %2283 = vmatpush1.bf16.msra.mxu0 %v2261
    %2284 = vmatprep.subr.bf16.mxu0 0
    %2285 = vmatpush1.bf16.msra.mxu0 %v2262
    %2286 = vmatprep.subr.bf16.mxu0 0
    %2287 = vmatpush1.bf16.msra.mxu0 %v2263
    %2288 = vmatprep.subr.bf16.mxu0 0
    %2289 = vmatpush1.bf16.msra.mxu0 0
    %2290 = vmatprep.subr.bf16.mxu0 0
    %2291 = vmatpush1.bf16.msra.mxu0 0
    %2292 = vmatprep.subr.bf16.mxu0 0
    %2293 = vmatpush1.bf16.msra.mxu0 0
    %2294 = vmatprep.subr.bf16.mxu0 0
    %2295 = vmatpush1.bf16.msra.mxu0 0
    %2296 = vmatprep.subr.bf16.mxu0 0
    %2297 = vmatpush1.bf16.msra.mxu0 0
    %2298 = vmatprep.subr.bf16.mxu0 0
    %2299 = vmatpush1.bf16.msra.mxu0 0
    %2300 = vmatprep.subr.bf16.mxu0 0
    %2301 = vmatpush1.bf16.msra.mxu0 0
    %2302 = vmatprep.subr.bf16.mxu0 0
    %2303 = vmatpush1.bf16.msra.mxu0 0
    %2304 = vmatprep.mubr.bf16.mxu0 0
    %2305 = vmatmul.mubr.bf16.gmra.mrb[0].mxu0 %v2207
    %v2306 = vpop.f32.mrb[0].mxu0
    %v2307 = vadd.f32 0.0, %v2306
    %v2308 = vpop.f32.mrb[0].mxu0
    %v2309 = vpop.f32.mrb[0].mxu0
    %v2310 = vpop.f32.mrb[0].mxu0
    %2311 = vdwg.mxu0
    %v2312 = vadd.f32 %v2206, %v2307
    %v2313 = vmul.f32 %v107, %v2203
    %v2314 = vtanh.pop %v2312
    %v2315 = vmul.f32 %v93, %v2314
    %v2316 = vadd.f32 %v2313, %v2315
    %2317 = vst [vmem:[%s2205] sm:$0xff] %v2316
    %s2318 = scalar_lea.vmem [#allocation3], 40
    %v2319 = vld [vmem:[%s2318] sm:$0xff]
    %v2320 = vpack.c.bf16 %v2316, %v2316
    %v2321 = vld [vmem:[%s9] sm:$0xf]
    %v2322 = vld [vmem:[%s9 + $0x4] sm:$0xf]
    %v2323 = vld [vmem:[%s9 + $0x8] sm:$0xf]
    %v2324 = vld [vmem:[%s9 + $0xc] sm:$0xf]
    %v2325 = vld [vmem:[%s9 + $0x10] sm:$0xf]
    %v2326 = vld [vmem:[%s9 + $0x14] sm:$0xf]
    %v2327 = vld [vmem:[%s9 + $0x18] sm:$0xf]
    %v2328 = vld [vmem:[%s9 + $0x1c] sm:$0xf]
    %v2329 = vld [vmem:[%s9 + $0x20] sm:$0xf]
    %v2330 = vld [vmem:[%s9 + $0x24] sm:$0xf]
    %v2331 = vld [vmem:[%s9 + $0x28] sm:$0xf]
    %v2332 = vld [vmem:[%s9 + $0x2c] sm:$0xf]
    %v2333 = vld [vmem:[%s9 + $0x30] sm:$0xf]
    %v2334 = vld [vmem:[%s9 + $0x34] sm:$0xf]
    %v2335 = vld [vmem:[%s9 + $0x38] sm:$0xf]
    %v2336 = vld [vmem:[%s9 + $0x3c] sm:$0xf]
    %v2353 = vunpack.c.l.b16 %v2321
    %v2354 = vunpack.c.l.b16 %v2322
    %v2355 = vunpack.c.l.b16 %v2323
    %v2356 = vunpack.c.l.b16 %v2324
    %v2357 = vunpack.c.l.b16 %v2325
    %v2358 = vunpack.c.l.b16 %v2326
    %v2359 = vunpack.c.l.b16 %v2327
    %v2360 = vunpack.c.l.b16 %v2328
    %v2361 = vunpack.c.l.b16 %v2329
    %v2362 = vunpack.c.l.b16 %v2330
    %v2363 = vunpack.c.l.b16 %v2331
    %v2364 = vunpack.c.l.b16 %v2332
    %v2365 = vunpack.c.l.b16 %v2333
    %v2366 = vunpack.c.l.b16 %v2334
    %v2367 = vunpack.c.l.b16 %v2335
    %v2368 = vunpack.c.l.b16 %v2336
    %v2369 = vpack.c.b16 %v2354, %v2353
    %v2370 = vpack.c.b16 %v2356, %v2355
    %v2371 = vpack.c.b16 %v2358, %v2357
    %v2372 = vpack.c.b16 %v2360, %v2359
    %v2373 = vpack.c.b16 %v2362, %v2361
    %v2374 = vpack.c.b16 %v2364, %v2363
    %v2375 = vpack.c.b16 %v2366, %v2365
    %v2376 = vpack.c.b16 %v2368, %v2367
    %2385 = vmatprep.subr.bf16.mxu0 0
    %2386 = vmatpush1.bf16.msra.mxu0 %v2369
    %2387 = vmatprep.subr.bf16.mxu0 0
    %2388 = vmatpush1.bf16.msra.mxu0 %v2370
    %2389 = vmatprep.subr.bf16.mxu0 0
    %2390 = vmatpush1.bf16.msra.mxu0 %v2371
    %2391 = vmatprep.subr.bf16.mxu0 0
    %2392 = vmatpush1.bf16.msra.mxu0 %v2372
    %2393 = vmatprep.subr.bf16.mxu0 0
    %2394 = vmatpush1.bf16.msra.mxu0 %v2373
    %2395 = vmatprep.subr.bf16.mxu0 0
    %2396 = vmatpush1.bf16.msra.mxu0 %v2374
    %2397 = vmatprep.subr.bf16.mxu0 0
    %2398 = vmatpush1.bf16.msra.mxu0 %v2375
    %2399 = vmatprep.subr.bf16.mxu0 0
    %2400 = vmatpush1.bf16.msra.mxu0 %v2376
    %2401 = vmatprep.subr.bf16.mxu0 0
    %2402 = vmatpush1.bf16.msra.mxu0 0
    %2403 = vmatprep.subr.bf16.mxu0 0
    %2404 = vmatpush1.bf16.msra.mxu0 0
    %2405 = vmatprep.subr.bf16.mxu0 0
    %2406 = vmatpush1.bf16.msra.mxu0 0
    %2407 = vmatprep.subr.bf16.mxu0 0
    %2408 = vmatpush1.bf16.msra.mxu0 0
    %2409 = vmatprep.subr.bf16.mxu0 0
    %2410 = vmatpush1.bf16.msra.mxu0 0
    %2411 = vmatprep.subr.bf16.mxu0 0
    %2412 = vmatpush1.bf16.msra.mxu0 0
    %2413 = vmatprep.subr.bf16.mxu0 0
    %2414 = vmatpush1.bf16.msra.mxu0 0
    %2415 = vmatprep.subr.bf16.mxu0 0
    %2416 = vmatpush1.bf16.msra.mxu0 0
    %2417 = vmatprep.mubr.bf16.mxu0 0
    %2418 = vmatmul.mubr.bf16.gmra.mrb[0].mxu0 %v2320
    %v2419 = vpop.f32.mrb[0].mxu0
    %v2420 = vadd.f32 0.0, %v2419
    %v2421 = vpop.f32.mrb[0].mxu0
    %v2422 = vpop.f32.mrb[0].mxu0
    %v2423 = vpop.f32.mrb[0].mxu0
    %2424 = vdwg.mxu0
    %v2425 = vadd.f32 %v2319, %v2420
    %v2426 = vmul.f32 %v107, %v2316
    %v2427 = vtanh.pop %v2425
    %v2428 = vmul.f32 %v93, %v2427
    %v2429 = vadd.f32 %v2426, %v2428
    %2430 = vst [vmem:[%s2318] sm:$0xff] %v2429
    %s2431 = scalar_lea.vmem [#allocation3], 48
    %v2432 = vld [vmem:[%s2431] sm:$0xff]
    %v2433 = vpack.c.bf16 %v2429, %v2429
    %v2434 = vld [vmem:[%s9] sm:$0xf]
    %v2435 = vld [vmem:[%s9 + $0x4] sm:$0xf]
    %v2436 = vld [vmem:[%s9 + $0x8] sm:$0xf]
    %v2437 = vld [vmem:[%s9 + $0xc] sm:$0xf]
    %v2438 = vld [vmem:[%s9 + $0x10] sm:$0xf]
    %v2439 = vld [vmem:[%s9 + $0x14] sm:$0xf]
    %v2440 = vld [vmem:[%s9 + $0x18] sm:$0xf]
    %v2441 = vld [vmem:[%s9 + $0x1c] sm:$0xf]
    %v2442 = vld [vmem:[%s9 + $0x20] sm:$0xf]
    %v2443 = vld [vmem:[%s9 + $0x24] sm:$0xf]
    %v2444 = vld [vmem:[%s9 + $0x28] sm:$0xf]
    %v2445 = vld [vmem:[%s9 + $0x2c] sm:$0xf]
    %v2446 = vld [vmem:[%s9 + $0x30] sm:$0xf]
    %v2447 = vld [vmem:[%s9 + $0x34] sm:$0xf]
    %v2448 = vld [vmem:[%s9 + $0x38] sm:$0xf]
    %v2449 = vld [vmem:[%s9 + $0x3c] sm:$0xf]
    %v2466 = vunpack.c.l.b16 %v2434
    %v2467 = vunpack.c.l.b16 %v2435
    %v2468 = vunpack.c.l.b16 %v2436
    %v2469 = vunpack.c.l.b16 %v2437
    %v2470 = vunpack.c.l.b16 %v2438
    %v2471 = vunpack.c.l.b16 %v2439
    %v2472 = vunpack.c.l.b16 %v2440
    %v2473 = vunpack.c.l.b16 %v2441
    %v2474 = vunpack.c.l.b16 %v2442
    %v2475 = vunpack.c.l.b16 %v2443
    %v2476 = vunpack.c.l.b16 %v2444
    %v2477 = vunpack.c.l.b16 %v2445
    %v2478 = vunpack.c.l.b16 %v2446
    %v2479 = vunpack.c.l.b16 %v2447
    %v2480 = vunpack.c.l.b16 %v2448
    %v2481 = vunpack.c.l.b16 %v2449
    %v2482 = vpack.c.b16 %v2467, %v2466
    %v2483 = vpack.c.b16 %v2469, %v2468
    %v2484 = vpack.c.b16 %v2471, %v2470
    %v2485 = vpack.c.b16 %v2473, %v2472
    %v2486 = vpack.c.b16 %v2475, %v2474
    %v2487 = vpack.c.b16 %v2477, %v2476
    %v2488 = vpack.c.b16 %v2479, %v2478
    %v2489 = vpack.c.b16 %v2481, %v2480
    %2498 = vmatprep.subr.bf16.mxu0 0
    %2499 = vmatpush1.bf16.msra.mxu0 %v2482
    %2500 = vmatprep.subr.bf16.mxu0 0
    %2501 = vmatpush1.bf16.msra.mxu0 %v2483
    %2502 = vmatprep.subr.bf16.mxu0 0
    %2503 = vmatpush1.bf16.msra.mxu0 %v2484
    %2504 = vmatprep.subr.bf16.mxu0 0
    %2505 = vmatpush1.bf16.msra.mxu0 %v2485
    %2506 = vmatprep.subr.bf16.mxu0 0
    %2507 = vmatpush1.bf16.msra.mxu0 %v2486
    %2508 = vmatprep.subr.bf16.mxu0 0
    %2509 = vmatpush1.bf16.msra.mxu0 %v2487
    %2510 = vmatprep.subr.bf16.mxu0 0
    %2511 = vmatpush1.bf16.msra.mxu0 %v2488
    %2512 = vmatprep.subr.bf16.mxu0 0
    %2513 = vmatpush1.bf16.msra.mxu0 %v2489
    %2514 = vmatprep.subr.bf16.mxu0 0
    %2515 = vmatpush1.bf16.msra.mxu0 0
    %2516 = vmatprep.subr.bf16.mxu0 0
    %2517 = vmatpush1.bf16.msra.mxu0 0
    %2518 = vmatprep.subr.bf16.mxu0 0
    %2519 = vmatpush1.bf16.msra.mxu0 0
    %2520 = vmatprep.subr.bf16.mxu0 0
    %2521 = vmatpush1.bf16.msra.mxu0 0
    %2522 = vmatprep.subr.bf16.mxu0 0
    %2523 = vmatpush1.bf16.msra.mxu0 0
    %2524 = vmatprep.subr.bf16.mxu0 0
    %2525 = vmatpush1.bf16.msra.mxu0 0
    %2526 = vmatprep.subr.bf16.mxu0 0
    %2527 = vmatpush1.bf16.msra.mxu0 0
    %2528 = vmatprep.subr.bf16.mxu0 0
    %2529 = vmatpush1.bf16.msra.mxu0 0
    %2530 = vmatprep.mubr.bf16.mxu0 0
    %2531 = vmatmul.mubr.bf16.gmra.mrb[0].mxu0 %v2433
    %v2532 = vpop.f32.mrb[0].mxu0
    %v2533 = vadd.f32 0.0, %v2532
    %v2534 = vpop.f32.mrb[0].mxu0
    %v2535 = vpop.f32.mrb[0].mxu0
    %v2536 = vpop.f32.mrb[0].mxu0
    %2537 = vdwg.mxu0
    %v2538 = vadd.f32 %v2432, %v2533
    %v2539 = vmul.f32 %v107, %v2429
    %v2540 = vtanh.pop %v2538
    %v2541 = vmul.f32 %v93, %v2540
    %v2542 = vadd.f32 %v2539, %v2541
    %2543 = vst [vmem:[%s2431] sm:$0xff] %v2542
    %s2544 = scalar_lea.vmem [#allocation3], 56
    %v2545 = vld [vmem:[%s2544] sm:$0xff]
    %v2546 = vpack.c.bf16 %v2542, %v2542
    %v2547 = vld [vmem:[%s9] sm:$0xf]
    %v2548 = vld [vmem:[%s9 + $0x4] sm:$0xf]
    %v2549 = vld [vmem:[%s9 + $0x8] sm:$0xf]
    %v2550 = vld [vmem:[%s9 + $0xc] sm:$0xf]
    %v2551 = vld [vmem:[%s9 + $0x10] sm:$0xf]
    %v2552 = vld [vmem:[%s9 + $0x14] sm:$0xf]
    %v2553 = vld [vmem:[%s9 + $0x18] sm:$0xf]
    %v2554 = vld [vmem:[%s9 + $0x1c] sm:$0xf]
    %v2555 = vld [vmem:[%s9 + $0x20] sm:$0xf]
    %v2556 = vld [vmem:[%s9 + $0x24] sm:$0xf]
    %v2557 = vld [vmem:[%s9 + $0x28] sm:$0xf]
    %v2558 = vld [vmem:[%s9 + $0x2c] sm:$0xf]
    %v2559 = vld [vmem:[%s9 + $0x30] sm:$0xf]
    %v2560 = vld [vmem:[%s9 + $0x34] sm:$0xf]
    %v2561 = vld [vmem:[%s9 + $0x38] sm:$0xf]
    %v2562 = vld [vmem:[%s9 + $0x3c] sm:$0xf]
    %v2579 = vunpack.c.l.b16 %v2547
    %v2580 = vunpack.c.l.b16 %v2548
    %v2581 = vunpack.c.l.b16 %v2549
    %v2582 = vunpack.c.l.b16 %v2550
    %v2583 = vunpack.c.l.b16 %v2551
    %v2584 = vunpack.c.l.b16 %v2552
    %v2585 = vunpack.c.l.b16 %v2553
    %v2586 = vunpack.c.l.b16 %v2554
    %v2587 = vunpack.c.l.b16 %v2555
    %v2588 = vunpack.c.l.b16 %v2556
    %v2589 = vunpack.c.l.b16 %v2557
    %v2590 = vunpack.c.l.b16 %v2558
    %v2591 = vunpack.c.l.b16 %v2559
    %v2592 = vunpack.c.l.b16 %v2560
    %v2593 = vunpack.c.l.b16 %v2561
    %v2594 = vunpack.c.l.b16 %v2562
    %v2595 = vpack.c.b16 %v2580, %v2579
    %v2596 = vpack.c.b16 %v2582, %v2581
    %v2597 = vpack.c.b16 %v2584, %v2583
    %v2598 = vpack.c.b16 %v2586, %v2585
    %v2599 = vpack.c.b16 %v2588, %v2587
    %v2600 = vpack.c.b16 %v2590, %v2589
    %v2601 = vpack.c.b16 %v2592, %v2591
    %v2602 = vpack.c.b16 %v2594, %v2593
    %2611 = vmatprep.subr.bf16.mxu0 0
    %2612 = vmatpush1.bf16.msra.mxu0 %v2595
    %2613 = vmatprep.subr.bf16.mxu0 0
    %2614 = vmatpush1.bf16.msra.mxu0 %v2596
    %2615 = vmatprep.subr.bf16.mxu0 0
    %2616 = vmatpush1.bf16.msra.mxu0 %v2597
    %2617 = vmatprep.subr.bf16.mxu0 0
    %2618 = vmatpush1.bf16.msra.mxu0 %v2598
    %2619 = vmatprep.subr.bf16.mxu0 0
    %2620 = vmatpush1.bf16.msra.mxu0 %v2599
    %2621 = vmatprep.subr.bf16.mxu0 0
    %2622 = vmatpush1.bf16.msra.mxu0 %v2600
    %2623 = vmatprep.subr.bf16.mxu0 0
    %2624 = vmatpush1.bf16.msra.mxu0 %v2601
    %2625 = vmatprep.subr.bf16.mxu0 0
    %2626 = vmatpush1.bf16.msra.mxu0 %v2602
    %2627 = vmatprep.subr.bf16.mxu0 0
    %2628 = vmatpush1.bf16.msra.mxu0 0
    %2629 = vmatprep.subr.bf16.mxu0 0
    %2630 = vmatpush1.bf16.msra.mxu0 0
    %2631 = vmatprep.subr.bf16.mxu0 0
    %2632 = vmatpush1.bf16.msra.mxu0 0
    %2633 = vmatprep.subr.bf16.mxu0 0
    %2634 = vmatpush1.bf16.msra.mxu0 0
    %2635 = vmatprep.subr.bf16.mxu0 0
    %2636 = vmatpush1.bf16.msra.mxu0 0
    %2637 = vmatprep.subr.bf16.mxu0 0
    %2638 = vmatpush1.bf16.msra.mxu0 0
    %2639 = vmatprep.subr.bf16.mxu0 0
    %2640 = vmatpush1.bf16.msra.mxu0 0
    %2641 = vmatprep.subr.bf16.mxu0 0
    %2642 = vmatpush1.bf16.msra.mxu0 0
    %2643 = vmatprep.mubr.bf16.mxu0 0
    %2644 = vmatmul.mubr.bf16.gmra.mrb[0].mxu0 %v2546
    %v2645 = vpop.f32.mrb[0].mxu0
    %v2646 = vadd.f32 0.0, %v2645
    %v2647 = vpop.f32.mrb[0].mxu0
    %v2648 = vpop.f32.mrb[0].mxu0
    %v2649 = vpop.f32.mrb[0].mxu0
    %2650 = vdwg.mxu0
    %v2651 = vadd.f32 %v2545, %v2646
    %v2652 = vmul.f32 %v107, %v2542
    %v2653 = vtanh.pop %v2651
    %v2654 = vmul.f32 %v93, %v2653
    %v2655 = vadd.f32 %v2652, %v2654
    %2656 = vst [vmem:[%s2544] sm:$0xff] %v2655
    %v2657 = vld [vmem:[#allocation3] sm:$0xff]
    %v2658 = vld [vmem:[#allocation3 + $0x8] sm:$0xff]
    %v2659 = vld [vmem:[#allocation3 + $0x10] sm:$0xff]
    %v2660 = vld [vmem:[#allocation3 + $0x18] sm:$0xff]
    %v2661 = vld [vmem:[#allocation3 + $0x20] sm:$0xff]
    %v2662 = vld [vmem:[#allocation3 + $0x28] sm:$0xff]
    %v2663 = vld [vmem:[#allocation3 + $0x30] sm:$0xff]
    %v2664 = vld [vmem:[#allocation3 + $0x38] sm:$0xff]
    %v2665 = vpack.c.bf16 %v2658, %v2657
    %v2666 = vpack.c.bf16 %v2660, %v2659
    %v2667 = vpack.c.bf16 %v2662, %v2661
    %v2668 = vpack.c.bf16 %v2664, %v2663
    %v2669 = vld [vmem:[%s13] sm:$0xf]
    %v2670 = vld [vmem:[%s13 + $0x4] sm:$0xf]
    %v2671 = vld [vmem:[%s13 + $0x8] sm:$0xf]
    %v2672 = vld [vmem:[%s13 + $0xc] sm:$0xf]
    %v2673 = vld [vmem:[%s13 + $0x10] sm:$0xf]
    %v2674 = vld [vmem:[%s13 + $0x14] sm:$0xf]
    %v2675 = vld [vmem:[%s13 + $0x18] sm:$0xf]
    %v2676 = vld [vmem:[%s13 + $0x1c] sm:$0xf]
    %v2677 = vld [vmem:[%s13 + $0x20] sm:$0xf]
    %v2678 = vld [vmem:[%s13 + $0x24] sm:$0xf]
    %v2679 = vld [vmem:[%s13 + $0x28] sm:$0xf]
    %v2680 = vld [vmem:[%s13 + $0x2c] sm:$0xf]
    %v2681 = vld [vmem:[%s13 + $0x30] sm:$0xf]
    %v2682 = vld [vmem:[%s13 + $0x34] sm:$0xf]
    %v2683 = vld [vmem:[%s13 + $0x38] sm:$0xf]
    %v2684 = vld [vmem:[%s13 + $0x3c] sm:$0xf]
    %v2685 = vld [vmem:[%s14] sm:$0x1]
    %v2687 = vlaneseq
    %v2688 = vshrl.u32 %v2687, 7
    %v2689 = vsub.s32 0, %v2688
    %v2690 = vrot.slane %v2685, %v2689
    %v2708 = vunpack.c.l.b16 %v2669
    %v2709 = vunpack.c.l.b16 %v2670
    %v2710 = vunpack.c.l.b16 %v2671
    %v2711 = vunpack.c.l.b16 %v2672
    %v2712 = vunpack.c.l.b16 %v2673
    %v2713 = vunpack.c.l.b16 %v2674
    %v2714 = vunpack.c.l.b16 %v2675
    %v2715 = vunpack.c.l.b16 %v2676
    %v2716 = vunpack.c.l.b16 %v2677
    %v2717 = vunpack.c.l.b16 %v2678
    %v2718 = vunpack.c.l.b16 %v2679
    %v2719 = vunpack.c.l.b16 %v2680
    %v2720 = vunpack.c.l.b16 %v2681
    %v2721 = vunpack.c.l.b16 %v2682
    %v2722 = vunpack.c.l.b16 %v2683
    %v2723 = vunpack.c.l.b16 %v2684
    %v2724 = vpack.c.b16 %v2709, %v2708
    %v2725 = vpack.c.b16 %v2711, %v2710
    %v2726 = vpack.c.b16 %v2713, %v2712
    %v2727 = vpack.c.b16 %v2715, %v2714
    %v2728 = vpack.c.b16 %v2717, %v2716
    %v2729 = vpack.c.b16 %v2719, %v2718
    %v2730 = vpack.c.b16 %v2721, %v2720
    %v2731 = vpack.c.b16 %v2723, %v2722
    %2740 = vmatprep.subr.bf16.mxu0 0
    %2741 = vmatpush1.bf16.msra.mxu0 %v2724
    %2742 = vmatprep.subr.bf16.mxu0 0
    %2743 = vmatpush1.bf16.msra.mxu0 %v2725
    %2744 = vmatprep.subr.bf16.mxu0 0
    %2745 = vmatpush1.bf16.msra.mxu0 %v2726
    %2746 = vmatprep.subr.bf16.mxu0 0
    %2747 = vmatpush1.bf16.msra.mxu0 %v2727
    %2748 = vmatprep.subr.bf16.mxu0 0
    %2749 = vmatpush1.bf16.msra.mxu0 %v2728
    %2750 = vmatprep.subr.bf16.mxu0 0
    %2751 = vmatpush1.bf16.msra.mxu0 %v2729
    %2752 = vmatprep.subr.bf16.mxu0 0
    %2753 = vmatpush1.bf16.msra.mxu0 %v2730
    %2754 = vmatprep.subr.bf16.mxu0 0
    %2755 = vmatpush1.bf16.msra.mxu0 %v2731
    %2756 = vmatprep.subr.bf16.mxu0 0
    %2757 = vmatpush1.bf16.msra.mxu0 0
    %2758 = vmatprep.subr.bf16.mxu0 0
    %2759 = vmatpush1.bf16.msra.mxu0 0
    %2760 = vmatprep.subr.bf16.mxu0 0
    %2761 = vmatpush1.bf16.msra.mxu0 0
    %2762 = vmatprep.subr.bf16.mxu0 0
    %2763 = vmatpush1.bf16.msra.mxu0 0
    %2764 = vmatprep.subr.bf16.mxu0 0
    %2765 = vmatpush1.bf16.msra.mxu0 0
    %2766 = vmatprep.subr.bf16.mxu0 0
    %2767 = vmatpush1.bf16.msra.mxu0 0
    %2768 = vmatprep.subr.bf16.mxu0 0
    %2769 = vmatpush1.bf16.msra.mxu0 0
    %2770 = vmatprep.subr.bf16.mxu0 0
    %2771 = vmatpush1.bf16.msra.mxu0 0
    %2772 = vmatprep.mubr.bf16.mxu0 0
    %2773 = vmatmul.mubr.bf16.gmra.mrb[0].mxu0 %v2665
    %v2774 = vpop.f32.mrb[0].mxu0
    %v2775 = vadd.f32 %v2690, %v2774
    %v2776 = vpop.f32.mrb[0].mxu0
    %v2777 = vpop.f32.mrb[0].mxu0
    %v2778 = vadd.f32 %v2690, %v2777
    %v2779 = vpop.f32.mrb[0].mxu0
    %2780 = vmatprep.mubr.bf16.mxu0 0
    %2781 = vmatmul.mubr.bf16.gmra.mrb[0].mxu0 %v2666
    %v2782 = vpop.f32.mrb[0].mxu0
    %v2783 = vadd.f32 %v2690, %v2782
    %v2784 = vpop.f32.mrb[0].mxu0
    %v2785 = vpop.f32.mrb[0].mxu0
    %v2786 = vadd.f32 %v2690, %v2785
    %v2787 = vpop.f32.mrb[0].mxu0
    %2788 = vmatprep.mubr.bf16.mxu0 0
    %2789 = vmatmul.mubr.bf16.gmra.mrb[0].mxu0 %v2667
    %v2790 = vpop.f32.mrb[0].mxu0
    %v2791 = vadd.f32 %v2690, %v2790
    %v2792 = vpop.f32.mrb[0].mxu0
    %v2793 = vpop.f32.mrb[0].mxu0
    %v2794 = vadd.f32 %v2690, %v2793
    %v2795 = vpop.f32.mrb[0].mxu0
    %2796 = vmatprep.mubr.bf16.mxu0 0
    %2797 = vmatmul.mubr.bf16.gmra.mrb[0].mxu0 %v2668
    %v2798 = vpop.f32.mrb[0].mxu0
    %v2799 = vadd.f32 %v2690, %v2798
    %v2800 = vpop.f32.mrb[0].mxu0
    %v2801 = vpop.f32.mrb[0].mxu0
    %v2802 = vadd.f32 %v2690, %v2801
    %v2803 = vpop.f32.mrb[0].mxu0
    %2804 = vdwg.mxu0
    %2805 = vst.msk [vmem:[%s18] sm:$0xff] %vm144, %v2775
    %2806 = vst.msk [vmem:[%s18 + $0x8] sm:$0xff] %vm144, %v2778
    %2807 = vst.msk [vmem:[%s18 + $0x10] sm:$0xff] %vm144, %v2783
    %2808 = vst.msk [vmem:[%s18 + $0x18] sm:$0xff] %vm144, %v2786
    %2809 = vst.msk [vmem:[%s18 + $0x20] sm:$0xff] %vm144, %v2791
    %2810 = vst.msk [vmem:[%s18 + $0x28] sm:$0xff] %vm144, %v2794
    %2811 = vst.msk [vmem:[%s18 + $0x30] sm:$0xff] %vm144, %v2799
    %2812 = vst.msk [vmem:[%s18 + $0x38] sm:$0xff] %vm144, %v2802
    %v2813 = vpack.c.bf16 %v2778, %v2775
    %v2814 = vpack.c.bf16 %v2786, %v2783
    %v2815 = vpack.c.bf16 %v2794, %v2791
    %v2816 = vpack.c.bf16 %v2802, %v2799
    %v2817 = vld [vmem:[%s15] sm:$0xf]
    %v2818 = vld [vmem:[%s15 + $0x4] sm:$0xf]
    %v2819 = vld [vmem:[%s15 + $0x8] sm:$0xf]
    %v2820 = vld [vmem:[%s15 + $0xc] sm:$0xf]
    %v2821 = vld [vmem:[%s16] sm:$0x1]
    %v2823 = vlaneseq
    %v2824 = vshrl.u32 %v2823, 7
    %v2825 = vsub.s32 0, %v2824
    %v2826 = vrot.slane %v2821, %v2825
    %v2832 = vunpack.c.l.b16 %v2817
    %v2833 = vunpack.c.l.b16 %v2818
    %v2834 = vunpack.c.l.b16 %v2819
    %v2835 = vunpack.c.l.b16 %v2820
    %v2836 = vpack.c.b16 %v2833, %v2832
    %v2837 = vpack.c.b16 %v2835, %v2834
    %v2841 = vsel %vm144, %v2813, 0
    %v2844 = vsel %vm144, %v2814, 0
    %v2847 = vsel %vm144, %v2815, 0
    %v2850 = vsel %vm144, %v2816, 0
    %2852 = vmatprep.subr.bf16.mxu0 0
    %2853 = vmatpush1.bf16.msra.mxu0 %v2836
    %2854 = vmatprep.subr.bf16.mxu0 0
    %2855 = vmatpush1.bf16.msra.mxu0 %v2837
    %2856 = vmatprep.subr.bf16.mxu0 0
    %2857 = vmatpush1.bf16.msra.mxu0 0
    %2858 = vmatprep.subr.bf16.mxu0 0
    %2859 = vmatpush1.bf16.msra.mxu0 0
    %2860 = vmatprep.subr.bf16.mxu0 0
    %2861 = vmatpush1.bf16.msra.mxu0 0
    %2862 = vmatprep.subr.bf16.mxu0 0
    %2863 = vmatpush1.bf16.msra.mxu0 0
    %2864 = vmatprep.subr.bf16.mxu0 0
    %2865 = vmatpush1.bf16.msra.mxu0 0
    %2866 = vmatprep.subr.bf16.mxu0 0
    %2867 = vmatpush1.bf16.msra.mxu0 0
    %2868 = vmatprep.subr.bf16.mxu0 0
    %2869 = vmatpush1.bf16.msra.mxu0 0
    %2870 = vmatprep.subr.bf16.mxu0 0
    %2871 = vmatpush1.bf16.msra.mxu0 0
    %2872 = vmatprep.subr.bf16.mxu0 0
    %2873 = vmatpush1.bf16.msra.mxu0 0
    %2874 = vmatprep.subr.bf16.mxu0 0
    %2875 = vmatpush1.bf16.msra.mxu0 0
    %2876 = vmatprep.subr.bf16.mxu0 0
    %2877 = vmatpush1.bf16.msra.mxu0 0
    %2878 = vmatprep.subr.bf16.mxu0 0
    %2879 = vmatpush1.bf16.msra.mxu0 0
    %2880 = vmatprep.subr.bf16.mxu0 0
    %2881 = vmatpush1.bf16.msra.mxu0 0
    %2882 = vmatprep.subr.bf16.mxu0 0
    %2883 = vmatpush1.bf16.msra.mxu0 0
    %2884 = vmatprep.mubr.bf16.mxu0 0
    %2885 = vmatmul.mubr.bf16.gmra.mrb[0].mxu0 %v2841
    %v2886 = vpop.f32.mrb[0].mxu0
    %v2887 = vadd.f32 %v2826, %v2886
    %v2888 = vpop.f32.mrb[0].mxu0
    %v2889 = vpop.f32.mrb[0].mxu0
    %v2890 = vadd.f32 %v2826, %v2889
    %v2891 = vpop.f32.mrb[0].mxu0
    %2892 = vmatprep.mubr.bf16.mxu0 0
    %2893 = vmatmul.mubr.bf16.gmra.mrb[0].mxu0 %v2844
    %v2894 = vpop.f32.mrb[0].mxu0
    %v2895 = vadd.f32 %v2826, %v2894
    %v2896 = vpop.f32.mrb[0].mxu0
    %v2897 = vpop.f32.mrb[0].mxu0
    %v2898 = vadd.f32 %v2826, %v2897
    %v2899 = vpop.f32.mrb[0].mxu0
    %2900 = vmatprep.mubr.bf16.mxu0 0
    %2901 = vmatmul.mubr.bf16.gmra.mrb[0].mxu0 %v2847
    %v2902 = vpop.f32.mrb[0].mxu0
    %v2903 = vadd.f32 %v2826, %v2902
    %v2904 = vpop.f32.mrb[0].mxu0
    %v2905 = vpop.f32.mrb[0].mxu0
    %v2906 = vadd.f32 %v2826, %v2905
    %v2907 = vpop.f32.mrb[0].mxu0
    %2908 = vmatprep.mubr.bf16.mxu0 0
    %2909 = vmatmul.mubr.bf16.gmra.mrb[0].mxu0 %v2850
    %v2910 = vpop.f32.mrb[0].mxu0
    %v2911 = vadd.f32 %v2826, %v2910
    %v2912 = vpop.f32.mrb[0].mxu0
    %v2913 = vpop.f32.mrb[0].mxu0
    %v2914 = vadd.f32 %v2826, %v2913
    %v2915 = vpop.f32.mrb[0].mxu0
    %2916 = vdwg.mxu0
    %v2917 = vmul.f32 %v2887, 1.442695
    %v2918 = vpow.pop %v2917
    %v2919 = vmul.f32 %v2890, 1.442695
    %v2920 = vpow.pop %v2919
    %v2921 = vmul.f32 %v2895, 1.442695
    %v2922 = vpow.pop %v2921
    %v2923 = vmul.f32 %v2898, 1.442695
    %v2924 = vpow.pop %v2923
    %v2925 = vmul.f32 %v2903, 1.442695
    %v2926 = vpow.pop %v2925
    %v2927 = vmul.f32 %v2906, 1.442695
    %v2928 = vpow.pop %v2927
    %v2929 = vmul.f32 %v2911, 1.442695
    %v2930 = vpow.pop %v2929
    %v2931 = vmul.f32 %v2914, 1.442695
    %v2932 = vpow.pop %v2931
    %2933 = vst.msk [vmem:[%s17] sm:$0xff] %vm144, %v2918
    %2934 = vst.msk [vmem:[%s17 + $0x8] sm:$0xff] %vm144, %v2920
    %2935 = vst.msk [vmem:[%s17 + $0x10] sm:$0xff] %vm144, %v2922
    %2936 = vst.msk [vmem:[%s17 + $0x18] sm:$0xff] %vm144, %v2924
    %2937 = vst.msk [vmem:[%s17 + $0x20] sm:$0xff] %vm144, %v2926
    %2938 = vst.msk [vmem:[%s17 + $0x28] sm:$0xff] %vm144, %v2928
    %2939 = vst.msk [vmem:[%s17 + $0x30] sm:$0xff] %vm144, %v2930
    %2940 = vst.msk [vmem:[%s17 + $0x38] sm:$0xff] %vm144, %v2932
    // Predicated region
    $region70: #{_lambda_.1} parent=1 // pred_check
      _
    $region71: #{_lambda_.1} parent=1 // pred_check_branch
      %2942 = sbr.rel (0) target = $region73
    $region72: #{_lambda_.1} parent=1 // pred_region
      _
    $region73: #{_lambda_.1} parent=1 // pred_fallthru
      _
    // Predicated region
    $region74: #{_lambda_.1} parent=1 // pred_check
      _
    $region75: #{_lambda_.1} parent=1 // pred_check_branch
      %2944 = sbr.rel (0) target = $region77
    $region76: #{_lambda_.1} parent=1 // pred_region
      _
    $region77: #{_lambda_.1} parent=1 // pred_fallthru
      _
    // Predicated region
    $region78: #{_lambda_.1} parent=1 // pred_check
      _
    $region79: #{_lambda_.1} parent=1 // pred_check_branch
      %2946 = sbr.rel (0) target = $region81
    $region80: #{_lambda_.1} parent=1 // pred_region
      %s2948 = ssub.s32 16, 16
      %2949 = vsyncadd [#allocation5], %s2948
      %s2951 = sshll.u32 [#allocation4], 4
      %s2952 = int_to_ptr.vmem [resolvable:$true] %s2951
      %2954 = dma.vmem_to_hbm [thread:$0]  %s2952, 16, %s19, [#allocation5]
    $region81: #{_lambda_.1} parent=1 // pred_fallthru
      _
    // Predicated region
    $region82: #{_lambda_.1} parent=1 // pred_check
      _
    $region83: #{_lambda_.1} parent=1 // pred_check_branch
      %2956 = sbr.rel (0) target = $region85
    $region84: #{_lambda_.1} parent=1 // pred_region
      _
    $region85: #{_lambda_.1} parent=1 // pred_fallthru
      _
    // Predicated region
    $region86: #{_lambda_.1} parent=1 // pred_check
      _
    $region87: #{_lambda_.1} parent=1 // pred_check_branch
      %2958 = sbr.rel (0) target = $region89
    $region88: #{_lambda_.1} parent=1 // pred_region
      _
    $region89: #{_lambda_.1} parent=1 // pred_fallthru
      _
    // Predicated region
    $region90: #{_lambda_.1} parent=1 // pred_check
      _
    $region91: #{_lambda_.1} parent=1 // pred_check_branch
      %2960 = sbr.rel (0) target = $region93
    $region92: #{_lambda_.1} parent=1 // pred_region
      %2961 = dma.done [#allocation5], 16
    $region93: #{_lambda_.1} parent=1 // pred_fallthru
      _
    %2962 = vsyncpa [#allocation5], 1

</llo_original>
